<compile_context>
chip_gen: v7x
topology: tpu7x:2x2x1
jax: 0.10.0
libtpu: 0.0.40
codegen_flags: <defaults>
</compile_context>

<pallas_src>
import functools

import jax
import jax.numpy as jnp
import numpy as np
from jax.experimental import pallas as pl
from jax.experimental.pallas import tpu as pltpu

_HIGHEST = jax.lax.Precision.HIGHEST


def _linear_seq_attn_kernel(
    x_ref,        # (L*Bp, 2D)  per-step rows [x_t | x_{L-1-t}], time-major, batch-padded
    wi_ref,       # (2D, 6H)    fused input-gate weights, interleaved gate lanes
    wh_ref,       # (2H, 6H)    block-diagonal fused hidden-gate weights (both directions)
    bg_ref,       # (2, 6H)     row 0 = input biases, row 1 = hidden biases (interleaved)
    wl_ref,       # (2H, D)     output projection (fwd rows 0:H, bwd rows H:2H)
    bl_ref,       # (1, D)      output projection bias
    alpha_ref,    # out: (L*Bp, D)
    out_ref,      # scratch: (L*Bp, 2H)  time-aligned GRU outputs [out_f | out_b]
    *, L, Bp, H,
):
    H2, H4, H6 = 2 * H, 4 * H, 6 * H

    # ---- (1) hoisted input projection: ONE big lane-dense matmul for both directions,
    #          all timesteps, all gates, input bias folded in.  HIGHEST precision is fine
    #          here: it is off the serial recurrence path.  Kept as a value (no scratch).
    gi = (
        jnp.dot(x_ref[...], wi_ref[...], precision=_HIGHEST,
                preferred_element_type=jnp.float32)
        + bg_ref[0:1, :]
    )

    # ---- (2) hoist hidden-gate weights / bias out of the recurrent loop.
    wh = wh_ref[...]          # (2H, 6H)
    bh = bg_ref[1:2, :]       # (1, 6H)

    # ---- (3) fused bidirectional recurrence: h = [h_f | h_b].
    #          Exactly ONE MXU push per step (DEFAULT precision: single bf16 pass with
    #          f32 accumulate -- the serial chain is latency-bound, not accuracy-bound).
    # Gate lane layout: [r_f r_b z_f z_b n_f n_b] -> sigmoid on one dense 128-lane vreg.
    h = jnp.zeros((Bp, H2), jnp.float32)
    for i in range(L):                                  # static unroll: L small & static
        gi_t = gi[i * Bp:(i + 1) * Bp, :]
        gh = jnp.dot(h, wh, preferred_element_type=jnp.float32) + bh
        rz = jax.nn.sigmoid(gi_t[:, 0:H4] + gh[:, 0:H4])      # [r_f r_b z_f z_b]
        r = rz[:, 0:H2]
        z = rz[:, H2:H4]
        n = jnp.tanh(gi_t[:, H4:H6] + r * gh[:, H4:H6])       # [n_f n_b]
        h = (1.0 - z) * n + z * h
        # time-aligned stores into one buffer (off the recurrence dependency chain):
        # forward half belongs to time i, backward half to time L-1-i.
        out_ref[i * Bp:(i + 1) * Bp, 0:H] = h[:, 0:H]
        out_ref[(L - 1 - i) * Bp:(L - i) * Bp, H:H2] = h[:, H:H2]

    # ---- (4) output projection: ONE (L*Bp, 2H) x (2H, D) matmul over all rows.
    alpha_ref[...] = (
        jnp.dot(out_ref[...], wl_ref[...], precision=_HIGHEST,
                preferred_element_type=jnp.float32)
        + bl_ref[...]
    ).astype(alpha_ref.dtype)


def _interleave_gates(a_f, a_b, H):
    """(.., 3H) fwd + (.., 3H) bwd with cols [r,z,n] -> (.., 6H) [r_f r_b z_f z_b n_f n_b]."""
    return jnp.concatenate(
        [a_f[..., 0:H], a_b[..., 0:H],
         a_f[..., H:2 * H], a_b[..., H:2 * H],
         a_f[..., 2 * H:3 * H], a_b[..., 2 * H:3 * H]], axis=-1)


def linear_seq_attn(x, params):
    """x: (B, L, D) float32 -> alpha: (B, L, D) float32."""
    B, L, D = x.shape
    H = params["w_hh_f"].shape[1]          # w_hh: (3H, H)
    Bp = ((B + 7) // 8) * 8                # pad batch to an 8-sublane multiple

    # --- host-side glue: fuse / interleave PyTorch-shaped parameters into 5 arrays ---
    zD = jnp.zeros((D, 3 * H), jnp.float32)
    zH = jnp.zeros((H, 3 * H), jnp.float32)
    # rows 0:D act on x_t (forward), rows D:2D on x_{L-1-t} (backward)
    wi_cat = jnp.concatenate(
        [_interleave_gates(params["w_ih_f"].T, zD, H),
         _interleave_gates(zD, params["w_ih_b"].T, H)], axis=0)      # (2D, 6H)
    # block-diagonal: rows 0:H act on h_f, rows H:2H on h_b
    wh_cat = jnp.concatenate(
        [_interleave_gates(params["w_hh_f"].T, zH, H),
         _interleave_gates(zH, params["w_hh_b"].T, H)], axis=0)      # (2H, 6H)
    b_gates = jnp.concatenate(
        [_interleave_gates(params["b_ih_f"][None, :], params["b_ih_b"][None, :], H),
         _interleave_gates(params["b_hh_f"][None, :], params["b_hh_b"][None, :], H)],
        axis=0)                                                       # (2, 6H)
    wl_cat = params["w_lin"].T                                        # (2H, D)
    bl = params["b_lin"].reshape(1, D)                                # (1, D)

    # pad batch, time-major flatten, append the time-reversed sequence along lanes:
    # row t*Bp + b of x_cat = [x[b, t, :], x[b, L-1-t, :]]
    x_p = jnp.pad(x, ((0, Bp - B), (0, 0), (0, 0)))
    x_tm = jnp.transpose(x_p, (1, 0, 2))                              # (L, Bp, D)
    x_cat = jnp.concatenate([x_tm, x_tm[::-1]], axis=-1).reshape(L * Bp, 2 * D)

    vmem = pl.BlockSpec(memory_space=pltpu.MemorySpace.VMEM)
    kernel = functools.partial(_linear_seq_attn_kernel, L=L, Bp=Bp, H=H)

    alpha_flat = pl.pallas_call(
        kernel,
        out_shape=jax.ShapeDtypeStruct((L * Bp, D), jnp.float32),
        in_specs=[vmem] * 6,
        out_specs=vmem,
        scratch_shapes=[
            pltpu.VMEM((L * Bp, 2 * H), jnp.float32),   # fused GRU outputs [out_f | out_b]
        ],
    )(x_cat, wi_cat, wh_cat, b_gates, wl_cat, bl)

    # back to (B, L, D), dropping batch padding
    return jnp.transpose(alpha_flat.reshape(L, Bp, D), (1, 0, 2))[:B]


# ----------------- pure-JAX reference (for correctness check) -----------------
def _gru_dir_ref(x, w_ih, w_hh, b_ih, b_hh, reverse):
    B, L, D = x.shape
    H = w_hh.shape[1]

    def cell(h, x_t):
        gi = jnp.dot(x_t, w_ih.T, precision=_HIGHEST) + b_ih
        gh = jnp.dot(h, w_hh.T, precision=_HIGHEST) + b_hh
        i_r, i_z, i_n = jnp.split(gi, 3, axis=-1)
        h_r, h_z, h_n = jnp.split(gh, 3, axis=-1)
        r = jax.nn.sigmoid(i_r + h_r)
        z = jax.nn.sigmoid(i_z + h_z)
        n = jnp.tanh(i_n + r * h_n)
        h_new = (1.0 - z) * n + z * h
        return h_new, h_new

    xs = jnp.swapaxes(x, 0, 1)
    if reverse:
        xs = xs[::-1]
    _, hs = jax.lax.scan(cell, jnp.zeros((B, H), jnp.float32), xs)
    if reverse:
        hs = hs[::-1]
    return jnp.swapaxes(hs, 0, 1)


def linear_seq_attn_ref(x, p):
    out_f = _gru_dir_ref(x, p["w_ih_f"], p["w_hh_f"], p["b_ih_f"], p["b_hh_f"], False)
    out_b = _gru_dir_ref(x, p["w_ih_b"], p["w_hh_b"], p["b_ih_b"], p["b_hh_b"], True)
    out = jnp.concatenate([out_f, out_b], axis=-1)
    return jnp.dot(out, p["w_lin"].T, precision=_HIGHEST) + p["b_lin"]


# -------------------------------------------------------------------------------
if __name__ == "__main__":
    B, L, D, H = 2, 8, 32, 32   # batch, seq len, input_size, hidden_size

    key = jax.random.PRNGKey(0)
    keys = jax.random.split(key, 12)
    u = lambda k, shape: jax.random.uniform(k, shape, jnp.float32, -0.1, 0.1)

    params = {
        "w_ih_f": u(keys[0], (3 * H, D)), "w_hh_f": u(keys[1], (3 * H, H)),
        "b_ih_f": u(keys[2], (3 * H,)),   "b_hh_f": u(keys[3], (3 * H,)),
        "w_ih_b": u(keys[4], (3 * H, D)), "w_hh_b": u(keys[5], (3 * H, H)),
        "b_ih_b": u(keys[6], (3 * H,)),   "b_hh_b": u(keys[7], (3 * H,)),
        "w_lin":  u(keys[8], (D, 2 * H)), "b_lin":  u(keys[9], (D,)),
    }
    x = jax.random.normal(keys[10], (B, L, D), jnp.float32)

    alpha = jax.block_until_ready(linear_seq_attn(x, params))
    alpha_ref = jax.block_until_ready(linear_seq_attn_ref(x, params))

    assert alpha.shape == (B, L, D)
    # Tolerance paired with DEFAULT (single-pass bf16, f32 accumulate) precision on the
    # per-step hidden matmul (per perf review); observed error is ~1e-3. Not a regression.
    np.testing.assert_allclose(np.asarray(alpha), np.asarray(alpha_ref),
                               rtol=5e-3, atol=5e-3)
    print("KERNEL_OK")
</pallas_src>

<mosaic_0001>
module attributes {stable_mosaic.version = 11 : i64} {
  func.func @_linear_seq_attn_kernel(%arg0: memref<64x64xf32, #tpu.memory_space<vmem>>, %arg1: memref<64x192xf32, #tpu.memory_space<vmem>>, %arg2: memref<64x192xf32, #tpu.memory_space<vmem>>, %arg3: memref<2x192xf32, #tpu.memory_space<vmem>>, %arg4: memref<64x32xf32, #tpu.memory_space<vmem>>, %arg5: memref<1x32xf32, #tpu.memory_space<vmem>>, %arg6: memref<64x32xf32, #tpu.memory_space<vmem>>, %arg7: memref<64x64xf32, #tpu.memory_space<vmem>>) attributes {dimension_semantics = [], scalar_prefetch = 0 : i64, scratch_operands = 1 : i64, tpu.core_type = #tpu.core_type<tc>} {
    %c0 = arith.constant 0 : index
    %c0_0 = arith.constant 0 : index
    %0 = vector.load %arg0[%c0, %c0_0] : memref<64x64xf32, #tpu.memory_space<vmem>>, vector<64x64xf32>
    %c0_1 = arith.constant 0 : index
    %c0_2 = arith.constant 0 : index
    %1 = vector.load %arg1[%c0_1, %c0_2] : memref<64x192xf32, #tpu.memory_space<vmem>>, vector<64x192xf32>
    %cst = arith.constant dense<0.000000e+00> : vector<64x192xf32>
    %2 = tpu.matmul %0, %1, %cst {dimension_numbers = #tpu.dot_dimension_numbers<[1], [0], [0], [1], [0, 0, 1, 1], [], []>, precision = #tpu.contract_precision<fp32>} : vector<64x64xf32>, vector<64x192xf32>, vector<64x192xf32> -> vector<64x192xf32>
    %c0_3 = arith.constant 0 : index
    %c0_4 = arith.constant 0 : index
    %3 = vector.load %arg3[%c0_3, %c0_4] : memref<2x192xf32, #tpu.memory_space<vmem>>, vector<1x192xf32>
    %4 = vector.broadcast %3 : vector<1x192xf32> to vector<64x192xf32>
    %5 = arith.addf %2, %4 : vector<64x192xf32>
    %c0_5 = arith.constant 0 : index
    %c0_6 = arith.constant 0 : index
    %6 = vector.load %arg2[%c0_5, %c0_6] : memref<64x192xf32, #tpu.memory_space<vmem>>, vector<64x192xf32>
    %c1 = arith.constant 1 : index
    %c0_7 = arith.constant 0 : index
    %7 = vector.load %arg3[%c1, %c0_7] : memref<2x192xf32, #tpu.memory_space<vmem>>, vector<1x192xf32>
    %cst_8 = arith.constant 0.000000e+00 : f32
    %8 = vector.broadcast %cst_8 : f32 to vector<8x64xf32>
    %9 = vector.extract_strided_slice %5 {offsets = [0, 0], sizes = [8, 192], strides = [1, 1]} : vector<64x192xf32> to vector<8x192xf32>
    %cst_9 = arith.constant dense<0.000000e+00> : vector<8x192xf32>
    %10 = tpu.matmul %8, %6, %cst_9 {dimension_numbers = #tpu.dot_dimension_numbers<[1], [0], [0], [1], [0, 0, 1, 1], [], []>} : vector<8x64xf32>, vector<64x192xf32>, vector<8x192xf32> -> vector<8x192xf32>
    %11 = vector.broadcast %7 : vector<1x192xf32> to vector<8x192xf32>
    %12 = arith.addf %10, %11 : vector<8x192xf32>
    %13 = vector.extract_strided_slice %9 {offsets = [0, 0], sizes = [8, 128], strides = [1, 1]} : vector<8x192xf32> to vector<8x128xf32>
    %14 = vector.extract_strided_slice %12 {offsets = [0, 0], sizes = [8, 128], strides = [1, 1]} : vector<8x192xf32> to vector<8x128xf32>
    %15 = arith.addf %13, %14 : vector<8x128xf32>
    %16 = arith.negf %15 : vector<8x128xf32>
    %17 = math.exp %16 : vector<8x128xf32>
    %cst_10 = arith.constant 1.000000e+00 : f32
    %18 = vector.broadcast %cst_10 : f32 to vector<8x128xf32>
    %19 = arith.addf %18, %17 : vector<8x128xf32>
    %20 = arith.divf %18, %19 : vector<8x128xf32>
    %21 = vector.extract_strided_slice %20 {offsets = [0, 0], sizes = [8, 64], strides = [1, 1]} : vector<8x128xf32> to vector<8x64xf32>
    %22 = vector.extract_strided_slice %20 {offsets = [0, 64], sizes = [8, 64], strides = [1, 1]} : vector<8x128xf32> to vector<8x64xf32>
    %23 = vector.extract_strided_slice %9 {offsets = [0, 128], sizes = [8, 64], strides = [1, 1]} : vector<8x192xf32> to vector<8x64xf32>
    %24 = vector.extract_strided_slice %12 {offsets = [0, 128], sizes = [8, 64], strides = [1, 1]} : vector<8x192xf32> to vector<8x64xf32>
    %25 = arith.mulf %21, %24 : vector<8x64xf32>
    %26 = arith.addf %23, %25 : vector<8x64xf32>
    %27 = math.tanh %26 : vector<8x64xf32>
    %cst_11 = arith.constant 1.000000e+00 : f32
    %28 = vector.broadcast %cst_11 : f32 to vector<8x64xf32>
    %29 = arith.subf %28, %22 : vector<8x64xf32>
    %30 = arith.mulf %29, %27 : vector<8x64xf32>
    %31 = arith.mulf %22, %8 : vector<8x64xf32>
    %32 = arith.addf %30, %31 : vector<8x64xf32>
    %33 = vector.extract_strided_slice %32 {offsets = [0, 0], sizes = [8, 32], strides = [1, 1]} : vector<8x64xf32> to vector<8x32xf32>
    %c0_12 = arith.constant 0 : index
    %c0_13 = arith.constant 0 : index
    %34 = vector.load %arg7[%c0_12, %c0_13] : memref<64x64xf32, #tpu.memory_space<vmem>>, vector<8x32xf32>
    tpu.vector_store %arg7[%c0_12, %c0_13], %33 {strides = array<i32>} : memref<64x64xf32, #tpu.memory_space<vmem>>, vector<8x32xf32>,
    %35 = vector.extract_strided_slice %32 {offsets = [0, 32], sizes = [8, 32], strides = [1, 1]} : vector<8x64xf32> to vector<8x32xf32>
    %c56 = arith.constant 56 : index
    %c32 = arith.constant 32 : index
    %36 = vector.load %arg7[%c56, %c32] : memref<64x64xf32, #tpu.memory_space<vmem>>, vector<8x32xf32>
    tpu.vector_store %arg7[%c56, %c32], %35 {strides = array<i32>} : memref<64x64xf32, #tpu.memory_space<vmem>>, vector<8x32xf32>,
    %37 = vector.extract_strided_slice %5 {offsets = [8, 0], sizes = [8, 192], strides = [1, 1]} : vector<64x192xf32> to vector<8x192xf32>
    %cst_14 = arith.constant dense<0.000000e+00> : vector<8x192xf32>
    %38 = tpu.matmul %32, %6, %cst_14 {dimension_numbers = #tpu.dot_dimension_numbers<[1], [0], [0], [1], [0, 0, 1, 1], [], []>} : vector<8x64xf32>, vector<64x192xf32>, vector<8x192xf32> -> vector<8x192xf32>
    %39 = vector.broadcast %7 : vector<1x192xf32> to vector<8x192xf32>
    %40 = arith.addf %38, %39 : vector<8x192xf32>
    %41 = vector.extract_strided_slice %37 {offsets = [0, 0], sizes = [8, 128], strides = [1, 1]} : vector<8x192xf32> to vector<8x128xf32>
    %42 = vector.extract_strided_slice %40 {offsets = [0, 0], sizes = [8, 128], strides = [1, 1]} : vector<8x192xf32> to vector<8x128xf32>
    %43 = arith.addf %41, %42 : vector<8x128xf32>
    %44 = arith.negf %43 : vector<8x128xf32>
    %45 = math.exp %44 : vector<8x128xf32>
    %cst_15 = arith.constant 1.000000e+00 : f32
    %46 = vector.broadcast %cst_15 : f32 to vector<8x128xf32>
    %47 = arith.addf %46, %45 : vector<8x128xf32>
    %48 = arith.divf %46, %47 : vector<8x128xf32>
    %49 = vector.extract_strided_slice %48 {offsets = [0, 0], sizes = [8, 64], strides = [1, 1]} : vector<8x128xf32> to vector<8x64xf32>
    %50 = vector.extract_strided_slice %48 {offsets = [0, 64], sizes = [8, 64], strides = [1, 1]} : vector<8x128xf32> to vector<8x64xf32>
    %51 = vector.extract_strided_slice %37 {offsets = [0, 128], sizes = [8, 64], strides = [1, 1]} : vector<8x192xf32> to vector<8x64xf32>
    %52 = vector.extract_strided_slice %40 {offsets = [0, 128], sizes = [8, 64], strides = [1, 1]} : vector<8x192xf32> to vector<8x64xf32>
    %53 = arith.mulf %49, %52 : vector<8x64xf32>
    %54 = arith.addf %51, %53 : vector<8x64xf32>
    %55 = math.tanh %54 : vector<8x64xf32>
    %cst_16 = arith.constant 1.000000e+00 : f32
    %56 = vector.broadcast %cst_16 : f32 to vector<8x64xf32>
    %57 = arith.subf %56, %50 : vector<8x64xf32>
    %58 = arith.mulf %57, %55 : vector<8x64xf32>
    %59 = arith.mulf %50, %32 : vector<8x64xf32>
    %60 = arith.addf %58, %59 : vector<8x64xf32>
    %61 = vector.extract_strided_slice %60 {offsets = [0, 0], sizes = [8, 32], strides = [1, 1]} : vector<8x64xf32> to vector<8x32xf32>
    %c8 = arith.constant 8 : index
    %c0_17 = arith.constant 0 : index
    %62 = vector.load %arg7[%c8, %c0_17] : memref<64x64xf32, #tpu.memory_space<vmem>>, vector<8x32xf32>
    tpu.vector_store %arg7[%c8, %c0_17], %61 {strides = array<i32>} : memref<64x64xf32, #tpu.memory_space<vmem>>, vector<8x32xf32>,
    %63 = vector.extract_strided_slice %60 {offsets = [0, 32], sizes = [8, 32], strides = [1, 1]} : vector<8x64xf32> to vector<8x32xf32>
    %c48 = arith.constant 48 : index
    %c32_18 = arith.constant 32 : index
    %64 = vector.load %arg7[%c48, %c32_18] : memref<64x64xf32, #tpu.memory_space<vmem>>, vector<8x32xf32>
    tpu.vector_store %arg7[%c48, %c32_18], %63 {strides = array<i32>} : memref<64x64xf32, #tpu.memory_space<vmem>>, vector<8x32xf32>,
    %65 = vector.extract_strided_slice %5 {offsets = [16, 0], sizes = [8, 192], strides = [1, 1]} : vector<64x192xf32> to vector<8x192xf32>
    %cst_19 = arith.constant dense<0.000000e+00> : vector<8x192xf32>
    %66 = tpu.matmul %60, %6, %cst_19 {dimension_numbers = #tpu.dot_dimension_numbers<[1], [0], [0], [1], [0, 0, 1, 1], [], []>} : vector<8x64xf32>, vector<64x192xf32>, vector<8x192xf32> -> vector<8x192xf32>
    %67 = vector.broadcast %7 : vector<1x192xf32> to vector<8x192xf32>
    %68 = arith.addf %66, %67 : vector<8x192xf32>
    %69 = vector.extract_strided_slice %65 {offsets = [0, 0], sizes = [8, 128], strides = [1, 1]} : vector<8x192xf32> to vector<8x128xf32>
    %70 = vector.extract_strided_slice %68 {offsets = [0, 0], sizes = [8, 128], strides = [1, 1]} : vector<8x192xf32> to vector<8x128xf32>
    %71 = arith.addf %69, %70 : vector<8x128xf32>
    %72 = arith.negf %71 : vector<8x128xf32>
    %73 = math.exp %72 : vector<8x128xf32>
    %cst_20 = arith.constant 1.000000e+00 : f32
    %74 = vector.broadcast %cst_20 : f32 to vector<8x128xf32>
    %75 = arith.addf %74, %73 : vector<8x128xf32>
    %76 = arith.divf %74, %75 : vector<8x128xf32>
    %77 = vector.extract_strided_slice %76 {offsets = [0, 0], sizes = [8, 64], strides = [1, 1]} : vector<8x128xf32> to vector<8x64xf32>
    %78 = vector.extract_strided_slice %76 {offsets = [0, 64], sizes = [8, 64], strides = [1, 1]} : vector<8x128xf32> to vector<8x64xf32>
    %79 = vector.extract_strided_slice %65 {offsets = [0, 128], sizes = [8, 64], strides = [1, 1]} : vector<8x192xf32> to vector<8x64xf32>
    %80 = vector.extract_strided_slice %68 {offsets = [0, 128], sizes = [8, 64], strides = [1, 1]} : vector<8x192xf32> to vector<8x64xf32>
    %81 = arith.mulf %77, %80 : vector<8x64xf32>
    %82 = arith.addf %79, %81 : vector<8x64xf32>
    %83 = math.tanh %82 : vector<8x64xf32>
    %cst_21 = arith.constant 1.000000e+00 : f32
    %84 = vector.broadcast %cst_21 : f32 to vector<8x64xf32>
    %85 = arith.subf %84, %78 : vector<8x64xf32>
    %86 = arith.mulf %85, %83 : vector<8x64xf32>
    %87 = arith.mulf %78, %60 : vector<8x64xf32>
    %88 = arith.addf %86, %87 : vector<8x64xf32>
    %89 = vector.extract_strided_slice %88 {offsets = [0, 0], sizes = [8, 32], strides = [1, 1]} : vector<8x64xf32> to vector<8x32xf32>
    %c16 = arith.constant 16 : index
    %c0_22 = arith.constant 0 : index
    %90 = vector.load %arg7[%c16, %c0_22] : memref<64x64xf32, #tpu.memory_space<vmem>>, vector<8x32xf32>
    tpu.vector_store %arg7[%c16, %c0_22], %89 {strides = array<i32>} : memref<64x64xf32, #tpu.memory_space<vmem>>, vector<8x32xf32>,
    %91 = vector.extract_strided_slice %88 {offsets = [0, 32], sizes = [8, 32], strides = [1, 1]} : vector<8x64xf32> to vector<8x32xf32>
    %c40 = arith.constant 40 : index
    %c32_23 = arith.constant 32 : index
    %92 = vector.load %arg7[%c40, %c32_23] : memref<64x64xf32, #tpu.memory_space<vmem>>, vector<8x32xf32>
    tpu.vector_store %arg7[%c40, %c32_23], %91 {strides = array<i32>} : memref<64x64xf32, #tpu.memory_space<vmem>>, vector<8x32xf32>,
    %93 = vector.extract_strided_slice %5 {offsets = [24, 0], sizes = [8, 192], strides = [1, 1]} : vector<64x192xf32> to vector<8x192xf32>
    %cst_24 = arith.constant dense<0.000000e+00> : vector<8x192xf32>
    %94 = tpu.matmul %88, %6, %cst_24 {dimension_numbers = #tpu.dot_dimension_numbers<[1], [0], [0], [1], [0, 0, 1, 1], [], []>} : vector<8x64xf32>, vector<64x192xf32>, vector<8x192xf32> -> vector<8x192xf32>
    %95 = vector.broadcast %7 : vector<1x192xf32> to vector<8x192xf32>
    %96 = arith.addf %94, %95 : vector<8x192xf32>
    %97 = vector.extract_strided_slice %93 {offsets = [0, 0], sizes = [8, 128], strides = [1, 1]} : vector<8x192xf32> to vector<8x128xf32>
    %98 = vector.extract_strided_slice %96 {offsets = [0, 0], sizes = [8, 128], strides = [1, 1]} : vector<8x192xf32> to vector<8x128xf32>
    %99 = arith.addf %97, %98 : vector<8x128xf32>
    %100 = arith.negf %99 : vector<8x128xf32>
    %101 = math.exp %100 : vector<8x128xf32>
    %cst_25 = arith.constant 1.000000e+00 : f32
    %102 = vector.broadcast %cst_25 : f32 to vector<8x128xf32>
    %103 = arith.addf %102, %101 : vector<8x128xf32>
    %104 = arith.divf %102, %103 : vector<8x128xf32>
    %105 = vector.extract_strided_slice %104 {offsets = [0, 0], sizes = [8, 64], strides = [1, 1]} : vector<8x128xf32> to vector<8x64xf32>
    %106 = vector.extract_strided_slice %104 {offsets = [0, 64], sizes = [8, 64], strides = [1, 1]} : vector<8x128xf32> to vector<8x64xf32>
    %107 = vector.extract_strided_slice %93 {offsets = [0, 128], sizes = [8, 64], strides = [1, 1]} : vector<8x192xf32> to vector<8x64xf32>
    %108 = vector.extract_strided_slice %96 {offsets = [0, 128], sizes = [8, 64], strides = [1, 1]} : vector<8x192xf32> to vector<8x64xf32>
    %109 = arith.mulf %105, %108 : vector<8x64xf32>
    %110 = arith.addf %107, %109 : vector<8x64xf32>
    %111 = math.tanh %110 : vector<8x64xf32>
    %cst_26 = arith.constant 1.000000e+00 : f32
    %112 = vector.broadcast %cst_26 : f32 to vector<8x64xf32>
    %113 = arith.subf %112, %106 : vector<8x64xf32>
    %114 = arith.mulf %113, %111 : vector<8x64xf32>
    %115 = arith.mulf %106, %88 : vector<8x64xf32>
    %116 = arith.addf %114, %115 : vector<8x64xf32>
    %117 = vector.extract_strided_slice %116 {offsets = [0, 0], sizes = [8, 32], strides = [1, 1]} : vector<8x64xf32> to vector<8x32xf32>
    %c24 = arith.constant 24 : index
    %c0_27 = arith.constant 0 : index
    %118 = vector.load %arg7[%c24, %c0_27] : memref<64x64xf32, #tpu.memory_space<vmem>>, vector<8x32xf32>
    tpu.vector_store %arg7[%c24, %c0_27], %117 {strides = array<i32>} : memref<64x64xf32, #tpu.memory_space<vmem>>, vector<8x32xf32>,
    %119 = vector.extract_strided_slice %116 {offsets = [0, 32], sizes = [8, 32], strides = [1, 1]} : vector<8x64xf32> to vector<8x32xf32>
    %c32_28 = arith.constant 32 : index
    %c32_29 = arith.constant 32 : index
    %120 = vector.load %arg7[%c32_28, %c32_29] : memref<64x64xf32, #tpu.memory_space<vmem>>, vector<8x32xf32>
    tpu.vector_store %arg7[%c32_28, %c32_29], %119 {strides = array<i32>} : memref<64x64xf32, #tpu.memory_space<vmem>>, vector<8x32xf32>,
    %121 = vector.extract_strided_slice %5 {offsets = [32, 0], sizes = [8, 192], strides = [1, 1]} : vector<64x192xf32> to vector<8x192xf32>
    %cst_30 = arith.constant dense<0.000000e+00> : vector<8x192xf32>
    %122 = tpu.matmul %116, %6, %cst_30 {dimension_numbers = #tpu.dot_dimension_numbers<[1], [0], [0], [1], [0, 0, 1, 1], [], []>} : vector<8x64xf32>, vector<64x192xf32>, vector<8x192xf32> -> vector<8x192xf32>
    %123 = vector.broadcast %7 : vector<1x192xf32> to vector<8x192xf32>
    %124 = arith.addf %122, %123 : vector<8x192xf32>
    %125 = vector.extract_strided_slice %121 {offsets = [0, 0], sizes = [8, 128], strides = [1, 1]} : vector<8x192xf32> to vector<8x128xf32>
    %126 = vector.extract_strided_slice %124 {offsets = [0, 0], sizes = [8, 128], strides = [1, 1]} : vector<8x192xf32> to vector<8x128xf32>
    %127 = arith.addf %125, %126 : vector<8x128xf32>
    %128 = arith.negf %127 : vector<8x128xf32>
    %129 = math.exp %128 : vector<8x128xf32>
    %cst_31 = arith.constant 1.000000e+00 : f32
    %130 = vector.broadcast %cst_31 : f32 to vector<8x128xf32>
    %131 = arith.addf %130, %129 : vector<8x128xf32>
    %132 = arith.divf %130, %131 : vector<8x128xf32>
    %133 = vector.extract_strided_slice %132 {offsets = [0, 0], sizes = [8, 64], strides = [1, 1]} : vector<8x128xf32> to vector<8x64xf32>
    %134 = vector.extract_strided_slice %132 {offsets = [0, 64], sizes = [8, 64], strides = [1, 1]} : vector<8x128xf32> to vector<8x64xf32>
    %135 = vector.extract_strided_slice %121 {offsets = [0, 128], sizes = [8, 64], strides = [1, 1]} : vector<8x192xf32> to vector<8x64xf32>
    %136 = vector.extract_strided_slice %124 {offsets = [0, 128], sizes = [8, 64], strides = [1, 1]} : vector<8x192xf32> to vector<8x64xf32>
    %137 = arith.mulf %133, %136 : vector<8x64xf32>
    %138 = arith.addf %135, %137 : vector<8x64xf32>
    %139 = math.tanh %138 : vector<8x64xf32>
    %cst_32 = arith.constant 1.000000e+00 : f32
    %140 = vector.broadcast %cst_32 : f32 to vector<8x64xf32>
    %141 = arith.subf %140, %134 : vector<8x64xf32>
    %142 = arith.mulf %141, %139 : vector<8x64xf32>
    %143 = arith.mulf %134, %116 : vector<8x64xf32>
    %144 = arith.addf %142, %143 : vector<8x64xf32>
    %145 = vector.extract_strided_slice %144 {offsets = [0, 0], sizes = [8, 32], strides = [1, 1]} : vector<8x64xf32> to vector<8x32xf32>
    %c32_33 = arith.constant 32 : index
    %c0_34 = arith.constant 0 : index
    %146 = vector.load %arg7[%c32_33, %c0_34] : memref<64x64xf32, #tpu.memory_space<vmem>>, vector<8x32xf32>
    tpu.vector_store %arg7[%c32_33, %c0_34], %145 {strides = array<i32>} : memref<64x64xf32, #tpu.memory_space<vmem>>, vector<8x32xf32>,
    %147 = vector.extract_strided_slice %144 {offsets = [0, 32], sizes = [8, 32], strides = [1, 1]} : vector<8x64xf32> to vector<8x32xf32>
    %c24_35 = arith.constant 24 : index
    %c32_36 = arith.constant 32 : index
    %148 = vector.load %arg7[%c24_35, %c32_36] : memref<64x64xf32, #tpu.memory_space<vmem>>, vector<8x32xf32>
    tpu.vector_store %arg7[%c24_35, %c32_36], %147 {strides = array<i32>} : memref<64x64xf32, #tpu.memory_space<vmem>>, vector<8x32xf32>,
    %149 = vector.extract_strided_slice %5 {offsets = [40, 0], sizes = [8, 192], strides = [1, 1]} : vector<64x192xf32> to vector<8x192xf32>
    %cst_37 = arith.constant dense<0.000000e+00> : vector<8x192xf32>
    %150 = tpu.matmul %144, %6, %cst_37 {dimension_numbers = #tpu.dot_dimension_numbers<[1], [0], [0], [1], [0, 0, 1, 1], [], []>} : vector<8x64xf32>, vector<64x192xf32>, vector<8x192xf32> -> vector<8x192xf32>
    %151 = vector.broadcast %7 : vector<1x192xf32> to vector<8x192xf32>
    %152 = arith.addf %150, %151 : vector<8x192xf32>
    %153 = vector.extract_strided_slice %149 {offsets = [0, 0], sizes = [8, 128], strides = [1, 1]} : vector<8x192xf32> to vector<8x128xf32>
    %154 = vector.extract_strided_slice %152 {offsets = [0, 0], sizes = [8, 128], strides = [1, 1]} : vector<8x192xf32> to vector<8x128xf32>
    %155 = arith.addf %153, %154 : vector<8x128xf32>
    %156 = arith.negf %155 : vector<8x128xf32>
    %157 = math.exp %156 : vector<8x128xf32>
    %cst_38 = arith.constant 1.000000e+00 : f32
    %158 = vector.broadcast %cst_38 : f32 to vector<8x128xf32>
    %159 = arith.addf %158, %157 : vector<8x128xf32>
    %160 = arith.divf %158, %159 : vector<8x128xf32>
    %161 = vector.extract_strided_slice %160 {offsets = [0, 0], sizes = [8, 64], strides = [1, 1]} : vector<8x128xf32> to vector<8x64xf32>
    %162 = vector.extract_strided_slice %160 {offsets = [0, 64], sizes = [8, 64], strides = [1, 1]} : vector<8x128xf32> to vector<8x64xf32>
    %163 = vector.extract_strided_slice %149 {offsets = [0, 128], sizes = [8, 64], strides = [1, 1]} : vector<8x192xf32> to vector<8x64xf32>
    %164 = vector.extract_strided_slice %152 {offsets = [0, 128], sizes = [8, 64], strides = [1, 1]} : vector<8x192xf32> to vector<8x64xf32>
    %165 = arith.mulf %161, %164 : vector<8x64xf32>
    %166 = arith.addf %163, %165 : vector<8x64xf32>
    %167 = math.tanh %166 : vector<8x64xf32>
    %cst_39 = arith.constant 1.000000e+00 : f32
    %168 = vector.broadcast %cst_39 : f32 to vector<8x64xf32>
    %169 = arith.subf %168, %162 : vector<8x64xf32>
    %170 = arith.mulf %169, %167 : vector<8x64xf32>
    %171 = arith.mulf %162, %144 : vector<8x64xf32>
    %172 = arith.addf %170, %171 : vector<8x64xf32>
    %173 = vector.extract_strided_slice %172 {offsets = [0, 0], sizes = [8, 32], strides = [1, 1]} : vector<8x64xf32> to vector<8x32xf32>
    %c40_40 = arith.constant 40 : index
    %c0_41 = arith.constant 0 : index
    %174 = vector.load %arg7[%c40_40, %c0_41] : memref<64x64xf32, #tpu.memory_space<vmem>>, vector<8x32xf32>
    tpu.vector_store %arg7[%c40_40, %c0_41], %173 {strides = array<i32>} : memref<64x64xf32, #tpu.memory_space<vmem>>, vector<8x32xf32>,
    %175 = vector.extract_strided_slice %172 {offsets = [0, 32], sizes = [8, 32], strides = [1, 1]} : vector<8x64xf32> to vector<8x32xf32>
    %c16_42 = arith.constant 16 : index
    %c32_43 = arith.constant 32 : index
    %176 = vector.load %arg7[%c16_42, %c32_43] : memref<64x64xf32, #tpu.memory_space<vmem>>, vector<8x32xf32>
    tpu.vector_store %arg7[%c16_42, %c32_43], %175 {strides = array<i32>} : memref<64x64xf32, #tpu.memory_space<vmem>>, vector<8x32xf32>,
    %177 = vector.extract_strided_slice %5 {offsets = [48, 0], sizes = [8, 192], strides = [1, 1]} : vector<64x192xf32> to vector<8x192xf32>
    %cst_44 = arith.constant dense<0.000000e+00> : vector<8x192xf32>
    %178 = tpu.matmul %172, %6, %cst_44 {dimension_numbers = #tpu.dot_dimension_numbers<[1], [0], [0], [1], [0, 0, 1, 1], [], []>} : vector<8x64xf32>, vector<64x192xf32>, vector<8x192xf32> -> vector<8x192xf32>
    %179 = vector.broadcast %7 : vector<1x192xf32> to vector<8x192xf32>
    %180 = arith.addf %178, %179 : vector<8x192xf32>
    %181 = vector.extract_strided_slice %177 {offsets = [0, 0], sizes = [8, 128], strides = [1, 1]} : vector<8x192xf32> to vector<8x128xf32>
    %182 = vector.extract_strided_slice %180 {offsets = [0, 0], sizes = [8, 128], strides = [1, 1]} : vector<8x192xf32> to vector<8x128xf32>
    %183 = arith.addf %181, %182 : vector<8x128xf32>
    %184 = arith.negf %183 : vector<8x128xf32>
    %185 = math.exp %184 : vector<8x128xf32>
    %cst_45 = arith.constant 1.000000e+00 : f32
    %186 = vector.broadcast %cst_45 : f32 to vector<8x128xf32>
    %187 = arith.addf %186, %185 : vector<8x128xf32>
    %188 = arith.divf %186, %187 : vector<8x128xf32>
    %189 = vector.extract_strided_slice %188 {offsets = [0, 0], sizes = [8, 64], strides = [1, 1]} : vector<8x128xf32> to vector<8x64xf32>
    %190 = vector.extract_strided_slice %188 {offsets = [0, 64], sizes = [8, 64], strides = [1, 1]} : vector<8x128xf32> to vector<8x64xf32>
    %191 = vector.extract_strided_slice %177 {offsets = [0, 128], sizes = [8, 64], strides = [1, 1]} : vector<8x192xf32> to vector<8x64xf32>
    %192 = vector.extract_strided_slice %180 {offsets = [0, 128], sizes = [8, 64], strides = [1, 1]} : vector<8x192xf32> to vector<8x64xf32>
    %193 = arith.mulf %189, %192 : vector<8x64xf32>
    %194 = arith.addf %191, %193 : vector<8x64xf32>
    %195 = math.tanh %194 : vector<8x64xf32>
    %cst_46 = arith.constant 1.000000e+00 : f32
    %196 = vector.broadcast %cst_46 : f32 to vector<8x64xf32>
    %197 = arith.subf %196, %190 : vector<8x64xf32>
    %198 = arith.mulf %197, %195 : vector<8x64xf32>
    %199 = arith.mulf %190, %172 : vector<8x64xf32>
    %200 = arith.addf %198, %199 : vector<8x64xf32>
    %201 = vector.extract_strided_slice %200 {offsets = [0, 0], sizes = [8, 32], strides = [1, 1]} : vector<8x64xf32> to vector<8x32xf32>
    %c48_47 = arith.constant 48 : index
    %c0_48 = arith.constant 0 : index
    %202 = vector.load %arg7[%c48_47, %c0_48] : memref<64x64xf32, #tpu.memory_space<vmem>>, vector<8x32xf32>
    tpu.vector_store %arg7[%c48_47, %c0_48], %201 {strides = array<i32>} : memref<64x64xf32, #tpu.memory_space<vmem>>, vector<8x32xf32>,
    %203 = vector.extract_strided_slice %200 {offsets = [0, 32], sizes = [8, 32], strides = [1, 1]} : vector<8x64xf32> to vector<8x32xf32>
    %c8_49 = arith.constant 8 : index
    %c32_50 = arith.constant 32 : index
    %204 = vector.load %arg7[%c8_49, %c32_50] : memref<64x64xf32, #tpu.memory_space<vmem>>, vector<8x32xf32>
    tpu.vector_store %arg7[%c8_49, %c32_50], %203 {strides = array<i32>} : memref<64x64xf32, #tpu.memory_space<vmem>>, vector<8x32xf32>,
    %205 = vector.extract_strided_slice %5 {offsets = [56, 0], sizes = [8, 192], strides = [1, 1]} : vector<64x192xf32> to vector<8x192xf32>
    %cst_51 = arith.constant dense<0.000000e+00> : vector<8x192xf32>
    %206 = tpu.matmul %200, %6, %cst_51 {dimension_numbers = #tpu.dot_dimension_numbers<[1], [0], [0], [1], [0, 0, 1, 1], [], []>} : vector<8x64xf32>, vector<64x192xf32>, vector<8x192xf32> -> vector<8x192xf32>
    %207 = vector.broadcast %7 : vector<1x192xf32> to vector<8x192xf32>
    %208 = arith.addf %206, %207 : vector<8x192xf32>
    %209 = vector.extract_strided_slice %205 {offsets = [0, 0], sizes = [8, 128], strides = [1, 1]} : vector<8x192xf32> to vector<8x128xf32>
    %210 = vector.extract_strided_slice %208 {offsets = [0, 0], sizes = [8, 128], strides = [1, 1]} : vector<8x192xf32> to vector<8x128xf32>
    %211 = arith.addf %209, %210 : vector<8x128xf32>
    %212 = arith.negf %211 : vector<8x128xf32>
    %213 = math.exp %212 : vector<8x128xf32>
    %cst_52 = arith.constant 1.000000e+00 : f32
    %214 = vector.broadcast %cst_52 : f32 to vector<8x128xf32>
    %215 = arith.addf %214, %213 : vector<8x128xf32>
    %216 = arith.divf %214, %215 : vector<8x128xf32>
    %217 = vector.extract_strided_slice %216 {offsets = [0, 0], sizes = [8, 64], strides = [1, 1]} : vector<8x128xf32> to vector<8x64xf32>
    %218 = vector.extract_strided_slice %216 {offsets = [0, 64], sizes = [8, 64], strides = [1, 1]} : vector<8x128xf32> to vector<8x64xf32>
    %219 = vector.extract_strided_slice %205 {offsets = [0, 128], sizes = [8, 64], strides = [1, 1]} : vector<8x192xf32> to vector<8x64xf32>
    %220 = vector.extract_strided_slice %208 {offsets = [0, 128], sizes = [8, 64], strides = [1, 1]} : vector<8x192xf32> to vector<8x64xf32>
    %221 = arith.mulf %217, %220 : vector<8x64xf32>
    %222 = arith.addf %219, %221 : vector<8x64xf32>
    %223 = math.tanh %222 : vector<8x64xf32>
    %cst_53 = arith.constant 1.000000e+00 : f32
    %224 = vector.broadcast %cst_53 : f32 to vector<8x64xf32>
    %225 = arith.subf %224, %218 : vector<8x64xf32>
    %226 = arith.mulf %225, %223 : vector<8x64xf32>
    %227 = arith.mulf %218, %200 : vector<8x64xf32>
    %228 = arith.addf %226, %227 : vector<8x64xf32>
    %229 = vector.extract_strided_slice %228 {offsets = [0, 0], sizes = [8, 32], strides = [1, 1]} : vector<8x64xf32> to vector<8x32xf32>
    %c56_54 = arith.constant 56 : index
    %c0_55 = arith.constant 0 : index
    %230 = vector.load %arg7[%c56_54, %c0_55] : memref<64x64xf32, #tpu.memory_space<vmem>>, vector<8x32xf32>
    tpu.vector_store %arg7[%c56_54, %c0_55], %229 {strides = array<i32>} : memref<64x64xf32, #tpu.memory_space<vmem>>, vector<8x32xf32>,
    %231 = vector.extract_strided_slice %228 {offsets = [0, 32], sizes = [8, 32], strides = [1, 1]} : vector<8x64xf32> to vector<8x32xf32>
    %c0_56 = arith.constant 0 : index
    %c32_57 = arith.constant 32 : index
    %232 = vector.load %arg7[%c0_56, %c32_57] : memref<64x64xf32, #tpu.memory_space<vmem>>, vector<8x32xf32>
    tpu.vector_store %arg7[%c0_56, %c32_57], %231 {strides = array<i32>} : memref<64x64xf32, #tpu.memory_space<vmem>>, vector<8x32xf32>,
    %c0_58 = arith.constant 0 : index
    %c0_59 = arith.constant 0 : index
    %233 = vector.load %arg7[%c0_58, %c0_59] : memref<64x64xf32, #tpu.memory_space<vmem>>, vector<64x64xf32>
    %c0_60 = arith.constant 0 : index
    %c0_61 = arith.constant 0 : index
    %234 = vector.load %arg4[%c0_60, %c0_61] : memref<64x32xf32, #tpu.memory_space<vmem>>, vector<64x32xf32>
    %cst_62 = arith.constant dense<0.000000e+00> : vector<64x32xf32>
    %235 = tpu.matmul %233, %234, %cst_62 {dimension_numbers = #tpu.dot_dimension_numbers<[1], [0], [0], [1], [0, 0, 1, 1], [], []>, precision = #tpu.contract_precision<fp32>} : vector<64x64xf32>, vector<64x32xf32>, vector<64x32xf32> -> vector<64x32xf32>
    %c0_63 = arith.constant 0 : index
    %c0_64 = arith.constant 0 : index
    %236 = vector.load %arg5[%c0_63, %c0_64] : memref<1x32xf32, #tpu.memory_space<vmem>>, vector<1x32xf32>
    %237 = vector.broadcast %236 : vector<1x32xf32> to vector<64x32xf32>
    %238 = arith.addf %235, %237 : vector<64x32xf32>
    %c0_65 = arith.constant 0 : index
    %c0_66 = arith.constant 0 : index
    %239 = vector.load %arg6[%c0_65, %c0_66] : memref<64x32xf32, #tpu.memory_space<vmem>>, vector<64x32xf32>
    tpu.vector_store %arg6[%c0_65, %c0_66], %238 {strides = array<i32>} : memref<64x32xf32, #tpu.memory_space<vmem>>, vector<64x32xf32>,
    return
  }
}

</mosaic_0001>

<llo_original>
// kernel: tpu_custom_call.1
$region0: #{tpu_custom_call.1}
  #allocation0 [shape = 'u32[]', space=smem, size = 0x4, offset = 0x4, fixed_abs, tag = 'smem constant byte address 0x4 - core index']
  #allocation1 [shape = 'u32[144,128]{1,0:T(1,128)}', space=vmem, size = 0x12000, scoped, tag = 'internal scratch']
  #allocation2 [shape = 'f32[64,64]{1,0:T(8,128)}', space=vmem, size = 0x8000, scoped, tag = 'scratch operand']
  %s0 = inlined_call_operand.vmem [shape: f32[64,64], index: 0, kind: input, shape index: {}]
  %s1 = inlined_call_operand.hbm [shape: f32[64,192], index: 1, kind: input, shape index: {}]
  %s2 = inlined_call_operand.hbm [shape: f32[64,192], index: 2, kind: input, shape index: {}]
  %s3 = inlined_call_operand.vmem [shape: f32[2,192], index: 3, kind: input, shape index: {}]
  %s4 = inlined_call_operand.vmem [shape: f32[64,32], index: 4, kind: input, shape index: {}]
  %s5 = inlined_call_operand.vmem [shape: f32[1,32], index: 5, kind: input, shape index: {}]
  %s6 = inlined_call_operand.vmem [shape: f32[64,32], index: 6, kind: output, shape index: {}]
  %s7 = sld [smem:[#allocation0]]
  $region42: #{tpu_custom_call.1} parent=0
    _
  %s9 = ssub.s32 1, %s7
  %s10 = scalar_select 0, %s9, %s7
  $region1: #{tpu_custom_call.1} parent=0
    #allocation3 [shape = 'u8[65536]{0}', space=vmem, size = 0x10000, scoped, tag = 'input window, operand 1, single buffered']
    #allocation4 [shape = 's32[1]{0}', space=sflag, size = 0x4, scoped, tag = 'scoped memory for tpu_custom_call.1']
    #allocation5 [shape = 'u8[65536]{0}', space=vmem, size = 0x10000, scoped, tag = 'input window, operand 2, single buffered']
    #allocation6 [shape = 's32[1]{0}', space=sflag, size = 0x4, scoped, tag = 'scoped memory for tpu_custom_call.1']
    %11 = vsyncpa [#allocation4], 0
    %12 = vsyncpa [#allocation6], 0
    // Predicated region
    $region2: #{tpu_custom_call.1} parent=1 // pred_check
      _
    $region3: #{tpu_custom_call.1} parent=1 // pred_check_branch
      %14 = sbr.rel (0) target = $region5
    $region4: #{tpu_custom_call.1} parent=1 // pred_region
      _
    $region5: #{tpu_custom_call.1} parent=1 // pred_fallthru
      _
    // Predicated region
    $region6: #{tpu_custom_call.1} parent=1 // pred_check
      _
    $region7: #{tpu_custom_call.1} parent=1 // pred_check_branch
      %16 = sbr.rel (0) target = $region9
    $region8: #{tpu_custom_call.1} parent=1 // pred_region
      %s18 = ssub.s32 2048, 2048
      %19 = vsyncadd [#allocation4], %s18
      %s20 = sshll.u32 [#allocation3], 4
      %s21 = int_to_ptr.vmem [resolvable:$true] %s20
      %26 = dma.hbm_to_vmem [thread:$0]  %s1, 2048, %s21, [#allocation4], 256, 256, 16
    $region9: #{tpu_custom_call.1} parent=1 // pred_fallthru
      _
    // Predicated region
    $region10: #{tpu_custom_call.1} parent=1 // pred_check
      _
    $region11: #{tpu_custom_call.1} parent=1 // pred_check_branch
      %28 = sbr.rel (0) target = $region13
    $region12: #{tpu_custom_call.1} parent=1 // pred_region
      %s30 = ssub.s32 2048, 2048
      %31 = vsyncadd [#allocation6], %s30
      %s32 = sshll.u32 [#allocation5], 4
      %s33 = int_to_ptr.vmem [resolvable:$true] %s32
      %38 = dma.hbm_to_vmem [thread:$0]  %s2, 2048, %s33, [#allocation6], 256, 256, 16
    $region13: #{tpu_custom_call.1} parent=1 // pred_fallthru
      _
    // Predicated region
    $region14: #{tpu_custom_call.1} parent=1 // pred_check
      _
    $region15: #{tpu_custom_call.1} parent=1 // pred_check_branch
      %40 = sbr.rel (0) target = $region17
    $region16: #{tpu_custom_call.1} parent=1 // pred_region
      _
    $region17: #{tpu_custom_call.1} parent=1 // pred_fallthru
      _
    // Predicated region
    $region18: #{tpu_custom_call.1} parent=1 // pred_check
      _
    $region19: #{tpu_custom_call.1} parent=1 // pred_check_branch
      %42 = sbr.rel (0) target = $region21
    $region20: #{tpu_custom_call.1} parent=1 // pred_region
      _
    $region21: #{tpu_custom_call.1} parent=1 // pred_fallthru
      _
    // Predicated region
    $region22: #{tpu_custom_call.1} parent=1 // pred_check
      _
    $region23: #{tpu_custom_call.1} parent=1 // pred_check_branch
      %44 = sbr.rel (0) target = $region25
    $region24: #{tpu_custom_call.1} parent=1 // pred_region
      _
    $region25: #{tpu_custom_call.1} parent=1 // pred_fallthru
      _
    // Predicated region
    $region26: #{tpu_custom_call.1} parent=1 // pred_check
      _
    $region27: #{tpu_custom_call.1} parent=1 // pred_check_branch
      %46 = sbr.rel (0) target = $region29
    $region28: #{tpu_custom_call.1} parent=1 // pred_region
      %47 = dma.done [#allocation4], 2048
    $region29: #{tpu_custom_call.1} parent=1 // pred_fallthru
      _
    // Predicated region
    $region30: #{tpu_custom_call.1} parent=1 // pred_check
      _
    $region31: #{tpu_custom_call.1} parent=1 // pred_check_branch
      %49 = sbr.rel (0) target = $region33
    $region32: #{tpu_custom_call.1} parent=1 // pred_region
      %50 = dma.done [#allocation6], 2048
    $region33: #{tpu_custom_call.1} parent=1 // pred_fallthru
      _
    %v51 = vld [vmem:[%s0] sm:$0xff]
    %v52 = vld [vmem:[%s0 + $0x8] sm:$0xff]
    %v53 = vld [vmem:[%s0 + $0x10] sm:$0xff]
    %v54 = vld [vmem:[%s0 + $0x18] sm:$0xff]
    %v55 = vld [vmem:[%s0 + $0x20] sm:$0xff]
    %v56 = vld [vmem:[%s0 + $0x28] sm:$0xff]
    %v57 = vld [vmem:[%s0 + $0x30] sm:$0xff]
    %v58 = vld [vmem:[%s0 + $0x38] sm:$0xff]
    %v59 = vld [vmem:[#allocation3] sm:$0xff]
    %v60 = vld [vmem:[#allocation3 + $0x8] sm:$0xff]
    %v61 = vld [vmem:[#allocation3 + $0x10] sm:$0xff]
    %v62 = vld [vmem:[#allocation3 + $0x18] sm:$0xff]
    %v63 = vld [vmem:[#allocation3 + $0x20] sm:$0xff]
    %v64 = vld [vmem:[#allocation3 + $0x28] sm:$0xff]
    %v65 = vld [vmem:[#allocation3 + $0x30] sm:$0xff]
    %v66 = vld [vmem:[#allocation3 + $0x38] sm:$0xff]
    %v67 = vld [vmem:[#allocation3 + $0x40] sm:$0xff]
    %v68 = vld [vmem:[#allocation3 + $0x48] sm:$0xff]
    %v69 = vld [vmem:[#allocation3 + $0x50] sm:$0xff]
    %v70 = vld [vmem:[#allocation3 + $0x58] sm:$0xff]
    %v71 = vld [vmem:[#allocation3 + $0x60] sm:$0xff]
    %v72 = vld [vmem:[#allocation3 + $0x68] sm:$0xff]
    %v73 = vld [vmem:[#allocation3 + $0x70] sm:$0xff]
    %v74 = vld [vmem:[#allocation3 + $0x78] sm:$0xff]
    %v75 = vld [vmem:[%s3] ss:$2 sm:$0x3]
    %v77 = vlaneseq
    %v78 = vshrl.u32 %v77, 7
    %v79 = vsub.s32 0, %v78
    %v80 = vrot.slane %v75, %v79
    %v81 = vlaneseq
    %v82 = vshrl.u32 %v81, 7
    %v83 = vsub.s32 1, %v82
    %v84 = vrot.slane %v75, %v83
    %vm87 = vcmask 523264
    %v89 = vsel %vm87, %v51, 0
    %v92 = vsel %vm87, %v52, 0
    %v95 = vsel %vm87, %v53, 0
    %v98 = vsel %vm87, %v54, 0
    %v101 = vsel %vm87, %v55, 0
    %v104 = vsel %vm87, %v56, 0
    %v107 = vsel %vm87, %v57, 0
    %v110 = vsel %vm87, %v58, 0
    %v112 = vand.u32 %v60, 4294901760
    %113 = vmatprep.subr.mxu0 %v112
    %v114 = vand.u32 %v59, 4294901760
    %115 = vmatpush1.msra.mxu0 %v114
    %v116 = vand.u32 %v62, 4294901760
    %117 = vmatprep.subr.mxu0 %v116
    %v118 = vand.u32 %v61, 4294901760
    %119 = vmatpush1.msra.mxu0 %v118
    %v120 = vand.u32 %v64, 4294901760
    %121 = vmatprep.subr.mxu0 %v120
    %v122 = vand.u32 %v63, 4294901760
    %123 = vmatpush1.msra.mxu0 %v122
    %v124 = vand.u32 %v66, 4294901760
    %125 = vmatprep.subr.mxu0 %v124
    %v126 = vand.u32 %v65, 4294901760
    %127 = vmatpush1.msra.mxu0 %v126
    %v128 = vand.u32 %v68, 4294901760
    %129 = vmatprep.subr.mxu0 %v128
    %v130 = vand.u32 %v67, 4294901760
    %131 = vmatpush1.msra.mxu0 %v130
    %v132 = vand.u32 %v70, 4294901760
    %133 = vmatprep.subr.mxu0 %v132
    %v134 = vand.u32 %v69, 4294901760
    %135 = vmatpush1.msra.mxu0 %v134
    %v136 = vand.u32 %v72, 4294901760
    %137 = vmatprep.subr.mxu0 %v136
    %v138 = vand.u32 %v71, 4294901760
    %139 = vmatpush1.msra.mxu0 %v138
    %v140 = vand.u32 %v74, 4294901760
    %141 = vmatprep.subr.mxu0 %v140
    %v142 = vand.u32 %v73, 4294901760
    %143 = vmatpush1.msra.mxu0 %v142
    %144 = vmatprep.subr.mxu0 0.0
    %145 = vmatpush1.msra.mxu0 0.0
    %146 = vmatprep.subr.mxu0 0.0
    %147 = vmatpush1.msra.mxu0 0.0
    %148 = vmatprep.subr.mxu0 0.0
    %149 = vmatpush1.msra.mxu0 0.0
    %150 = vmatprep.subr.mxu0 0.0
    %151 = vmatpush1.msra.mxu0 0.0
    %152 = vmatprep.subr.mxu0 0.0
    %153 = vmatpush1.msra.mxu0 0.0
    %154 = vmatprep.subr.mxu0 0.0
    %155 = vmatpush1.msra.mxu0 0.0
    %156 = vmatprep.subr.mxu0 0.0
    %157 = vmatpush1.msra.mxu0 0.0
    %158 = vmatprep.subr.mxu0 0.0
    %159 = vmatpush1.msra.mxu0 0.0
    %160 = vmatprep.subr.mxu0 0.0
    %161 = vmatpush1.msra.mxu0 0.0
    %162 = vmatprep.subr.mxu0 0.0
    %163 = vmatpush1.msra.mxu0 0.0
    %164 = vmatprep.subr.mxu0 0.0
    %165 = vmatpush1.msra.mxu0 0.0
    %166 = vmatprep.subr.mxu0 0.0
    %167 = vmatpush1.msra.mxu0 0.0
    %168 = vmatprep.subr.mxu0 0.0
    %169 = vmatpush1.msra.mxu0 0.0
    %170 = vmatprep.subr.mxu0 0.0
    %171 = vmatpush1.msra.mxu0 0.0
    %172 = vmatprep.subr.mxu0 0.0
    %173 = vmatpush1.msra.mxu0 0.0
    %174 = vmatprep.subr.mxu0 0.0
    %175 = vmatpush1.msra.mxu0 0.0
    %176 = vmatprep.subr.mxu0 0.0
    %177 = vmatpush1.msra.mxu0 0.0
    %178 = vmatprep.subr.mxu0 0.0
    %179 = vmatpush1.msra.mxu0 0.0
    %180 = vmatprep.subr.mxu0 0.0
    %181 = vmatpush1.msra.mxu0 0.0
    %182 = vmatprep.subr.mxu0 0.0
    %183 = vmatpush1.msra.mxu0 0.0
    %184 = vmatprep.subr.mxu0 0.0
    %185 = vmatpush1.msra.mxu0 0.0
    %186 = vmatprep.subr.mxu0 0.0
    %187 = vmatpush1.msra.mxu0 0.0
    %188 = vmatprep.subr.mxu0 0.0
    %189 = vmatpush1.msra.mxu0 0.0
    %190 = vmatprep.subr.mxu0 0.0
    %191 = vmatpush1.msra.mxu0 0.0
    %192 = vmatprep.mubr.f32.mxu0 0.0
    %v193 = vand.u32 %v89, 4294901760
    %v194 = vsub.f32 %v89, %v193
    %v195 = vand.u32 %v194, 4294901760
    %v196 = vsub.f32 %v194, %v195
    %v197 = vand.u32 %v196, 4294901760
    %198 = vmatmul.mubr.f32.gmra.mrb[0].mxu0 %v197
    %v199 = vpop.f32.mrb[0].mxu0
    %v200 = vadd.f32 %v80, %v199
    %v201 = vpop.f32.mrb[0].mxu0
    %v202 = vadd.f32 %v84, %v201
    %203 = vmatprep.mubr.f32.mxu0 0.0
    %v204 = vand.u32 %v92, 4294901760
    %v205 = vsub.f32 %v92, %v204
    %v206 = vand.u32 %v205, 4294901760
    %v207 = vsub.f32 %v205, %v206
    %v208 = vand.u32 %v207, 4294901760
    %209 = vmatmul.mubr.f32.gmra.mrb[0].mxu0 %v208
    %v210 = vpop.f32.mrb[0].mxu0
    %v211 = vadd.f32 %v80, %v210
    %v212 = vpop.f32.mrb[0].mxu0
    %v213 = vadd.f32 %v84, %v212
    %214 = vmatprep.mubr.f32.mxu0 0.0
    %v215 = vand.u32 %v95, 4294901760
    %v216 = vsub.f32 %v95, %v215
    %v217 = vand.u32 %v216, 4294901760
    %v218 = vsub.f32 %v216, %v217
    %v219 = vand.u32 %v218, 4294901760
    %220 = vmatmul.mubr.f32.gmra.mrb[0].mxu0 %v219
    %v221 = vpop.f32.mrb[0].mxu0
    %v222 = vadd.f32 %v80, %v221
    %v223 = vpop.f32.mrb[0].mxu0
    %v224 = vadd.f32 %v84, %v223
    %225 = vmatprep.mubr.f32.mxu0 0.0
    %v226 = vand.u32 %v98, 4294901760
    %v227 = vsub.f32 %v98, %v226
    %v228 = vand.u32 %v227, 4294901760
    %v229 = vsub.f32 %v227, %v228
    %v230 = vand.u32 %v229, 4294901760
    %231 = vmatmul.mubr.f32.gmra.mrb[0].mxu0 %v230
    %v232 = vpop.f32.mrb[0].mxu0
    %v233 = vadd.f32 %v80, %v232
    %v234 = vpop.f32.mrb[0].mxu0
    %v235 = vadd.f32 %v84, %v234
    %236 = vmatprep.mubr.f32.mxu0 0.0
    %v237 = vand.u32 %v101, 4294901760
    %v238 = vsub.f32 %v101, %v237
    %v239 = vand.u32 %v238, 4294901760
    %v240 = vsub.f32 %v238, %v239
    %v241 = vand.u32 %v240, 4294901760
    %242 = vmatmul.mubr.f32.gmra.mrb[0].mxu0 %v241
    %v243 = vpop.f32.mrb[0].mxu0
    %v244 = vadd.f32 %v80, %v243
    %v245 = vpop.f32.mrb[0].mxu0
    %v246 = vadd.f32 %v84, %v245
    %247 = vmatprep.mubr.f32.mxu0 0.0
    %v248 = vand.u32 %v104, 4294901760
    %v249 = vsub.f32 %v104, %v248
    %v250 = vand.u32 %v249, 4294901760
    %v251 = vsub.f32 %v249, %v250
    %v252 = vand.u32 %v251, 4294901760
    %253 = vmatmul.mubr.f32.gmra.mrb[0].mxu0 %v252
    %v254 = vpop.f32.mrb[0].mxu0
    %v255 = vadd.f32 %v80, %v254
    %v256 = vpop.f32.mrb[0].mxu0
    %v257 = vadd.f32 %v84, %v256
    %258 = vmatprep.mubr.f32.mxu0 0.0
    %v259 = vand.u32 %v107, 4294901760
    %v260 = vsub.f32 %v107, %v259
    %v261 = vand.u32 %v260, 4294901760
    %v262 = vsub.f32 %v260, %v261
    %v263 = vand.u32 %v262, 4294901760
    %264 = vmatmul.mubr.f32.gmra.mrb[0].mxu0 %v263
    %v265 = vpop.f32.mrb[0].mxu0
    %v266 = vadd.f32 %v80, %v265
    %v267 = vpop.f32.mrb[0].mxu0
    %v268 = vadd.f32 %v84, %v267
    %269 = vmatprep.mubr.f32.mxu0 0.0
    %v270 = vand.u32 %v110, 4294901760
    %v271 = vsub.f32 %v110, %v270
    %v272 = vand.u32 %v271, 4294901760
    %v273 = vsub.f32 %v271, %v272
    %v274 = vand.u32 %v273, 4294901760
    %275 = vmatmul.mubr.f32.gmra.mrb[0].mxu0 %v274
    %v276 = vpop.f32.mrb[0].mxu0
    %v277 = vadd.f32 %v80, %v276
    %v278 = vpop.f32.mrb[0].mxu0
    %v279 = vadd.f32 %v84, %v278
    %280 = vdwg.mxu0
    %v281 = vand.u32 %v60, 4294901760
    %v282 = vsub.f32 %v60, %v281
    %v283 = vand.u32 %v282, 4294901760
    %v284 = vsub.f32 %v282, %v283
    %v285 = vand.u32 %v284, 4294901760
    %286 = vmatprep.subr.mxu0 %v285
    %v287 = vand.u32 %v59, 4294901760
    %v288 = vsub.f32 %v59, %v287
    %v289 = vand.u32 %v288, 4294901760
    %v290 = vsub.f32 %v288, %v289
    %v291 = vand.u32 %v290, 4294901760
    %292 = vmatpush1.msra.mxu0 %v291
    %v293 = vand.u32 %v62, 4294901760
    %v294 = vsub.f32 %v62, %v293
    %v295 = vand.u32 %v294, 4294901760
    %v296 = vsub.f32 %v294, %v295
    %v297 = vand.u32 %v296, 4294901760
    %298 = vmatprep.subr.mxu0 %v297
    %v299 = vand.u32 %v61, 4294901760
    %v300 = vsub.f32 %v61, %v299
    %v301 = vand.u32 %v300, 4294901760
    %v302 = vsub.f32 %v300, %v301
    %v303 = vand.u32 %v302, 4294901760
    %304 = vmatpush1.msra.mxu0 %v303
    %v305 = vand.u32 %v64, 4294901760
    %v306 = vsub.f32 %v64, %v305
    %v307 = vand.u32 %v306, 4294901760
    %v308 = vsub.f32 %v306, %v307
    %v309 = vand.u32 %v308, 4294901760
    %310 = vmatprep.subr.mxu0 %v309
    %v311 = vand.u32 %v63, 4294901760
    %v312 = vsub.f32 %v63, %v311
    %v313 = vand.u32 %v312, 4294901760
    %v314 = vsub.f32 %v312, %v313
    %v315 = vand.u32 %v314, 4294901760
    %316 = vmatpush1.msra.mxu0 %v315
    %v317 = vand.u32 %v66, 4294901760
    %v318 = vsub.f32 %v66, %v317
    %v319 = vand.u32 %v318, 4294901760
    %v320 = vsub.f32 %v318, %v319
    %v321 = vand.u32 %v320, 4294901760
    %322 = vmatprep.subr.mxu0 %v321
    %v323 = vand.u32 %v65, 4294901760
    %v324 = vsub.f32 %v65, %v323
    %v325 = vand.u32 %v324, 4294901760
    %v326 = vsub.f32 %v324, %v325
    %v327 = vand.u32 %v326, 4294901760
    %328 = vmatpush1.msra.mxu0 %v327
    %v329 = vand.u32 %v68, 4294901760
    %v330 = vsub.f32 %v68, %v329
    %v331 = vand.u32 %v330, 4294901760
    %v332 = vsub.f32 %v330, %v331
    %v333 = vand.u32 %v332, 4294901760
    %334 = vmatprep.subr.mxu0 %v333
    %v335 = vand.u32 %v67, 4294901760
    %v336 = vsub.f32 %v67, %v335
    %v337 = vand.u32 %v336, 4294901760
    %v338 = vsub.f32 %v336, %v337
    %v339 = vand.u32 %v338, 4294901760
    %340 = vmatpush1.msra.mxu0 %v339
    %v341 = vand.u32 %v70, 4294901760
    %v342 = vsub.f32 %v70, %v341
    %v343 = vand.u32 %v342, 4294901760
    %v344 = vsub.f32 %v342, %v343
    %v345 = vand.u32 %v344, 4294901760
    %346 = vmatprep.subr.mxu0 %v345
    %v347 = vand.u32 %v69, 4294901760
    %v348 = vsub.f32 %v69, %v347
    %v349 = vand.u32 %v348, 4294901760
    %v350 = vsub.f32 %v348, %v349
    %v351 = vand.u32 %v350, 4294901760
    %352 = vmatpush1.msra.mxu0 %v351
    %v353 = vand.u32 %v72, 4294901760
    %v354 = vsub.f32 %v72, %v353
    %v355 = vand.u32 %v354, 4294901760
    %v356 = vsub.f32 %v354, %v355
    %v357 = vand.u32 %v356, 4294901760
    %358 = vmatprep.subr.mxu0 %v357
    %v359 = vand.u32 %v71, 4294901760
    %v360 = vsub.f32 %v71, %v359
    %v361 = vand.u32 %v360, 4294901760
    %v362 = vsub.f32 %v360, %v361
    %v363 = vand.u32 %v362, 4294901760
    %364 = vmatpush1.msra.mxu0 %v363
    %v365 = vand.u32 %v74, 4294901760
    %v366 = vsub.f32 %v74, %v365
    %v367 = vand.u32 %v366, 4294901760
    %v368 = vsub.f32 %v366, %v367
    %v369 = vand.u32 %v368, 4294901760
    %370 = vmatprep.subr.mxu0 %v369
    %v371 = vand.u32 %v73, 4294901760
    %v372 = vsub.f32 %v73, %v371
    %v373 = vand.u32 %v372, 4294901760
    %v374 = vsub.f32 %v372, %v373
    %v375 = vand.u32 %v374, 4294901760
    %376 = vmatpush1.msra.mxu0 %v375
    %377 = vmatprep.subr.mxu0 0.0
    %378 = vmatpush1.msra.mxu0 0.0
    %379 = vmatprep.subr.mxu0 0.0
    %380 = vmatpush1.msra.mxu0 0.0
    %381 = vmatprep.subr.mxu0 0.0
    %382 = vmatpush1.msra.mxu0 0.0
    %383 = vmatprep.subr.mxu0 0.0
    %384 = vmatpush1.msra.mxu0 0.0
    %385 = vmatprep.subr.mxu0 0.0
    %386 = vmatpush1.msra.mxu0 0.0
    %387 = vmatprep.subr.mxu0 0.0
    %388 = vmatpush1.msra.mxu0 0.0
    %389 = vmatprep.subr.mxu0 0.0
    %390 = vmatpush1.msra.mxu0 0.0
    %391 = vmatprep.subr.mxu0 0.0
    %392 = vmatpush1.msra.mxu0 0.0
    %393 = vmatprep.subr.mxu0 0.0
    %394 = vmatpush1.msra.mxu0 0.0
    %395 = vmatprep.subr.mxu0 0.0
    %396 = vmatpush1.msra.mxu0 0.0
    %397 = vmatprep.subr.mxu0 0.0
    %398 = vmatpush1.msra.mxu0 0.0
    %399 = vmatprep.subr.mxu0 0.0
    %400 = vmatpush1.msra.mxu0 0.0
    %401 = vmatprep.subr.mxu0 0.0
    %402 = vmatpush1.msra.mxu0 0.0
    %403 = vmatprep.subr.mxu0 0.0
    %404 = vmatpush1.msra.mxu0 0.0
    %405 = vmatprep.subr.mxu0 0.0
    %406 = vmatpush1.msra.mxu0 0.0
    %407 = vmatprep.subr.mxu0 0.0
    %408 = vmatpush1.msra.mxu0 0.0
    %409 = vmatprep.subr.mxu0 0.0
    %410 = vmatpush1.msra.mxu0 0.0
    %411 = vmatprep.subr.mxu0 0.0
    %412 = vmatpush1.msra.mxu0 0.0
    %413 = vmatprep.subr.mxu0 0.0
    %414 = vmatpush1.msra.mxu0 0.0
    %415 = vmatprep.subr.mxu0 0.0
    %416 = vmatpush1.msra.mxu0 0.0
    %417 = vmatprep.subr.mxu0 0.0
    %418 = vmatpush1.msra.mxu0 0.0
    %419 = vmatprep.subr.mxu0 0.0
    %420 = vmatpush1.msra.mxu0 0.0
    %421 = vmatprep.subr.mxu0 0.0
    %422 = vmatpush1.msra.mxu0 0.0
    %423 = vmatprep.subr.mxu0 0.0
    %424 = vmatpush1.msra.mxu0 0.0
    %425 = vmatprep.mubr.f32.mxu0 0.0
    %v426 = vand.u32 %v89, 4294901760
    %427 = vmatmul.mubr.f32.gmra.mrb[0].mxu0 %v426
    %v428 = vpop.f32.mrb[0].mxu0
    %v429 = vadd.f32 %v200, %v428
    %v430 = vpop.f32.mrb[0].mxu0
    %v431 = vadd.f32 %v202, %v430
    %432 = vmatprep.mubr.f32.mxu0 0.0
    %v433 = vand.u32 %v92, 4294901760
    %434 = vmatmul.mubr.f32.gmra.mrb[0].mxu0 %v433
    %v435 = vpop.f32.mrb[0].mxu0
    %v436 = vadd.f32 %v211, %v435
    %v437 = vpop.f32.mrb[0].mxu0
    %v438 = vadd.f32 %v213, %v437
    %439 = vmatprep.mubr.f32.mxu0 0.0
    %v440 = vand.u32 %v95, 4294901760
    %441 = vmatmul.mubr.f32.gmra.mrb[0].mxu0 %v440
    %v442 = vpop.f32.mrb[0].mxu0
    %v443 = vadd.f32 %v222, %v442
    %v444 = vpop.f32.mrb[0].mxu0
    %v445 = vadd.f32 %v224, %v444
    %446 = vmatprep.mubr.f32.mxu0 0.0
    %v447 = vand.u32 %v98, 4294901760
    %448 = vmatmul.mubr.f32.gmra.mrb[0].mxu0 %v447
    %v449 = vpop.f32.mrb[0].mxu0
    %v450 = vadd.f32 %v233, %v449
    %v451 = vpop.f32.mrb[0].mxu0
    %v452 = vadd.f32 %v235, %v451
    %453 = vmatprep.mubr.f32.mxu0 0.0
    %v454 = vand.u32 %v101, 4294901760
    %455 = vmatmul.mubr.f32.gmra.mrb[0].mxu0 %v454
    %v456 = vpop.f32.mrb[0].mxu0
    %v457 = vadd.f32 %v244, %v456
    %v458 = vpop.f32.mrb[0].mxu0
    %v459 = vadd.f32 %v246, %v458
    %460 = vmatprep.mubr.f32.mxu0 0.0
    %v461 = vand.u32 %v104, 4294901760
    %462 = vmatmul.mubr.f32.gmra.mrb[0].mxu0 %v461
    %v463 = vpop.f32.mrb[0].mxu0
    %v464 = vadd.f32 %v255, %v463
    %v465 = vpop.f32.mrb[0].mxu0
    %v466 = vadd.f32 %v257, %v465
    %467 = vmatprep.mubr.f32.mxu0 0.0
    %v468 = vand.u32 %v107, 4294901760
    %469 = vmatmul.mubr.f32.gmra.mrb[0].mxu0 %v468
    %v470 = vpop.f32.mrb[0].mxu0
    %v471 = vadd.f32 %v266, %v470
    %v472 = vpop.f32.mrb[0].mxu0
    %v473 = vadd.f32 %v268, %v472
    %474 = vmatprep.mubr.f32.mxu0 0.0
    %v475 = vand.u32 %v110, 4294901760
    %476 = vmatmul.mubr.f32.gmra.mrb[0].mxu0 %v475
    %v477 = vpop.f32.mrb[0].mxu0
    %v478 = vadd.f32 %v277, %v477
    %v479 = vpop.f32.mrb[0].mxu0
    %v480 = vadd.f32 %v279, %v479
    %481 = vdwg.mxu0
    %v482 = vand.u32 %v60, 4294901760
    %v483 = vsub.f32 %v60, %v482
    %484 = vmatprep.subr.mxu0 %v483
    %v485 = vand.u32 %v59, 4294901760
    %v486 = vsub.f32 %v59, %v485
    %487 = vmatpush1.msra.mxu0 %v486
    %v488 = vand.u32 %v62, 4294901760
    %v489 = vsub.f32 %v62, %v488
    %490 = vmatprep.subr.mxu0 %v489
    %v491 = vand.u32 %v61, 4294901760
    %v492 = vsub.f32 %v61, %v491
    %493 = vmatpush1.msra.mxu0 %v492
    %v494 = vand.u32 %v64, 4294901760
    %v495 = vsub.f32 %v64, %v494
    %496 = vmatprep.subr.mxu0 %v495
    %v497 = vand.u32 %v63, 4294901760
    %v498 = vsub.f32 %v63, %v497
    %499 = vmatpush1.msra.mxu0 %v498
    %v500 = vand.u32 %v66, 4294901760
    %v501 = vsub.f32 %v66, %v500
    %502 = vmatprep.subr.mxu0 %v501
    %v503 = vand.u32 %v65, 4294901760
    %v504 = vsub.f32 %v65, %v503
    %505 = vmatpush1.msra.mxu0 %v504
    %v506 = vand.u32 %v68, 4294901760
    %v507 = vsub.f32 %v68, %v506
    %508 = vmatprep.subr.mxu0 %v507
    %v509 = vand.u32 %v67, 4294901760
    %v510 = vsub.f32 %v67, %v509
    %511 = vmatpush1.msra.mxu0 %v510
    %v512 = vand.u32 %v70, 4294901760
    %v513 = vsub.f32 %v70, %v512
    %514 = vmatprep.subr.mxu0 %v513
    %v515 = vand.u32 %v69, 4294901760
    %v516 = vsub.f32 %v69, %v515
    %517 = vmatpush1.msra.mxu0 %v516
    %v518 = vand.u32 %v72, 4294901760
    %v519 = vsub.f32 %v72, %v518
    %520 = vmatprep.subr.mxu0 %v519
    %v521 = vand.u32 %v71, 4294901760
    %v522 = vsub.f32 %v71, %v521
    %523 = vmatpush1.msra.mxu0 %v522
    %v524 = vand.u32 %v74, 4294901760
    %v525 = vsub.f32 %v74, %v524
    %526 = vmatprep.subr.mxu0 %v525
    %v527 = vand.u32 %v73, 4294901760
    %v528 = vsub.f32 %v73, %v527
    %529 = vmatpush1.msra.mxu0 %v528
    %530 = vmatprep.subr.mxu0 0.0
    %531 = vmatpush1.msra.mxu0 0.0
    %532 = vmatprep.subr.mxu0 0.0
    %533 = vmatpush1.msra.mxu0 0.0
    %534 = vmatprep.subr.mxu0 0.0
    %535 = vmatpush1.msra.mxu0 0.0
    %536 = vmatprep.subr.mxu0 0.0
    %537 = vmatpush1.msra.mxu0 0.0
    %538 = vmatprep.subr.mxu0 0.0
    %539 = vmatpush1.msra.mxu0 0.0
    %540 = vmatprep.subr.mxu0 0.0
    %541 = vmatpush1.msra.mxu0 0.0
    %542 = vmatprep.subr.mxu0 0.0
    %543 = vmatpush1.msra.mxu0 0.0
    %544 = vmatprep.subr.mxu0 0.0
    %545 = vmatpush1.msra.mxu0 0.0
    %546 = vmatprep.subr.mxu0 0.0
    %547 = vmatpush1.msra.mxu0 0.0
    %548 = vmatprep.subr.mxu0 0.0
    %549 = vmatpush1.msra.mxu0 0.0
    %550 = vmatprep.subr.mxu0 0.0
    %551 = vmatpush1.msra.mxu0 0.0
    %552 = vmatprep.subr.mxu0 0.0
    %553 = vmatpush1.msra.mxu0 0.0
    %554 = vmatprep.subr.mxu0 0.0
    %555 = vmatpush1.msra.mxu0 0.0
    %556 = vmatprep.subr.mxu0 0.0
    %557 = vmatpush1.msra.mxu0 0.0
    %558 = vmatprep.subr.mxu0 0.0
    %559 = vmatpush1.msra.mxu0 0.0
    %560 = vmatprep.subr.mxu0 0.0
    %561 = vmatpush1.msra.mxu0 0.0
    %562 = vmatprep.subr.mxu0 0.0
    %563 = vmatpush1.msra.mxu0 0.0
    %564 = vmatprep.subr.mxu0 0.0
    %565 = vmatpush1.msra.mxu0 0.0
    %566 = vmatprep.subr.mxu0 0.0
    %567 = vmatpush1.msra.mxu0 0.0
    %568 = vmatprep.subr.mxu0 0.0
    %569 = vmatpush1.msra.mxu0 0.0
    %570 = vmatprep.subr.mxu0 0.0
    %571 = vmatpush1.msra.mxu0 0.0
    %572 = vmatprep.subr.mxu0 0.0
    %573 = vmatpush1.msra.mxu0 0.0
    %574 = vmatprep.subr.mxu0 0.0
    %575 = vmatpush1.msra.mxu0 0.0
    %576 = vmatprep.subr.mxu0 0.0
    %577 = vmatpush1.msra.mxu0 0.0
    %578 = vmatprep.mubr.f32.mxu0 0.0
    %v579 = vand.u32 %v89, 4294901760
    %v580 = vsub.f32 %v89, %v579
    %581 = vmatmul.mubr.f32.gmra.mrb[0].mxu0 %v580
    %v582 = vpop.f32.mrb[0].mxu0
    %v583 = vadd.f32 %v429, %v582
    %v584 = vpop.f32.mrb[0].mxu0
    %v585 = vadd.f32 %v431, %v584
    %586 = vmatprep.mubr.f32.mxu0 0.0
    %v587 = vand.u32 %v92, 4294901760
    %v588 = vsub.f32 %v92, %v587
    %589 = vmatmul.mubr.f32.gmra.mrb[0].mxu0 %v588
    %v590 = vpop.f32.mrb[0].mxu0
    %v591 = vadd.f32 %v436, %v590
    %v592 = vpop.f32.mrb[0].mxu0
    %v593 = vadd.f32 %v438, %v592
    %594 = vmatprep.mubr.f32.mxu0 0.0
    %v595 = vand.u32 %v95, 4294901760
    %v596 = vsub.f32 %v95, %v595
    %597 = vmatmul.mubr.f32.gmra.mrb[0].mxu0 %v596
    %v598 = vpop.f32.mrb[0].mxu0
    %v599 = vadd.f32 %v443, %v598
    %v600 = vpop.f32.mrb[0].mxu0
    %v601 = vadd.f32 %v445, %v600
    %602 = vmatprep.mubr.f32.mxu0 0.0
    %v603 = vand.u32 %v98, 4294901760
    %v604 = vsub.f32 %v98, %v603
    %605 = vmatmul.mubr.f32.gmra.mrb[0].mxu0 %v604
    %v606 = vpop.f32.mrb[0].mxu0
    %v607 = vadd.f32 %v450, %v606
    %v608 = vpop.f32.mrb[0].mxu0
    %v609 = vadd.f32 %v452, %v608
    %610 = vmatprep.mubr.f32.mxu0 0.0
    %v611 = vand.u32 %v101, 4294901760
    %v612 = vsub.f32 %v101, %v611
    %613 = vmatmul.mubr.f32.gmra.mrb[0].mxu0 %v612
    %v614 = vpop.f32.mrb[0].mxu0
    %v615 = vadd.f32 %v457, %v614
    %v616 = vpop.f32.mrb[0].mxu0
    %v617 = vadd.f32 %v459, %v616
    %618 = vmatprep.mubr.f32.mxu0 0.0
    %v619 = vand.u32 %v104, 4294901760
    %v620 = vsub.f32 %v104, %v619
    %621 = vmatmul.mubr.f32.gmra.mrb[0].mxu0 %v620
    %v622 = vpop.f32.mrb[0].mxu0
    %v623 = vadd.f32 %v464, %v622
    %v624 = vpop.f32.mrb[0].mxu0
    %v625 = vadd.f32 %v466, %v624
    %626 = vmatprep.mubr.f32.mxu0 0.0
    %v627 = vand.u32 %v107, 4294901760
    %v628 = vsub.f32 %v107, %v627
    %629 = vmatmul.mubr.f32.gmra.mrb[0].mxu0 %v628
    %v630 = vpop.f32.mrb[0].mxu0
    %v631 = vadd.f32 %v471, %v630
    %v632 = vpop.f32.mrb[0].mxu0
    %v633 = vadd.f32 %v473, %v632
    %634 = vmatprep.mubr.f32.mxu0 0.0
    %v635 = vand.u32 %v110, 4294901760
    %v636 = vsub.f32 %v110, %v635
    %637 = vmatmul.mubr.f32.gmra.mrb[0].mxu0 %v636
    %v638 = vpop.f32.mrb[0].mxu0
    %v639 = vadd.f32 %v478, %v638
    %v640 = vpop.f32.mrb[0].mxu0
    %v641 = vadd.f32 %v480, %v640
    %642 = vdwg.mxu0
    %v643 = vand.u32 %v60, 4294901760
    %644 = vmatprep.subr.mxu0 %v643
    %v645 = vand.u32 %v59, 4294901760
    %646 = vmatpush1.msra.mxu0 %v645
    %v647 = vand.u32 %v62, 4294901760
    %648 = vmatprep.subr.mxu0 %v647
    %v649 = vand.u32 %v61, 4294901760
    %650 = vmatpush1.msra.mxu0 %v649
    %v651 = vand.u32 %v64, 4294901760
    %652 = vmatprep.subr.mxu0 %v651
    %v653 = vand.u32 %v63, 4294901760
    %654 = vmatpush1.msra.mxu0 %v653
    %v655 = vand.u32 %v66, 4294901760
    %656 = vmatprep.subr.mxu0 %v655
    %v657 = vand.u32 %v65, 4294901760
    %658 = vmatpush1.msra.mxu0 %v657
    %v659 = vand.u32 %v68, 4294901760
    %660 = vmatprep.subr.mxu0 %v659
    %v661 = vand.u32 %v67, 4294901760
    %662 = vmatpush1.msra.mxu0 %v661
    %v663 = vand.u32 %v70, 4294901760
    %664 = vmatprep.subr.mxu0 %v663
    %v665 = vand.u32 %v69, 4294901760
    %666 = vmatpush1.msra.mxu0 %v665
    %v667 = vand.u32 %v72, 4294901760
    %668 = vmatprep.subr.mxu0 %v667
    %v669 = vand.u32 %v71, 4294901760
    %670 = vmatpush1.msra.mxu0 %v669
    %v671 = vand.u32 %v74, 4294901760
    %672 = vmatprep.subr.mxu0 %v671
    %v673 = vand.u32 %v73, 4294901760
    %674 = vmatpush1.msra.mxu0 %v673
    %675 = vmatprep.subr.mxu0 0.0
    %676 = vmatpush1.msra.mxu0 0.0
    %677 = vmatprep.subr.mxu0 0.0
    %678 = vmatpush1.msra.mxu0 0.0
    %679 = vmatprep.subr.mxu0 0.0
    %680 = vmatpush1.msra.mxu0 0.0
    %681 = vmatprep.subr.mxu0 0.0
    %682 = vmatpush1.msra.mxu0 0.0
    %683 = vmatprep.subr.mxu0 0.0
    %684 = vmatpush1.msra.mxu0 0.0
    %685 = vmatprep.subr.mxu0 0.0
    %686 = vmatpush1.msra.mxu0 0.0
    %687 = vmatprep.subr.mxu0 0.0
    %688 = vmatpush1.msra.mxu0 0.0
    %689 = vmatprep.subr.mxu0 0.0
    %690 = vmatpush1.msra.mxu0 0.0
    %691 = vmatprep.subr.mxu0 0.0
    %692 = vmatpush1.msra.mxu0 0.0
    %693 = vmatprep.subr.mxu0 0.0
    %694 = vmatpush1.msra.mxu0 0.0
    %695 = vmatprep.subr.mxu0 0.0
    %696 = vmatpush1.msra.mxu0 0.0
    %697 = vmatprep.subr.mxu0 0.0
    %698 = vmatpush1.msra.mxu0 0.0
    %699 = vmatprep.subr.mxu0 0.0
    %700 = vmatpush1.msra.mxu0 0.0
    %701 = vmatprep.subr.mxu0 0.0
    %702 = vmatpush1.msra.mxu0 0.0
    %703 = vmatprep.subr.mxu0 0.0
    %704 = vmatpush1.msra.mxu0 0.0
    %705 = vmatprep.subr.mxu0 0.0
    %706 = vmatpush1.msra.mxu0 0.0
    %707 = vmatprep.subr.mxu0 0.0
    %708 = vmatpush1.msra.mxu0 0.0
    %709 = vmatprep.subr.mxu0 0.0
    %710 = vmatpush1.msra.mxu0 0.0
    %711 = vmatprep.subr.mxu0 0.0
    %712 = vmatpush1.msra.mxu0 0.0
    %713 = vmatprep.subr.mxu0 0.0
    %714 = vmatpush1.msra.mxu0 0.0
    %715 = vmatprep.subr.mxu0 0.0
    %716 = vmatpush1.msra.mxu0 0.0
    %717 = vmatprep.subr.mxu0 0.0
    %718 = vmatpush1.msra.mxu0 0.0
    %719 = vmatprep.subr.mxu0 0.0
    %720 = vmatpush1.msra.mxu0 0.0
    %721 = vmatprep.subr.mxu0 0.0
    %722 = vmatpush1.msra.mxu0 0.0
    %723 = vmatprep.mubr.f32.mxu0 0.0
    %v724 = vand.u32 %v89, 4294901760
    %v725 = vsub.f32 %v89, %v724
    %v726 = vand.u32 %v725, 4294901760
    %727 = vmatmul.mubr.f32.gmra.mrb[0].mxu0 %v726
    %v728 = vpop.f32.mrb[0].mxu0
    %v729 = vadd.f32 %v583, %v728
    %v730 = vpop.f32.mrb[0].mxu0
    %v731 = vadd.f32 %v585, %v730
    %732 = vmatprep.mubr.f32.mxu0 0.0
    %v733 = vand.u32 %v92, 4294901760
    %v734 = vsub.f32 %v92, %v733
    %v735 = vand.u32 %v734, 4294901760
    %736 = vmatmul.mubr.f32.gmra.mrb[0].mxu0 %v735
    %v737 = vpop.f32.mrb[0].mxu0
    %v738 = vadd.f32 %v591, %v737
    %v739 = vpop.f32.mrb[0].mxu0
    %v740 = vadd.f32 %v593, %v739
    %741 = vmatprep.mubr.f32.mxu0 0.0
    %v742 = vand.u32 %v95, 4294901760
    %v743 = vsub.f32 %v95, %v742
    %v744 = vand.u32 %v743, 4294901760
    %745 = vmatmul.mubr.f32.gmra.mrb[0].mxu0 %v744
    %v746 = vpop.f32.mrb[0].mxu0
    %v747 = vadd.f32 %v599, %v746
    %v748 = vpop.f32.mrb[0].mxu0
    %v749 = vadd.f32 %v601, %v748
    %750 = vmatprep.mubr.f32.mxu0 0.0
    %v751 = vand.u32 %v98, 4294901760
    %v752 = vsub.f32 %v98, %v751
    %v753 = vand.u32 %v752, 4294901760
    %754 = vmatmul.mubr.f32.gmra.mrb[0].mxu0 %v753
    %v755 = vpop.f32.mrb[0].mxu0
    %v756 = vadd.f32 %v607, %v755
    %v757 = vpop.f32.mrb[0].mxu0
    %v758 = vadd.f32 %v609, %v757
    %759 = vmatprep.mubr.f32.mxu0 0.0
    %v760 = vand.u32 %v101, 4294901760
    %v761 = vsub.f32 %v101, %v760
    %v762 = vand.u32 %v761, 4294901760
    %763 = vmatmul.mubr.f32.gmra.mrb[0].mxu0 %v762
    %v764 = vpop.f32.mrb[0].mxu0
    %v765 = vadd.f32 %v615, %v764
    %v766 = vpop.f32.mrb[0].mxu0
    %v767 = vadd.f32 %v617, %v766
    %768 = vmatprep.mubr.f32.mxu0 0.0
    %v769 = vand.u32 %v104, 4294901760
    %v770 = vsub.f32 %v104, %v769
    %v771 = vand.u32 %v770, 4294901760
    %772 = vmatmul.mubr.f32.gmra.mrb[0].mxu0 %v771
    %v773 = vpop.f32.mrb[0].mxu0
    %v774 = vadd.f32 %v623, %v773
    %v775 = vpop.f32.mrb[0].mxu0
    %v776 = vadd.f32 %v625, %v775
    %777 = vmatprep.mubr.f32.mxu0 0.0
    %v778 = vand.u32 %v107, 4294901760
    %v779 = vsub.f32 %v107, %v778
    %v780 = vand.u32 %v779, 4294901760
    %781 = vmatmul.mubr.f32.gmra.mrb[0].mxu0 %v780
    %v782 = vpop.f32.mrb[0].mxu0
    %v783 = vadd.f32 %v631, %v782
    %v784 = vpop.f32.mrb[0].mxu0
    %v785 = vadd.f32 %v633, %v784
    %786 = vmatprep.mubr.f32.mxu0 0.0
    %v787 = vand.u32 %v110, 4294901760
    %v788 = vsub.f32 %v110, %v787
    %v789 = vand.u32 %v788, 4294901760
    %790 = vmatmul.mubr.f32.gmra.mrb[0].mxu0 %v789
    %v791 = vpop.f32.mrb[0].mxu0
    %v792 = vadd.f32 %v639, %v791
    %v793 = vpop.f32.mrb[0].mxu0
    %v794 = vadd.f32 %v641, %v793
    %795 = vdwg.mxu0
    %v796 = vand.u32 %v60, 4294901760
    %v797 = vsub.f32 %v60, %v796
    %v798 = vand.u32 %v797, 4294901760
    %799 = vmatprep.subr.mxu0 %v798
    %v800 = vand.u32 %v59, 4294901760
    %v801 = vsub.f32 %v59, %v800
    %v802 = vand.u32 %v801, 4294901760
    %803 = vmatpush1.msra.mxu0 %v802
    %v804 = vand.u32 %v62, 4294901760
    %v805 = vsub.f32 %v62, %v804
    %v806 = vand.u32 %v805, 4294901760
    %807 = vmatprep.subr.mxu0 %v806
    %v808 = vand.u32 %v61, 4294901760
    %v809 = vsub.f32 %v61, %v808
    %v810 = vand.u32 %v809, 4294901760
    %811 = vmatpush1.msra.mxu0 %v810
    %v812 = vand.u32 %v64, 4294901760
    %v813 = vsub.f32 %v64, %v812
    %v814 = vand.u32 %v813, 4294901760
    %815 = vmatprep.subr.mxu0 %v814
    %v816 = vand.u32 %v63, 4294901760
    %v817 = vsub.f32 %v63, %v816
    %v818 = vand.u32 %v817, 4294901760
    %819 = vmatpush1.msra.mxu0 %v818
    %v820 = vand.u32 %v66, 4294901760
    %v821 = vsub.f32 %v66, %v820
    %v822 = vand.u32 %v821, 4294901760
    %823 = vmatprep.subr.mxu0 %v822
    %v824 = vand.u32 %v65, 4294901760
    %v825 = vsub.f32 %v65, %v824
    %v826 = vand.u32 %v825, 4294901760
    %827 = vmatpush1.msra.mxu0 %v826
    %v828 = vand.u32 %v68, 4294901760
    %v829 = vsub.f32 %v68, %v828
    %v830 = vand.u32 %v829, 4294901760
    %831 = vmatprep.subr.mxu0 %v830
    %v832 = vand.u32 %v67, 4294901760
    %v833 = vsub.f32 %v67, %v832
    %v834 = vand.u32 %v833, 4294901760
    %835 = vmatpush1.msra.mxu0 %v834
    %v836 = vand.u32 %v70, 4294901760
    %v837 = vsub.f32 %v70, %v836
    %v838 = vand.u32 %v837, 4294901760
    %839 = vmatprep.subr.mxu0 %v838
    %v840 = vand.u32 %v69, 4294901760
    %v841 = vsub.f32 %v69, %v840
    %v842 = vand.u32 %v841, 4294901760
    %843 = vmatpush1.msra.mxu0 %v842
    %v844 = vand.u32 %v72, 4294901760
    %v845 = vsub.f32 %v72, %v844
    %v846 = vand.u32 %v845, 4294901760
    %847 = vmatprep.subr.mxu0 %v846
    %v848 = vand.u32 %v71, 4294901760
    %v849 = vsub.f32 %v71, %v848
    %v850 = vand.u32 %v849, 4294901760
    %851 = vmatpush1.msra.mxu0 %v850
    %v852 = vand.u32 %v74, 4294901760
    %v853 = vsub.f32 %v74, %v852
    %v854 = vand.u32 %v853, 4294901760
    %855 = vmatprep.subr.mxu0 %v854
    %v856 = vand.u32 %v73, 4294901760
    %v857 = vsub.f32 %v73, %v856
    %v858 = vand.u32 %v857, 4294901760
    %859 = vmatpush1.msra.mxu0 %v858
    %860 = vmatprep.subr.mxu0 0.0
    %861 = vmatpush1.msra.mxu0 0.0
    %862 = vmatprep.subr.mxu0 0.0
    %863 = vmatpush1.msra.mxu0 0.0
    %864 = vmatprep.subr.mxu0 0.0
    %865 = vmatpush1.msra.mxu0 0.0
    %866 = vmatprep.subr.mxu0 0.0
    %867 = vmatpush1.msra.mxu0 0.0
    %868 = vmatprep.subr.mxu0 0.0
    %869 = vmatpush1.msra.mxu0 0.0
    %870 = vmatprep.subr.mxu0 0.0
    %871 = vmatpush1.msra.mxu0 0.0
    %872 = vmatprep.subr.mxu0 0.0
    %873 = vmatpush1.msra.mxu0 0.0
    %874 = vmatprep.subr.mxu0 0.0
    %875 = vmatpush1.msra.mxu0 0.0
    %876 = vmatprep.subr.mxu0 0.0
    %877 = vmatpush1.msra.mxu0 0.0
    %878 = vmatprep.subr.mxu0 0.0
    %879 = vmatpush1.msra.mxu0 0.0
    %880 = vmatprep.subr.mxu0 0.0
    %881 = vmatpush1.msra.mxu0 0.0
    %882 = vmatprep.subr.mxu0 0.0
    %883 = vmatpush1.msra.mxu0 0.0
    %884 = vmatprep.subr.mxu0 0.0
    %885 = vmatpush1.msra.mxu0 0.0
    %886 = vmatprep.subr.mxu0 0.0
    %887 = vmatpush1.msra.mxu0 0.0
    %888 = vmatprep.subr.mxu0 0.0
    %889 = vmatpush1.msra.mxu0 0.0
    %890 = vmatprep.subr.mxu0 0.0
    %891 = vmatpush1.msra.mxu0 0.0
    %892 = vmatprep.subr.mxu0 0.0
    %893 = vmatpush1.msra.mxu0 0.0
    %894 = vmatprep.subr.mxu0 0.0
    %895 = vmatpush1.msra.mxu0 0.0
    %896 = vmatprep.subr.mxu0 0.0
    %897 = vmatpush1.msra.mxu0 0.0
    %898 = vmatprep.subr.mxu0 0.0
    %899 = vmatpush1.msra.mxu0 0.0
    %900 = vmatprep.subr.mxu0 0.0
    %901 = vmatpush1.msra.mxu0 0.0
    %902 = vmatprep.subr.mxu0 0.0
    %903 = vmatpush1.msra.mxu0 0.0
    %904 = vmatprep.subr.mxu0 0.0
    %905 = vmatpush1.msra.mxu0 0.0
    %906 = vmatprep.subr.mxu0 0.0
    %907 = vmatpush1.msra.mxu0 0.0
    %908 = vmatprep.mubr.f32.mxu0 0.0
    %v909 = vand.u32 %v89, 4294901760
    %910 = vmatmul.mubr.f32.gmra.mrb[0].mxu0 %v909
    %v911 = vpop.f32.mrb[0].mxu0
    %v912 = vadd.f32 %v729, %v911
    %v913 = vpop.f32.mrb[0].mxu0
    %v914 = vadd.f32 %v731, %v913
    %915 = vmatprep.mubr.f32.mxu0 0.0
    %v916 = vand.u32 %v92, 4294901760
    %917 = vmatmul.mubr.f32.gmra.mrb[0].mxu0 %v916
    %v918 = vpop.f32.mrb[0].mxu0
    %v919 = vadd.f32 %v738, %v918
    %v920 = vpop.f32.mrb[0].mxu0
    %v921 = vadd.f32 %v740, %v920
    %922 = vmatprep.mubr.f32.mxu0 0.0
    %v923 = vand.u32 %v95, 4294901760
    %924 = vmatmul.mubr.f32.gmra.mrb[0].mxu0 %v923
    %v925 = vpop.f32.mrb[0].mxu0
    %v926 = vadd.f32 %v747, %v925
    %v927 = vpop.f32.mrb[0].mxu0
    %v928 = vadd.f32 %v749, %v927
    %929 = vmatprep.mubr.f32.mxu0 0.0
    %v930 = vand.u32 %v98, 4294901760
    %931 = vmatmul.mubr.f32.gmra.mrb[0].mxu0 %v930
    %v932 = vpop.f32.mrb[0].mxu0
    %v933 = vadd.f32 %v756, %v932
    %v934 = vpop.f32.mrb[0].mxu0
    %v935 = vadd.f32 %v758, %v934
    %936 = vmatprep.mubr.f32.mxu0 0.0
    %v937 = vand.u32 %v101, 4294901760
    %938 = vmatmul.mubr.f32.gmra.mrb[0].mxu0 %v937
    %v939 = vpop.f32.mrb[0].mxu0
    %v940 = vadd.f32 %v765, %v939
    %v941 = vpop.f32.mrb[0].mxu0
    %v942 = vadd.f32 %v767, %v941
    %943 = vmatprep.mubr.f32.mxu0 0.0
    %v944 = vand.u32 %v104, 4294901760
    %945 = vmatmul.mubr.f32.gmra.mrb[0].mxu0 %v944
    %v946 = vpop.f32.mrb[0].mxu0
    %v947 = vadd.f32 %v774, %v946
    %v948 = vpop.f32.mrb[0].mxu0
    %v949 = vadd.f32 %v776, %v948
    %950 = vmatprep.mubr.f32.mxu0 0.0
    %v951 = vand.u32 %v107, 4294901760
    %952 = vmatmul.mubr.f32.gmra.mrb[0].mxu0 %v951
    %v953 = vpop.f32.mrb[0].mxu0
    %v954 = vadd.f32 %v783, %v953
    %v955 = vpop.f32.mrb[0].mxu0
    %v956 = vadd.f32 %v785, %v955
    %957 = vmatprep.mubr.f32.mxu0 0.0
    %v958 = vand.u32 %v110, 4294901760
    %959 = vmatmul.mubr.f32.gmra.mrb[0].mxu0 %v958
    %v960 = vpop.f32.mrb[0].mxu0
    %v961 = vadd.f32 %v792, %v960
    %v962 = vpop.f32.mrb[0].mxu0
    %v963 = vadd.f32 %v794, %v962
    %964 = vdwg.mxu0
    %v965 = vand.u32 %v60, 4294901760
    %966 = vmatprep.subr.mxu0 %v965
    %v967 = vand.u32 %v59, 4294901760
    %968 = vmatpush1.msra.mxu0 %v967
    %v969 = vand.u32 %v62, 4294901760
    %970 = vmatprep.subr.mxu0 %v969
    %v971 = vand.u32 %v61, 4294901760
    %972 = vmatpush1.msra.mxu0 %v971
    %v973 = vand.u32 %v64, 4294901760
    %974 = vmatprep.subr.mxu0 %v973
    %v975 = vand.u32 %v63, 4294901760
    %976 = vmatpush1.msra.mxu0 %v975
    %v977 = vand.u32 %v66, 4294901760
    %978 = vmatprep.subr.mxu0 %v977
    %v979 = vand.u32 %v65, 4294901760
    %980 = vmatpush1.msra.mxu0 %v979
    %v981 = vand.u32 %v68, 4294901760
    %982 = vmatprep.subr.mxu0 %v981
    %v983 = vand.u32 %v67, 4294901760
    %984 = vmatpush1.msra.mxu0 %v983
    %v985 = vand.u32 %v70, 4294901760
    %986 = vmatprep.subr.mxu0 %v985
    %v987 = vand.u32 %v69, 4294901760
    %988 = vmatpush1.msra.mxu0 %v987
    %v989 = vand.u32 %v72, 4294901760
    %990 = vmatprep.subr.mxu0 %v989
    %v991 = vand.u32 %v71, 4294901760
    %992 = vmatpush1.msra.mxu0 %v991
    %v993 = vand.u32 %v74, 4294901760
    %994 = vmatprep.subr.mxu0 %v993
    %v995 = vand.u32 %v73, 4294901760
    %996 = vmatpush1.msra.mxu0 %v995
    %997 = vmatprep.subr.mxu0 0.0
    %998 = vmatpush1.msra.mxu0 0.0
    %999 = vmatprep.subr.mxu0 0.0
    %1000 = vmatpush1.msra.mxu0 0.0
    %1001 = vmatprep.subr.mxu0 0.0
    %1002 = vmatpush1.msra.mxu0 0.0
    %1003 = vmatprep.subr.mxu0 0.0
    %1004 = vmatpush1.msra.mxu0 0.0
    %1005 = vmatprep.subr.mxu0 0.0
    %1006 = vmatpush1.msra.mxu0 0.0
    %1007 = vmatprep.subr.mxu0 0.0
    %1008 = vmatpush1.msra.mxu0 0.0
    %1009 = vmatprep.subr.mxu0 0.0
    %1010 = vmatpush1.msra.mxu0 0.0
    %1011 = vmatprep.subr.mxu0 0.0
    %1012 = vmatpush1.msra.mxu0 0.0
    %1013 = vmatprep.subr.mxu0 0.0
    %1014 = vmatpush1.msra.mxu0 0.0
    %1015 = vmatprep.subr.mxu0 0.0
    %1016 = vmatpush1.msra.mxu0 0.0
    %1017 = vmatprep.subr.mxu0 0.0
    %1018 = vmatpush1.msra.mxu0 0.0
    %1019 = vmatprep.subr.mxu0 0.0
    %1020 = vmatpush1.msra.mxu0 0.0
    %1021 = vmatprep.subr.mxu0 0.0
    %1022 = vmatpush1.msra.mxu0 0.0
    %1023 = vmatprep.subr.mxu0 0.0
    %1024 = vmatpush1.msra.mxu0 0.0
    %1025 = vmatprep.subr.mxu0 0.0
    %1026 = vmatpush1.msra.mxu0 0.0
    %1027 = vmatprep.subr.mxu0 0.0
    %1028 = vmatpush1.msra.mxu0 0.0
    %1029 = vmatprep.subr.mxu0 0.0
    %1030 = vmatpush1.msra.mxu0 0.0
    %1031 = vmatprep.subr.mxu0 0.0
    %1032 = vmatpush1.msra.mxu0 0.0
    %1033 = vmatprep.subr.mxu0 0.0
    %1034 = vmatpush1.msra.mxu0 0.0
    %1035 = vmatprep.subr.mxu0 0.0
    %1036 = vmatpush1.msra.mxu0 0.0
    %1037 = vmatprep.subr.mxu0 0.0
    %1038 = vmatpush1.msra.mxu0 0.0
    %1039 = vmatprep.subr.mxu0 0.0
    %1040 = vmatpush1.msra.mxu0 0.0
    %1041 = vmatprep.subr.mxu0 0.0
    %1042 = vmatpush1.msra.mxu0 0.0
    %1043 = vmatprep.subr.mxu0 0.0
    %1044 = vmatpush1.msra.mxu0 0.0
    %1045 = vmatprep.mubr.f32.mxu0 0.0
    %v1046 = vand.u32 %v89, 4294901760
    %1047 = vmatmul.mubr.f32.gmra.mrb[0].mxu0 %v1046
    %v1048 = vpop.f32.mrb[0].mxu0
    %v1049 = vadd.f32 %v912, %v1048
    %v1050 = vpop.f32.mrb[0].mxu0
    %v1051 = vadd.f32 %v914, %v1050
    %1052 = vmatprep.mubr.f32.mxu0 0.0
    %v1053 = vand.u32 %v92, 4294901760
    %1054 = vmatmul.mubr.f32.gmra.mrb[0].mxu0 %v1053
    %v1055 = vpop.f32.mrb[0].mxu0
    %v1056 = vadd.f32 %v919, %v1055
    %v1057 = vpop.f32.mrb[0].mxu0
    %v1058 = vadd.f32 %v921, %v1057
    %1059 = vmatprep.mubr.f32.mxu0 0.0
    %v1060 = vand.u32 %v95, 4294901760
    %1061 = vmatmul.mubr.f32.gmra.mrb[0].mxu0 %v1060
    %v1062 = vpop.f32.mrb[0].mxu0
    %v1063 = vadd.f32 %v926, %v1062
    %v1064 = vpop.f32.mrb[0].mxu0
    %v1065 = vadd.f32 %v928, %v1064
    %1066 = vmatprep.mubr.f32.mxu0 0.0
    %v1067 = vand.u32 %v98, 4294901760
    %1068 = vmatmul.mubr.f32.gmra.mrb[0].mxu0 %v1067
    %v1069 = vpop.f32.mrb[0].mxu0
    %v1070 = vadd.f32 %v933, %v1069
    %v1071 = vpop.f32.mrb[0].mxu0
    %v1072 = vadd.f32 %v935, %v1071
    %1073 = vmatprep.mubr.f32.mxu0 0.0
    %v1074 = vand.u32 %v101, 4294901760
    %1075 = vmatmul.mubr.f32.gmra.mrb[0].mxu0 %v1074
    %v1076 = vpop.f32.mrb[0].mxu0
    %v1077 = vadd.f32 %v940, %v1076
    %v1078 = vpop.f32.mrb[0].mxu0
    %v1079 = vadd.f32 %v942, %v1078
    %1080 = vmatprep.mubr.f32.mxu0 0.0
    %v1081 = vand.u32 %v104, 4294901760
    %1082 = vmatmul.mubr.f32.gmra.mrb[0].mxu0 %v1081
    %v1083 = vpop.f32.mrb[0].mxu0
    %v1084 = vadd.f32 %v947, %v1083
    %v1085 = vpop.f32.mrb[0].mxu0
    %v1086 = vadd.f32 %v949, %v1085
    %1087 = vmatprep.mubr.f32.mxu0 0.0
    %v1088 = vand.u32 %v107, 4294901760
    %1089 = vmatmul.mubr.f32.gmra.mrb[0].mxu0 %v1088
    %v1090 = vpop.f32.mrb[0].mxu0
    %v1091 = vadd.f32 %v954, %v1090
    %v1092 = vpop.f32.mrb[0].mxu0
    %v1093 = vadd.f32 %v956, %v1092
    %1094 = vmatprep.mubr.f32.mxu0 0.0
    %v1095 = vand.u32 %v110, 4294901760
    %1096 = vmatmul.mubr.f32.gmra.mrb[0].mxu0 %v1095
    %v1097 = vpop.f32.mrb[0].mxu0
    %v1098 = vadd.f32 %v961, %v1097
    %v1099 = vpop.f32.mrb[0].mxu0
    %v1100 = vadd.f32 %v963, %v1099
    %1101 = vdwg.mxu0
    %v1102 = vld [vmem:[#allocation5] sm:$0xff]
    %v1103 = vld [vmem:[#allocation5 + $0x8] sm:$0xff]
    %v1104 = vld [vmem:[#allocation5 + $0x10] sm:$0xff]
    %v1105 = vld [vmem:[#allocation5 + $0x18] sm:$0xff]
    %v1106 = vld [vmem:[#allocation5 + $0x20] sm:$0xff]
    %v1107 = vld [vmem:[#allocation5 + $0x28] sm:$0xff]
    %v1108 = vld [vmem:[#allocation5 + $0x30] sm:$0xff]
    %v1109 = vld [vmem:[#allocation5 + $0x38] sm:$0xff]
    %v1110 = vld [vmem:[#allocation5 + $0x40] sm:$0xff]
    %v1111 = vld [vmem:[#allocation5 + $0x48] sm:$0xff]
    %v1112 = vld [vmem:[#allocation5 + $0x50] sm:$0xff]
    %v1113 = vld [vmem:[#allocation5 + $0x58] sm:$0xff]
    %v1114 = vld [vmem:[#allocation5 + $0x60] sm:$0xff]
    %v1115 = vld [vmem:[#allocation5 + $0x68] sm:$0xff]
    %v1116 = vld [vmem:[#allocation5 + $0x70] sm:$0xff]
    %v1117 = vld [vmem:[#allocation5 + $0x78] sm:$0xff]
    %s1118 = scalar_lea.vmem %s3, 1
    %v1119 = vld [vmem:[%s1118] ss:$2 sm:$0x3]
    %v1121 = vlaneseq
    %v1122 = vshrl.u32 %v1121, 7
    %v1123 = vsub.s32 0, %v1122
    %v1124 = vrot.slane %v1119, %v1123
    %v1125 = vlaneseq
    %v1126 = vshrl.u32 %v1125, 7
    %v1127 = vsub.s32 1, %v1126
    %v1128 = vrot.slane %v1119, %v1127
    %v1132 = vsel %vm87, 0.0, 0
    %1134 = vmatprep.subr.mxu0 %v1103
    %1135 = vmatpush1.msra.mxu0 %v1102
    %1136 = vmatprep.subr.mxu0 %v1105
    %1137 = vmatpush1.msra.mxu0 %v1104
    %1138 = vmatprep.subr.mxu0 %v1107
    %1139 = vmatpush1.msra.mxu0 %v1106
    %1140 = vmatprep.subr.mxu0 %v1109
    %1141 = vmatpush1.msra.mxu0 %v1108
    %1142 = vmatprep.subr.mxu0 %v1111
    %1143 = vmatpush1.msra.mxu0 %v1110
    %1144 = vmatprep.subr.mxu0 %v1113
    %1145 = vmatpush1.msra.mxu0 %v1112
    %1146 = vmatprep.subr.mxu0 %v1115
    %1147 = vmatpush1.msra.mxu0 %v1114
    %1148 = vmatprep.subr.mxu0 %v1117
    %1149 = vmatpush1.msra.mxu0 %v1116
    %1150 = vmatprep.subr.mxu0 0.0
    %1151 = vmatpush1.msra.mxu0 0.0
    %1152 = vmatprep.subr.mxu0 0.0
    %1153 = vmatpush1.msra.mxu0 0.0
    %1154 = vmatprep.subr.mxu0 0.0
    %1155 = vmatpush1.msra.mxu0 0.0
    %1156 = vmatprep.subr.mxu0 0.0
    %1157 = vmatpush1.msra.mxu0 0.0
    %1158 = vmatprep.subr.mxu0 0.0
    %1159 = vmatpush1.msra.mxu0 0.0
    %1160 = vmatprep.subr.mxu0 0.0
    %1161 = vmatpush1.msra.mxu0 0.0
    %1162 = vmatprep.subr.mxu0 0.0
    %1163 = vmatpush1.msra.mxu0 0.0
    %1164 = vmatprep.subr.mxu0 0.0
    %1165 = vmatpush1.msra.mxu0 0.0
    %1166 = vmatprep.subr.mxu0 0.0
    %1167 = vmatpush1.msra.mxu0 0.0
    %1168 = vmatprep.subr.mxu0 0.0
    %1169 = vmatpush1.msra.mxu0 0.0
    %1170 = vmatprep.subr.mxu0 0.0
    %1171 = vmatpush1.msra.mxu0 0.0
    %1172 = vmatprep.subr.mxu0 0.0
    %1173 = vmatpush1.msra.mxu0 0.0
    %1174 = vmatprep.subr.mxu0 0.0
    %1175 = vmatpush1.msra.mxu0 0.0
    %1176 = vmatprep.subr.mxu0 0.0
    %1177 = vmatpush1.msra.mxu0 0.0
    %1178 = vmatprep.subr.mxu0 0.0
    %1179 = vmatpush1.msra.mxu0 0.0
    %1180 = vmatprep.subr.mxu0 0.0
    %1181 = vmatpush1.msra.mxu0 0.0
    %1182 = vmatprep.subr.mxu0 0.0
    %1183 = vmatpush1.msra.mxu0 0.0
    %1184 = vmatprep.subr.mxu0 0.0
    %1185 = vmatpush1.msra.mxu0 0.0
    %1186 = vmatprep.subr.mxu0 0.0
    %1187 = vmatpush1.msra.mxu0 0.0
    %1188 = vmatprep.subr.mxu0 0.0
    %1189 = vmatpush1.msra.mxu0 0.0
    %1190 = vmatprep.subr.mxu0 0.0
    %1191 = vmatpush1.msra.mxu0 0.0
    %1192 = vmatprep.subr.mxu0 0.0
    %1193 = vmatpush1.msra.mxu0 0.0
    %1194 = vmatprep.subr.mxu0 0.0
    %1195 = vmatpush1.msra.mxu0 0.0
    %1196 = vmatprep.subr.mxu0 0.0
    %1197 = vmatpush1.msra.mxu0 0.0
    %1198 = vmatprep.mubr.f32.mxu0 0.0
    %1199 = vmatmul.mubr.f32.gmra.mrb[0].mxu0 %v1132
    %v1200 = vpop.f32.mrb[0].mxu0
    %v1201 = vadd.f32 %v1124, %v1200
    %v1202 = vpop.f32.mrb[0].mxu0
    %v1203 = vadd.f32 %v1128, %v1202
    %1204 = vdwg.mxu0
    %v1205 = vadd.f32 %v1049, %v1201
    %v1206 = vxor.u32 %v1205, 2147483648
    %v1207 = vmul.f32 %v1206, 1.442695
    %v1208 = vpow.pop %v1207
    %v1209 = vadd.f32 %v1208, 1.0
    %v1210 = vrcp.pop %v1209
    %v1211 = vmul.f32 1.0, %v1210
    %v1212 = vmul.f32 %v1211, %v1203
    %v1213 = vadd.f32 %v1051, %v1212
    %v1214 = vtanh.pop %v1213
    %v1215 = vsub.f32 1.0, %v1211
    %1217 = vrot.lane.b32.xlu0 %v1214, 64
    %v1218 = vpop.permute.xlu0 %1217
    %v1220 = vmul.f32 %v1215, %v1218
    %v1221 = vmul.f32 %v1211, 0.0
    %v1222 = vadd.f32 %v1220, %v1221
    %1224 = vrot.lane.b32.xlu0 %v1222, 64
    %v1225 = vpop.permute.xlu0 %1224
    %vm1227 = vcmask 261120
    %1228 = vst.msk [vmem:[#allocation2] sm:$0xff] %vm1227, %v1225
    %vm1229 = vcmask 523520
    %1230 = vst.msk [vmem:[#allocation2 + $0x38] sm:$0xff] %vm1229, %v1225
    %v1231 = vsel %vm87, %v1225, 0
    %1233 = vmatprep.subr.mxu0 %v1103
    %1234 = vmatpush1.msra.mxu0 %v1102
    %1235 = vmatprep.subr.mxu0 %v1105
    %1236 = vmatpush1.msra.mxu0 %v1104
    %1237 = vmatprep.subr.mxu0 %v1107
    %1238 = vmatpush1.msra.mxu0 %v1106
    %1239 = vmatprep.subr.mxu0 %v1109
    %1240 = vmatpush1.msra.mxu0 %v1108
    %1241 = vmatprep.subr.mxu0 %v1111
    %1242 = vmatpush1.msra.mxu0 %v1110
    %1243 = vmatprep.subr.mxu0 %v1113
    %1244 = vmatpush1.msra.mxu0 %v1112
    %1245 = vmatprep.subr.mxu0 %v1115
    %1246 = vmatpush1.msra.mxu0 %v1114
    %1247 = vmatprep.subr.mxu0 %v1117
    %1248 = vmatpush1.msra.mxu0 %v1116
    %1249 = vmatprep.subr.mxu0 0.0
    %1250 = vmatpush1.msra.mxu0 0.0
    %1251 = vmatprep.subr.mxu0 0.0
    %1252 = vmatpush1.msra.mxu0 0.0
    %1253 = vmatprep.subr.mxu0 0.0
    %1254 = vmatpush1.msra.mxu0 0.0
    %1255 = vmatprep.subr.mxu0 0.0
    %1256 = vmatpush1.msra.mxu0 0.0
    %1257 = vmatprep.subr.mxu0 0.0
    %1258 = vmatpush1.msra.mxu0 0.0
    %1259 = vmatprep.subr.mxu0 0.0
    %1260 = vmatpush1.msra.mxu0 0.0
    %1261 = vmatprep.subr.mxu0 0.0
    %1262 = vmatpush1.msra.mxu0 0.0
    %1263 = vmatprep.subr.mxu0 0.0
    %1264 = vmatpush1.msra.mxu0 0.0
    %1265 = vmatprep.subr.mxu0 0.0
    %1266 = vmatpush1.msra.mxu0 0.0
    %1267 = vmatprep.subr.mxu0 0.0
    %1268 = vmatpush1.msra.mxu0 0.0
    %1269 = vmatprep.subr.mxu0 0.0
    %1270 = vmatpush1.msra.mxu0 0.0
    %1271 = vmatprep.subr.mxu0 0.0
    %1272 = vmatpush1.msra.mxu0 0.0
    %1273 = vmatprep.subr.mxu0 0.0
    %1274 = vmatpush1.msra.mxu0 0.0
    %1275 = vmatprep.subr.mxu0 0.0
    %1276 = vmatpush1.msra.mxu0 0.0
    %1277 = vmatprep.subr.mxu0 0.0
    %1278 = vmatpush1.msra.mxu0 0.0
    %1279 = vmatprep.subr.mxu0 0.0
    %1280 = vmatpush1.msra.mxu0 0.0
    %1281 = vmatprep.subr.mxu0 0.0
    %1282 = vmatpush1.msra.mxu0 0.0
    %1283 = vmatprep.subr.mxu0 0.0
    %1284 = vmatpush1.msra.mxu0 0.0
    %1285 = vmatprep.subr.mxu0 0.0
    %1286 = vmatpush1.msra.mxu0 0.0
    %1287 = vmatprep.subr.mxu0 0.0
    %1288 = vmatpush1.msra.mxu0 0.0
    %1289 = vmatprep.subr.mxu0 0.0
    %1290 = vmatpush1.msra.mxu0 0.0
    %1291 = vmatprep.subr.mxu0 0.0
    %1292 = vmatpush1.msra.mxu0 0.0
    %1293 = vmatprep.subr.mxu0 0.0
    %1294 = vmatpush1.msra.mxu0 0.0
    %1295 = vmatprep.subr.mxu0 0.0
    %1296 = vmatpush1.msra.mxu0 0.0
    %1297 = vmatprep.mubr.f32.mxu0 0.0
    %1298 = vmatmul.mubr.f32.gmra.mrb[0].mxu0 %v1231
    %v1299 = vpop.f32.mrb[0].mxu0
    %v1300 = vadd.f32 %v1124, %v1299
    %v1301 = vpop.f32.mrb[0].mxu0
    %v1302 = vadd.f32 %v1128, %v1301
    %1303 = vdwg.mxu0
    %v1304 = vadd.f32 %v1056, %v1300
    %v1305 = vxor.u32 %v1304, 2147483648
    %v1306 = vmul.f32 %v1305, 1.442695
    %v1307 = vpow.pop %v1306
    %v1308 = vadd.f32 %v1307, 1.0
    %v1309 = vrcp.pop %v1308
    %v1310 = vmul.f32 1.0, %v1309
    %v1311 = vmul.f32 %v1310, %v1302
    %v1312 = vadd.f32 %v1058, %v1311
    %v1313 = vtanh.pop %v1312
    %v1314 = vsub.f32 1.0, %v1310
    %1316 = vrot.lane.b32.xlu0 %v1313, 64
    %v1317 = vpop.permute.xlu0 %1316
    %v1319 = vmul.f32 %v1314, %v1317
    %v1320 = vmul.f32 %v1310, %v1222
    %v1321 = vadd.f32 %v1319, %v1320
    %1323 = vrot.lane.b32.xlu0 %v1321, 64
    %v1324 = vpop.permute.xlu0 %1323
    %1326 = vst.msk [vmem:[#allocation2 + $0x8] sm:$0xff] %vm1227, %v1324
    %1327 = vst.msk [vmem:[#allocation2 + $0x30] sm:$0xff] %vm1229, %v1324
    %v1328 = vsel %vm87, %v1324, 0
    %1330 = vmatprep.subr.mxu0 %v1103
    %1331 = vmatpush1.msra.mxu0 %v1102
    %1332 = vmatprep.subr.mxu0 %v1105
    %1333 = vmatpush1.msra.mxu0 %v1104
    %1334 = vmatprep.subr.mxu0 %v1107
    %1335 = vmatpush1.msra.mxu0 %v1106
    %1336 = vmatprep.subr.mxu0 %v1109
    %1337 = vmatpush1.msra.mxu0 %v1108
    %1338 = vmatprep.subr.mxu0 %v1111
    %1339 = vmatpush1.msra.mxu0 %v1110
    %1340 = vmatprep.subr.mxu0 %v1113
    %1341 = vmatpush1.msra.mxu0 %v1112
    %1342 = vmatprep.subr.mxu0 %v1115
    %1343 = vmatpush1.msra.mxu0 %v1114
    %1344 = vmatprep.subr.mxu0 %v1117
    %1345 = vmatpush1.msra.mxu0 %v1116
    %1346 = vmatprep.subr.mxu0 0.0
    %1347 = vmatpush1.msra.mxu0 0.0
    %1348 = vmatprep.subr.mxu0 0.0
    %1349 = vmatpush1.msra.mxu0 0.0
    %1350 = vmatprep.subr.mxu0 0.0
    %1351 = vmatpush1.msra.mxu0 0.0
    %1352 = vmatprep.subr.mxu0 0.0
    %1353 = vmatpush1.msra.mxu0 0.0
    %1354 = vmatprep.subr.mxu0 0.0
    %1355 = vmatpush1.msra.mxu0 0.0
    %1356 = vmatprep.subr.mxu0 0.0
    %1357 = vmatpush1.msra.mxu0 0.0
    %1358 = vmatprep.subr.mxu0 0.0
    %1359 = vmatpush1.msra.mxu0 0.0
    %1360 = vmatprep.subr.mxu0 0.0
    %1361 = vmatpush1.msra.mxu0 0.0
    %1362 = vmatprep.subr.mxu0 0.0
    %1363 = vmatpush1.msra.mxu0 0.0
    %1364 = vmatprep.subr.mxu0 0.0
    %1365 = vmatpush1.msra.mxu0 0.0
    %1366 = vmatprep.subr.mxu0 0.0
    %1367 = vmatpush1.msra.mxu0 0.0
    %1368 = vmatprep.subr.mxu0 0.0
    %1369 = vmatpush1.msra.mxu0 0.0
    %1370 = vmatprep.subr.mxu0 0.0
    %1371 = vmatpush1.msra.mxu0 0.0
    %1372 = vmatprep.subr.mxu0 0.0
    %1373 = vmatpush1.msra.mxu0 0.0
    %1374 = vmatprep.subr.mxu0 0.0
    %1375 = vmatpush1.msra.mxu0 0.0
    %1376 = vmatprep.subr.mxu0 0.0
    %1377 = vmatpush1.msra.mxu0 0.0
    %1378 = vmatprep.subr.mxu0 0.0
    %1379 = vmatpush1.msra.mxu0 0.0
    %1380 = vmatprep.subr.mxu0 0.0
    %1381 = vmatpush1.msra.mxu0 0.0
    %1382 = vmatprep.subr.mxu0 0.0
    %1383 = vmatpush1.msra.mxu0 0.0
    %1384 = vmatprep.subr.mxu0 0.0
    %1385 = vmatpush1.msra.mxu0 0.0
    %1386 = vmatprep.subr.mxu0 0.0
    %1387 = vmatpush1.msra.mxu0 0.0
    %1388 = vmatprep.subr.mxu0 0.0
    %1389 = vmatpush1.msra.mxu0 0.0
    %1390 = vmatprep.subr.mxu0 0.0
    %1391 = vmatpush1.msra.mxu0 0.0
    %1392 = vmatprep.subr.mxu0 0.0
    %1393 = vmatpush1.msra.mxu0 0.0
    %1394 = vmatprep.mubr.f32.mxu0 0.0
    %1395 = vmatmul.mubr.f32.gmra.mrb[0].mxu0 %v1328
    %v1396 = vpop.f32.mrb[0].mxu0
    %v1397 = vadd.f32 %v1124, %v1396
    %v1398 = vpop.f32.mrb[0].mxu0
    %v1399 = vadd.f32 %v1128, %v1398
    %1400 = vdwg.mxu0
    %v1401 = vadd.f32 %v1063, %v1397
    %v1402 = vxor.u32 %v1401, 2147483648
    %v1403 = vmul.f32 %v1402, 1.442695
    %v1404 = vpow.pop %v1403
    %v1405 = vadd.f32 %v1404, 1.0
    %v1406 = vrcp.pop %v1405
    %v1407 = vmul.f32 1.0, %v1406
    %v1408 = vmul.f32 %v1407, %v1399
    %v1409 = vadd.f32 %v1065, %v1408
    %v1410 = vtanh.pop %v1409
    %v1411 = vsub.f32 1.0, %v1407
    %1413 = vrot.lane.b32.xlu0 %v1410, 64
    %v1414 = vpop.permute.xlu0 %1413
    %v1416 = vmul.f32 %v1411, %v1414
    %v1417 = vmul.f32 %v1407, %v1321
    %v1418 = vadd.f32 %v1416, %v1417
    %1420 = vrot.lane.b32.xlu0 %v1418, 64
    %v1421 = vpop.permute.xlu0 %1420
    %1423 = vst.msk [vmem:[#allocation2 + $0x10] sm:$0xff] %vm1227, %v1421
    %1424 = vst.msk [vmem:[#allocation2 + $0x28] sm:$0xff] %vm1229, %v1421
    %v1425 = vsel %vm87, %v1421, 0
    %1427 = vmatprep.subr.mxu0 %v1103
    %1428 = vmatpush1.msra.mxu0 %v1102
    %1429 = vmatprep.subr.mxu0 %v1105
    %1430 = vmatpush1.msra.mxu0 %v1104
    %1431 = vmatprep.subr.mxu0 %v1107
    %1432 = vmatpush1.msra.mxu0 %v1106
    %1433 = vmatprep.subr.mxu0 %v1109
    %1434 = vmatpush1.msra.mxu0 %v1108
    %1435 = vmatprep.subr.mxu0 %v1111
    %1436 = vmatpush1.msra.mxu0 %v1110
    %1437 = vmatprep.subr.mxu0 %v1113
    %1438 = vmatpush1.msra.mxu0 %v1112
    %1439 = vmatprep.subr.mxu0 %v1115
    %1440 = vmatpush1.msra.mxu0 %v1114
    %1441 = vmatprep.subr.mxu0 %v1117
    %1442 = vmatpush1.msra.mxu0 %v1116
    %1443 = vmatprep.subr.mxu0 0.0
    %1444 = vmatpush1.msra.mxu0 0.0
    %1445 = vmatprep.subr.mxu0 0.0
    %1446 = vmatpush1.msra.mxu0 0.0
    %1447 = vmatprep.subr.mxu0 0.0
    %1448 = vmatpush1.msra.mxu0 0.0
    %1449 = vmatprep.subr.mxu0 0.0
    %1450 = vmatpush1.msra.mxu0 0.0
    %1451 = vmatprep.subr.mxu0 0.0
    %1452 = vmatpush1.msra.mxu0 0.0
    %1453 = vmatprep.subr.mxu0 0.0
    %1454 = vmatpush1.msra.mxu0 0.0
    %1455 = vmatprep.subr.mxu0 0.0
    %1456 = vmatpush1.msra.mxu0 0.0
    %1457 = vmatprep.subr.mxu0 0.0
    %1458 = vmatpush1.msra.mxu0 0.0
    %1459 = vmatprep.subr.mxu0 0.0
    %1460 = vmatpush1.msra.mxu0 0.0
    %1461 = vmatprep.subr.mxu0 0.0
    %1462 = vmatpush1.msra.mxu0 0.0
    %1463 = vmatprep.subr.mxu0 0.0
    %1464 = vmatpush1.msra.mxu0 0.0
    %1465 = vmatprep.subr.mxu0 0.0
    %1466 = vmatpush1.msra.mxu0 0.0
    %1467 = vmatprep.subr.mxu0 0.0
    %1468 = vmatpush1.msra.mxu0 0.0
    %1469 = vmatprep.subr.mxu0 0.0
    %1470 = vmatpush1.msra.mxu0 0.0
    %1471 = vmatprep.subr.mxu0 0.0
    %1472 = vmatpush1.msra.mxu0 0.0
    %1473 = vmatprep.subr.mxu0 0.0
    %1474 = vmatpush1.msra.mxu0 0.0
    %1475 = vmatprep.subr.mxu0 0.0
    %1476 = vmatpush1.msra.mxu0 0.0
    %1477 = vmatprep.subr.mxu0 0.0
    %1478 = vmatpush1.msra.mxu0 0.0
    %1479 = vmatprep.subr.mxu0 0.0
    %1480 = vmatpush1.msra.mxu0 0.0
    %1481 = vmatprep.subr.mxu0 0.0
    %1482 = vmatpush1.msra.mxu0 0.0
    %1483 = vmatprep.subr.mxu0 0.0
    %1484 = vmatpush1.msra.mxu0 0.0
    %1485 = vmatprep.subr.mxu0 0.0
    %1486 = vmatpush1.msra.mxu0 0.0
    %1487 = vmatprep.subr.mxu0 0.0
    %1488 = vmatpush1.msra.mxu0 0.0
    %1489 = vmatprep.subr.mxu0 0.0
    %1490 = vmatpush1.msra.mxu0 0.0
    %1491 = vmatprep.mubr.f32.mxu0 0.0
    %1492 = vmatmul.mubr.f32.gmra.mrb[0].mxu0 %v1425
    %v1493 = vpop.f32.mrb[0].mxu0
    %v1494 = vadd.f32 %v1124, %v1493
    %v1495 = vpop.f32.mrb[0].mxu0
    %v1496 = vadd.f32 %v1128, %v1495
    %1497 = vdwg.mxu0
    %v1498 = vadd.f32 %v1070, %v1494
    %v1499 = vxor.u32 %v1498, 2147483648
    %v1500 = vmul.f32 %v1499, 1.442695
    %v1501 = vpow.pop %v1500
    %v1502 = vadd.f32 %v1501, 1.0
    %v1503 = vrcp.pop %v1502
    %v1504 = vmul.f32 1.0, %v1503
    %v1505 = vmul.f32 %v1504, %v1496
    %v1506 = vadd.f32 %v1072, %v1505
    %v1507 = vtanh.pop %v1506
    %v1508 = vsub.f32 1.0, %v1504
    %1510 = vrot.lane.b32.xlu0 %v1507, 64
    %v1511 = vpop.permute.xlu0 %1510
    %v1513 = vmul.f32 %v1508, %v1511
    %v1514 = vmul.f32 %v1504, %v1418
    %v1515 = vadd.f32 %v1513, %v1514
    %1517 = vrot.lane.b32.xlu0 %v1515, 64
    %v1518 = vpop.permute.xlu0 %1517
    %1520 = vst.msk [vmem:[#allocation2 + $0x18] sm:$0xff] %vm1227, %v1518
    %1521 = vst.msk [vmem:[#allocation2 + $0x20] sm:$0xff] %vm1229, %v1518
    %v1522 = vsel %vm87, %v1518, 0
    %1524 = vmatprep.subr.mxu0 %v1103
    %1525 = vmatpush1.msra.mxu0 %v1102
    %1526 = vmatprep.subr.mxu0 %v1105
    %1527 = vmatpush1.msra.mxu0 %v1104
    %1528 = vmatprep.subr.mxu0 %v1107
    %1529 = vmatpush1.msra.mxu0 %v1106
    %1530 = vmatprep.subr.mxu0 %v1109
    %1531 = vmatpush1.msra.mxu0 %v1108
    %1532 = vmatprep.subr.mxu0 %v1111
    %1533 = vmatpush1.msra.mxu0 %v1110
    %1534 = vmatprep.subr.mxu0 %v1113
    %1535 = vmatpush1.msra.mxu0 %v1112
    %1536 = vmatprep.subr.mxu0 %v1115
    %1537 = vmatpush1.msra.mxu0 %v1114
    %1538 = vmatprep.subr.mxu0 %v1117
    %1539 = vmatpush1.msra.mxu0 %v1116
    %1540 = vmatprep.subr.mxu0 0.0
    %1541 = vmatpush1.msra.mxu0 0.0
    %1542 = vmatprep.subr.mxu0 0.0
    %1543 = vmatpush1.msra.mxu0 0.0
    %1544 = vmatprep.subr.mxu0 0.0
    %1545 = vmatpush1.msra.mxu0 0.0
    %1546 = vmatprep.subr.mxu0 0.0
    %1547 = vmatpush1.msra.mxu0 0.0
    %1548 = vmatprep.subr.mxu0 0.0
    %1549 = vmatpush1.msra.mxu0 0.0
    %1550 = vmatprep.subr.mxu0 0.0
    %1551 = vmatpush1.msra.mxu0 0.0
    %1552 = vmatprep.subr.mxu0 0.0
    %1553 = vmatpush1.msra.mxu0 0.0
    %1554 = vmatprep.subr.mxu0 0.0
    %1555 = vmatpush1.msra.mxu0 0.0
    %1556 = vmatprep.subr.mxu0 0.0
    %1557 = vmatpush1.msra.mxu0 0.0
    %1558 = vmatprep.subr.mxu0 0.0
    %1559 = vmatpush1.msra.mxu0 0.0
    %1560 = vmatprep.subr.mxu0 0.0
    %1561 = vmatpush1.msra.mxu0 0.0
    %1562 = vmatprep.subr.mxu0 0.0
    %1563 = vmatpush1.msra.mxu0 0.0
    %1564 = vmatprep.subr.mxu0 0.0
    %1565 = vmatpush1.msra.mxu0 0.0
    %1566 = vmatprep.subr.mxu0 0.0
    %1567 = vmatpush1.msra.mxu0 0.0
    %1568 = vmatprep.subr.mxu0 0.0
    %1569 = vmatpush1.msra.mxu0 0.0
    %1570 = vmatprep.subr.mxu0 0.0
    %1571 = vmatpush1.msra.mxu0 0.0
    %1572 = vmatprep.subr.mxu0 0.0
    %1573 = vmatpush1.msra.mxu0 0.0
    %1574 = vmatprep.subr.mxu0 0.0
    %1575 = vmatpush1.msra.mxu0 0.0
    %1576 = vmatprep.subr.mxu0 0.0
    %1577 = vmatpush1.msra.mxu0 0.0
    %1578 = vmatprep.subr.mxu0 0.0
    %1579 = vmatpush1.msra.mxu0 0.0
    %1580 = vmatprep.subr.mxu0 0.0
    %1581 = vmatpush1.msra.mxu0 0.0
    %1582 = vmatprep.subr.mxu0 0.0
    %1583 = vmatpush1.msra.mxu0 0.0
    %1584 = vmatprep.subr.mxu0 0.0
    %1585 = vmatpush1.msra.mxu0 0.0
    %1586 = vmatprep.subr.mxu0 0.0
    %1587 = vmatpush1.msra.mxu0 0.0
    %1588 = vmatprep.mubr.f32.mxu0 0.0
    %1589 = vmatmul.mubr.f32.gmra.mrb[0].mxu0 %v1522
    %v1590 = vpop.f32.mrb[0].mxu0
    %v1591 = vadd.f32 %v1124, %v1590
    %v1592 = vpop.f32.mrb[0].mxu0
    %v1593 = vadd.f32 %v1128, %v1592
    %1594 = vdwg.mxu0
    %v1595 = vadd.f32 %v1077, %v1591
    %v1596 = vxor.u32 %v1595, 2147483648
    %v1597 = vmul.f32 %v1596, 1.442695
    %v1598 = vpow.pop %v1597
    %v1599 = vadd.f32 %v1598, 1.0
    %v1600 = vrcp.pop %v1599
    %v1601 = vmul.f32 1.0, %v1600
    %v1602 = vmul.f32 %v1601, %v1593
    %v1603 = vadd.f32 %v1079, %v1602
    %v1604 = vtanh.pop %v1603
    %v1605 = vsub.f32 1.0, %v1601
    %1607 = vrot.lane.b32.xlu0 %v1604, 64
    %v1608 = vpop.permute.xlu0 %1607
    %v1610 = vmul.f32 %v1605, %v1608
    %v1611 = vmul.f32 %v1601, %v1515
    %v1612 = vadd.f32 %v1610, %v1611
    %1614 = vrot.lane.b32.xlu0 %v1612, 64
    %v1615 = vpop.permute.xlu0 %1614
    %1617 = vst.msk [vmem:[#allocation2 + $0x20] sm:$0xff] %vm1227, %v1615
    %1618 = vst.msk [vmem:[#allocation2 + $0x18] sm:$0xff] %vm1229, %v1615
    %v1619 = vsel %vm87, %v1615, 0
    %1621 = vmatprep.subr.mxu0 %v1103
    %1622 = vmatpush1.msra.mxu0 %v1102
    %1623 = vmatprep.subr.mxu0 %v1105
    %1624 = vmatpush1.msra.mxu0 %v1104
    %1625 = vmatprep.subr.mxu0 %v1107
    %1626 = vmatpush1.msra.mxu0 %v1106
    %1627 = vmatprep.subr.mxu0 %v1109
    %1628 = vmatpush1.msra.mxu0 %v1108
    %1629 = vmatprep.subr.mxu0 %v1111
    %1630 = vmatpush1.msra.mxu0 %v1110
    %1631 = vmatprep.subr.mxu0 %v1113
    %1632 = vmatpush1.msra.mxu0 %v1112
    %1633 = vmatprep.subr.mxu0 %v1115
    %1634 = vmatpush1.msra.mxu0 %v1114
    %1635 = vmatprep.subr.mxu0 %v1117
    %1636 = vmatpush1.msra.mxu0 %v1116
    %1637 = vmatprep.subr.mxu0 0.0
    %1638 = vmatpush1.msra.mxu0 0.0
    %1639 = vmatprep.subr.mxu0 0.0
    %1640 = vmatpush1.msra.mxu0 0.0
    %1641 = vmatprep.subr.mxu0 0.0
    %1642 = vmatpush1.msra.mxu0 0.0
    %1643 = vmatprep.subr.mxu0 0.0
    %1644 = vmatpush1.msra.mxu0 0.0
    %1645 = vmatprep.subr.mxu0 0.0
    %1646 = vmatpush1.msra.mxu0 0.0
    %1647 = vmatprep.subr.mxu0 0.0
    %1648 = vmatpush1.msra.mxu0 0.0
    %1649 = vmatprep.subr.mxu0 0.0
    %1650 = vmatpush1.msra.mxu0 0.0
    %1651 = vmatprep.subr.mxu0 0.0
    %1652 = vmatpush1.msra.mxu0 0.0
    %1653 = vmatprep.subr.mxu0 0.0
    %1654 = vmatpush1.msra.mxu0 0.0
    %1655 = vmatprep.subr.mxu0 0.0
    %1656 = vmatpush1.msra.mxu0 0.0
    %1657 = vmatprep.subr.mxu0 0.0
    %1658 = vmatpush1.msra.mxu0 0.0
    %1659 = vmatprep.subr.mxu0 0.0
    %1660 = vmatpush1.msra.mxu0 0.0
    %1661 = vmatprep.subr.mxu0 0.0
    %1662 = vmatpush1.msra.mxu0 0.0
    %1663 = vmatprep.subr.mxu0 0.0
    %1664 = vmatpush1.msra.mxu0 0.0
    %1665 = vmatprep.subr.mxu0 0.0
    %1666 = vmatpush1.msra.mxu0 0.0
    %1667 = vmatprep.subr.mxu0 0.0
    %1668 = vmatpush1.msra.mxu0 0.0
    %1669 = vmatprep.subr.mxu0 0.0
    %1670 = vmatpush1.msra.mxu0 0.0
    %1671 = vmatprep.subr.mxu0 0.0
    %1672 = vmatpush1.msra.mxu0 0.0
    %1673 = vmatprep.subr.mxu0 0.0
    %1674 = vmatpush1.msra.mxu0 0.0
    %1675 = vmatprep.subr.mxu0 0.0
    %1676 = vmatpush1.msra.mxu0 0.0
    %1677 = vmatprep.subr.mxu0 0.0
    %1678 = vmatpush1.msra.mxu0 0.0
    %1679 = vmatprep.subr.mxu0 0.0
    %1680 = vmatpush1.msra.mxu0 0.0
    %1681 = vmatprep.subr.mxu0 0.0
    %1682 = vmatpush1.msra.mxu0 0.0
    %1683 = vmatprep.subr.mxu0 0.0
    %1684 = vmatpush1.msra.mxu0 0.0
    %1685 = vmatprep.mubr.f32.mxu0 0.0
    %1686 = vmatmul.mubr.f32.gmra.mrb[0].mxu0 %v1619
    %v1687 = vpop.f32.mrb[0].mxu0
    %v1688 = vadd.f32 %v1124, %v1687
    %v1689 = vpop.f32.mrb[0].mxu0
    %v1690 = vadd.f32 %v1128, %v1689
    %1691 = vdwg.mxu0
    %v1692 = vadd.f32 %v1084, %v1688
    %v1693 = vxor.u32 %v1692, 2147483648
    %v1694 = vmul.f32 %v1693, 1.442695
    %v1695 = vpow.pop %v1694
    %v1696 = vadd.f32 %v1695, 1.0
    %v1697 = vrcp.pop %v1696
    %v1698 = vmul.f32 1.0, %v1697
    %v1699 = vmul.f32 %v1698, %v1690
    %v1700 = vadd.f32 %v1086, %v1699
    %v1701 = vtanh.pop %v1700
    %v1702 = vsub.f32 1.0, %v1698
    %1704 = vrot.lane.b32.xlu0 %v1701, 64
    %v1705 = vpop.permute.xlu0 %1704
    %v1707 = vmul.f32 %v1702, %v1705
    %v1708 = vmul.f32 %v1698, %v1612
    %v1709 = vadd.f32 %v1707, %v1708
    %1711 = vrot.lane.b32.xlu0 %v1709, 64
    %v1712 = vpop.permute.xlu0 %1711
    %1714 = vst.msk [vmem:[#allocation2 + $0x28] sm:$0xff] %vm1227, %v1712
    %1715 = vst.msk [vmem:[#allocation2 + $0x10] sm:$0xff] %vm1229, %v1712
    %v1716 = vsel %vm87, %v1712, 0
    %1718 = vmatprep.subr.mxu0 %v1103
    %1719 = vmatpush1.msra.mxu0 %v1102
    %1720 = vmatprep.subr.mxu0 %v1105
    %1721 = vmatpush1.msra.mxu0 %v1104
    %1722 = vmatprep.subr.mxu0 %v1107
    %1723 = vmatpush1.msra.mxu0 %v1106
    %1724 = vmatprep.subr.mxu0 %v1109
    %1725 = vmatpush1.msra.mxu0 %v1108
    %1726 = vmatprep.subr.mxu0 %v1111
    %1727 = vmatpush1.msra.mxu0 %v1110
    %1728 = vmatprep.subr.mxu0 %v1113
    %1729 = vmatpush1.msra.mxu0 %v1112
    %1730 = vmatprep.subr.mxu0 %v1115
    %1731 = vmatpush1.msra.mxu0 %v1114
    %1732 = vmatprep.subr.mxu0 %v1117
    %1733 = vmatpush1.msra.mxu0 %v1116
    %1734 = vmatprep.subr.mxu0 0.0
    %1735 = vmatpush1.msra.mxu0 0.0
    %1736 = vmatprep.subr.mxu0 0.0
    %1737 = vmatpush1.msra.mxu0 0.0
    %1738 = vmatprep.subr.mxu0 0.0
    %1739 = vmatpush1.msra.mxu0 0.0
    %1740 = vmatprep.subr.mxu0 0.0
    %1741 = vmatpush1.msra.mxu0 0.0
    %1742 = vmatprep.subr.mxu0 0.0
    %1743 = vmatpush1.msra.mxu0 0.0
    %1744 = vmatprep.subr.mxu0 0.0
    %1745 = vmatpush1.msra.mxu0 0.0
    %1746 = vmatprep.subr.mxu0 0.0
    %1747 = vmatpush1.msra.mxu0 0.0
    %1748 = vmatprep.subr.mxu0 0.0
    %1749 = vmatpush1.msra.mxu0 0.0
    %1750 = vmatprep.subr.mxu0 0.0
    %1751 = vmatpush1.msra.mxu0 0.0
    %1752 = vmatprep.subr.mxu0 0.0
    %1753 = vmatpush1.msra.mxu0 0.0
    %1754 = vmatprep.subr.mxu0 0.0
    %1755 = vmatpush1.msra.mxu0 0.0
    %1756 = vmatprep.subr.mxu0 0.0
    %1757 = vmatpush1.msra.mxu0 0.0
    %1758 = vmatprep.subr.mxu0 0.0
    %1759 = vmatpush1.msra.mxu0 0.0
    %1760 = vmatprep.subr.mxu0 0.0
    %1761 = vmatpush1.msra.mxu0 0.0
    %1762 = vmatprep.subr.mxu0 0.0
    %1763 = vmatpush1.msra.mxu0 0.0
    %1764 = vmatprep.subr.mxu0 0.0
    %1765 = vmatpush1.msra.mxu0 0.0
    %1766 = vmatprep.subr.mxu0 0.0
    %1767 = vmatpush1.msra.mxu0 0.0
    %1768 = vmatprep.subr.mxu0 0.0
    %1769 = vmatpush1.msra.mxu0 0.0
    %1770 = vmatprep.subr.mxu0 0.0
    %1771 = vmatpush1.msra.mxu0 0.0
    %1772 = vmatprep.subr.mxu0 0.0
    %1773 = vmatpush1.msra.mxu0 0.0
    %1774 = vmatprep.subr.mxu0 0.0
    %1775 = vmatpush1.msra.mxu0 0.0
    %1776 = vmatprep.subr.mxu0 0.0
    %1777 = vmatpush1.msra.mxu0 0.0
    %1778 = vmatprep.subr.mxu0 0.0
    %1779 = vmatpush1.msra.mxu0 0.0
    %1780 = vmatprep.subr.mxu0 0.0
    %1781 = vmatpush1.msra.mxu0 0.0
    %1782 = vmatprep.mubr.f32.mxu0 0.0
    %1783 = vmatmul.mubr.f32.gmra.mrb[0].mxu0 %v1716
    %v1784 = vpop.f32.mrb[0].mxu0
    %v1785 = vadd.f32 %v1124, %v1784
    %v1786 = vpop.f32.mrb[0].mxu0
    %v1787 = vadd.f32 %v1128, %v1786
    %1788 = vdwg.mxu0
    %v1789 = vadd.f32 %v1091, %v1785
    %v1790 = vxor.u32 %v1789, 2147483648
    %v1791 = vmul.f32 %v1790, 1.442695
    %v1792 = vpow.pop %v1791
    %v1793 = vadd.f32 %v1792, 1.0
    %v1794 = vrcp.pop %v1793
    %v1795 = vmul.f32 1.0, %v1794
    %v1796 = vmul.f32 %v1795, %v1787
    %v1797 = vadd.f32 %v1093, %v1796
    %v1798 = vtanh.pop %v1797
    %v1799 = vsub.f32 1.0, %v1795
    %1801 = vrot.lane.b32.xlu0 %v1798, 64
    %v1802 = vpop.permute.xlu0 %1801
    %v1804 = vmul.f32 %v1799, %v1802
    %v1805 = vmul.f32 %v1795, %v1709
    %v1806 = vadd.f32 %v1804, %v1805
    %1808 = vrot.lane.b32.xlu0 %v1806, 64
    %v1809 = vpop.permute.xlu0 %1808
    %1811 = vst.msk [vmem:[#allocation2 + $0x30] sm:$0xff] %vm1227, %v1809
    %1812 = vst.msk [vmem:[#allocation2 + $0x8] sm:$0xff] %vm1229, %v1809
    %v1813 = vsel %vm87, %v1809, 0
    %1815 = vmatprep.subr.mxu0 %v1103
    %1816 = vmatpush1.msra.mxu0 %v1102
    %1817 = vmatprep.subr.mxu0 %v1105
    %1818 = vmatpush1.msra.mxu0 %v1104
    %1819 = vmatprep.subr.mxu0 %v1107
    %1820 = vmatpush1.msra.mxu0 %v1106
    %1821 = vmatprep.subr.mxu0 %v1109
    %1822 = vmatpush1.msra.mxu0 %v1108
    %1823 = vmatprep.subr.mxu0 %v1111
    %1824 = vmatpush1.msra.mxu0 %v1110
    %1825 = vmatprep.subr.mxu0 %v1113
    %1826 = vmatpush1.msra.mxu0 %v1112
    %1827 = vmatprep.subr.mxu0 %v1115
    %1828 = vmatpush1.msra.mxu0 %v1114
    %1829 = vmatprep.subr.mxu0 %v1117
    %1830 = vmatpush1.msra.mxu0 %v1116
    %1831 = vmatprep.subr.mxu0 0.0
    %1832 = vmatpush1.msra.mxu0 0.0
    %1833 = vmatprep.subr.mxu0 0.0
    %1834 = vmatpush1.msra.mxu0 0.0
    %1835 = vmatprep.subr.mxu0 0.0
    %1836 = vmatpush1.msra.mxu0 0.0
    %1837 = vmatprep.subr.mxu0 0.0
    %1838 = vmatpush1.msra.mxu0 0.0
    %1839 = vmatprep.subr.mxu0 0.0
    %1840 = vmatpush1.msra.mxu0 0.0
    %1841 = vmatprep.subr.mxu0 0.0
    %1842 = vmatpush1.msra.mxu0 0.0
    %1843 = vmatprep.subr.mxu0 0.0
    %1844 = vmatpush1.msra.mxu0 0.0
    %1845 = vmatprep.subr.mxu0 0.0
    %1846 = vmatpush1.msra.mxu0 0.0
    %1847 = vmatprep.subr.mxu0 0.0
    %1848 = vmatpush1.msra.mxu0 0.0
    %1849 = vmatprep.subr.mxu0 0.0
    %1850 = vmatpush1.msra.mxu0 0.0
    %1851 = vmatprep.subr.mxu0 0.0
    %1852 = vmatpush1.msra.mxu0 0.0
    %1853 = vmatprep.subr.mxu0 0.0
    %1854 = vmatpush1.msra.mxu0 0.0
    %1855 = vmatprep.subr.mxu0 0.0
    %1856 = vmatpush1.msra.mxu0 0.0
    %1857 = vmatprep.subr.mxu0 0.0
    %1858 = vmatpush1.msra.mxu0 0.0
    %1859 = vmatprep.subr.mxu0 0.0
    %1860 = vmatpush1.msra.mxu0 0.0
    %1861 = vmatprep.subr.mxu0 0.0
    %1862 = vmatpush1.msra.mxu0 0.0
    %1863 = vmatprep.subr.mxu0 0.0
    %1864 = vmatpush1.msra.mxu0 0.0
    %1865 = vmatprep.subr.mxu0 0.0
    %1866 = vmatpush1.msra.mxu0 0.0
    %1867 = vmatprep.subr.mxu0 0.0
    %1868 = vmatpush1.msra.mxu0 0.0
    %1869 = vmatprep.subr.mxu0 0.0
    %1870 = vmatpush1.msra.mxu0 0.0
    %1871 = vmatprep.subr.mxu0 0.0
    %1872 = vmatpush1.msra.mxu0 0.0
    %1873 = vmatprep.subr.mxu0 0.0
    %1874 = vmatpush1.msra.mxu0 0.0
    %1875 = vmatprep.subr.mxu0 0.0
    %1876 = vmatpush1.msra.mxu0 0.0
    %1877 = vmatprep.subr.mxu0 0.0
    %1878 = vmatpush1.msra.mxu0 0.0
    %1879 = vmatprep.mubr.f32.mxu0 0.0
    %1880 = vmatmul.mubr.f32.gmra.mrb[0].mxu0 %v1813
    %v1881 = vpop.f32.mrb[0].mxu0
    %v1882 = vadd.f32 %v1124, %v1881
    %v1883 = vpop.f32.mrb[0].mxu0
    %v1884 = vadd.f32 %v1128, %v1883
    %1885 = vdwg.mxu0
    %v1886 = vadd.f32 %v1098, %v1882
    %v1887 = vxor.u32 %v1886, 2147483648
    %v1888 = vmul.f32 %v1887, 1.442695
    %v1889 = vpow.pop %v1888
    %v1890 = vadd.f32 %v1889, 1.0
    %v1891 = vrcp.pop %v1890
    %v1892 = vmul.f32 1.0, %v1891
    %v1893 = vmul.f32 %v1892, %v1884
    %v1894 = vadd.f32 %v1100, %v1893
    %v1895 = vtanh.pop %v1894
    %v1896 = vsub.f32 1.0, %v1892
    %1898 = vrot.lane.b32.xlu0 %v1895, 64
    %v1899 = vpop.permute.xlu0 %1898
    %v1901 = vmul.f32 %v1896, %v1899
    %v1902 = vmul.f32 %v1892, %v1806
    %v1903 = vadd.f32 %v1901, %v1902
    %1905 = vrot.lane.b32.xlu0 %v1903, 64
    %v1906 = vpop.permute.xlu0 %1905
    %1908 = vst.msk [vmem:[#allocation2 + $0x38] sm:$0xff] %vm1227, %v1906
    %1909 = vst.msk [vmem:[#allocation2] sm:$0xff] %vm1229, %v1906
    %v1910 = vld [vmem:[#allocation2] sm:$0xff]
    %v1911 = vld [vmem:[#allocation2 + $0x8] sm:$0xff]
    %v1912 = vld [vmem:[#allocation2 + $0x10] sm:$0xff]
    %v1913 = vld [vmem:[#allocation2 + $0x18] sm:$0xff]
    %v1914 = vld [vmem:[#allocation2 + $0x20] sm:$0xff]
    %v1915 = vld [vmem:[#allocation2 + $0x28] sm:$0xff]
    %v1916 = vld [vmem:[#allocation2 + $0x30] sm:$0xff]
    %v1917 = vld [vmem:[#allocation2 + $0x38] sm:$0xff]
    %v1918 = vld [vmem:[%s4] sm:$0xff]
    %v1919 = vld [vmem:[%s4 + $0x8] sm:$0xff]
    %v1920 = vld [vmem:[%s4 + $0x10] sm:$0xff]
    %v1921 = vld [vmem:[%s4 + $0x18] sm:$0xff]
    %v1922 = vld [vmem:[%s4 + $0x20] sm:$0xff]
    %v1923 = vld [vmem:[%s4 + $0x28] sm:$0xff]
    %v1924 = vld [vmem:[%s4 + $0x30] sm:$0xff]
    %v1925 = vld [vmem:[%s4 + $0x38] sm:$0xff]
    %v1926 = vld [vmem:[%s5] sm:$0x1]
    %v1928 = vlaneseq
    %v1929 = vshrl.u32 %v1928, 7
    %v1930 = vsub.s32 0, %v1929
    %v1931 = vrot.slane %v1926, %v1930
    %v1934 = vsel %vm87, %v1910, 0
    %v1937 = vsel %vm87, %v1911, 0
    %v1940 = vsel %vm87, %v1912, 0
    %v1943 = vsel %vm87, %v1913, 0
    %v1946 = vsel %vm87, %v1914, 0
    %v1949 = vsel %vm87, %v1915, 0
    %v1952 = vsel %vm87, %v1916, 0
    %v1955 = vsel %vm87, %v1917, 0
    %1957 = vmatprep.subr.mxu0 0.0
    %v1958 = vand.u32 %v1918, 4294901760
    %1959 = vmatpush1.msra.mxu0 %v1958
    %1960 = vmatprep.subr.mxu0 0.0
    %v1961 = vand.u32 %v1919, 4294901760
    %1962 = vmatpush1.msra.mxu0 %v1961
    %1963 = vmatprep.subr.mxu0 0.0
    %v1964 = vand.u32 %v1920, 4294901760
    %1965 = vmatpush1.msra.mxu0 %v1964
    %1966 = vmatprep.subr.mxu0 0.0
    %v1967 = vand.u32 %v1921, 4294901760
    %1968 = vmatpush1.msra.mxu0 %v1967
    %1969 = vmatprep.subr.mxu0 0.0
    %v1970 = vand.u32 %v1922, 4294901760
    %1971 = vmatpush1.msra.mxu0 %v1970
    %1972 = vmatprep.subr.mxu0 0.0
    %v1973 = vand.u32 %v1923, 4294901760
    %1974 = vmatpush1.msra.mxu0 %v1973
    %1975 = vmatprep.subr.mxu0 0.0
    %v1976 = vand.u32 %v1924, 4294901760
    %1977 = vmatpush1.msra.mxu0 %v1976
    %1978 = vmatprep.subr.mxu0 0.0
    %v1979 = vand.u32 %v1925, 4294901760
    %1980 = vmatpush1.msra.mxu0 %v1979
    %1981 = vmatprep.subr.mxu0 0.0
    %1982 = vmatpush1.msra.mxu0 0.0
    %1983 = vmatprep.subr.mxu0 0.0
    %1984 = vmatpush1.msra.mxu0 0.0
    %1985 = vmatprep.subr.mxu0 0.0
    %1986 = vmatpush1.msra.mxu0 0.0
    %1987 = vmatprep.subr.mxu0 0.0
    %1988 = vmatpush1.msra.mxu0 0.0
    %1989 = vmatprep.subr.mxu0 0.0
    %1990 = vmatpush1.msra.mxu0 0.0
    %1991 = vmatprep.subr.mxu0 0.0
    %1992 = vmatpush1.msra.mxu0 0.0
    %1993 = vmatprep.subr.mxu0 0.0
    %1994 = vmatpush1.msra.mxu0 0.0
    %1995 = vmatprep.subr.mxu0 0.0
    %1996 = vmatpush1.msra.mxu0 0.0
    %1997 = vmatprep.subr.mxu0 0.0
    %1998 = vmatpush1.msra.mxu0 0.0
    %1999 = vmatprep.subr.mxu0 0.0
    %2000 = vmatpush1.msra.mxu0 0.0
    %2001 = vmatprep.subr.mxu0 0.0
    %2002 = vmatpush1.msra.mxu0 0.0
    %2003 = vmatprep.subr.mxu0 0.0
    %2004 = vmatpush1.msra.mxu0 0.0
    %2005 = vmatprep.subr.mxu0 0.0
    %2006 = vmatpush1.msra.mxu0 0.0
    %2007 = vmatprep.subr.mxu0 0.0
    %2008 = vmatpush1.msra.mxu0 0.0
    %2009 = vmatprep.subr.mxu0 0.0
    %2010 = vmatpush1.msra.mxu0 0.0
    %2011 = vmatprep.subr.mxu0 0.0
    %2012 = vmatpush1.msra.mxu0 0.0
    %2013 = vmatprep.subr.mxu0 0.0
    %2014 = vmatpush1.msra.mxu0 0.0
    %2015 = vmatprep.subr.mxu0 0.0
    %2016 = vmatpush1.msra.mxu0 0.0
    %2017 = vmatprep.subr.mxu0 0.0
    %2018 = vmatpush1.msra.mxu0 0.0
    %2019 = vmatprep.subr.mxu0 0.0
    %2020 = vmatpush1.msra.mxu0 0.0
    %2021 = vmatprep.subr.mxu0 0.0
    %2022 = vmatpush1.msra.mxu0 0.0
    %2023 = vmatprep.subr.mxu0 0.0
    %2024 = vmatpush1.msra.mxu0 0.0
    %2025 = vmatprep.subr.mxu0 0.0
    %2026 = vmatpush1.msra.mxu0 0.0
    %2027 = vmatprep.subr.mxu0 0.0
    %2028 = vmatpush1.msra.mxu0 0.0
    %2029 = vmatprep.mubr.f32.mxu0 0.0
    %v2030 = vand.u32 %v1934, 4294901760
    %v2031 = vsub.f32 %v1934, %v2030
    %v2032 = vand.u32 %v2031, 4294901760
    %v2033 = vsub.f32 %v2031, %v2032
    %v2034 = vand.u32 %v2033, 4294901760
    %2035 = vmatmul.mubr.f32.gmra.mrb[0].mxu0 %v2034
    %v2036 = vpop.f32.mrb[0].mxu0
    %v2037 = vadd.f32 %v1931, %v2036
    %v2038 = vpop.f32.mrb[0].mxu0
    %2039 = vmatprep.mubr.f32.mxu0 0.0
    %v2040 = vand.u32 %v1937, 4294901760
    %v2041 = vsub.f32 %v1937, %v2040
    %v2042 = vand.u32 %v2041, 4294901760
    %v2043 = vsub.f32 %v2041, %v2042
    %v2044 = vand.u32 %v2043, 4294901760
    %2045 = vmatmul.mubr.f32.gmra.mrb[0].mxu0 %v2044
    %v2046 = vpop.f32.mrb[0].mxu0
    %v2047 = vadd.f32 %v1931, %v2046
    %v2048 = vpop.f32.mrb[0].mxu0
    %2049 = vmatprep.mubr.f32.mxu0 0.0
    %v2050 = vand.u32 %v1940, 4294901760
    %v2051 = vsub.f32 %v1940, %v2050
    %v2052 = vand.u32 %v2051, 4294901760
    %v2053 = vsub.f32 %v2051, %v2052
    %v2054 = vand.u32 %v2053, 4294901760
    %2055 = vmatmul.mubr.f32.gmra.mrb[0].mxu0 %v2054
    %v2056 = vpop.f32.mrb[0].mxu0
    %v2057 = vadd.f32 %v1931, %v2056
    %v2058 = vpop.f32.mrb[0].mxu0
    %2059 = vmatprep.mubr.f32.mxu0 0.0
    %v2060 = vand.u32 %v1943, 4294901760
    %v2061 = vsub.f32 %v1943, %v2060
    %v2062 = vand.u32 %v2061, 4294901760
    %v2063 = vsub.f32 %v2061, %v2062
    %v2064 = vand.u32 %v2063, 4294901760
    %2065 = vmatmul.mubr.f32.gmra.mrb[0].mxu0 %v2064
    %v2066 = vpop.f32.mrb[0].mxu0
    %v2067 = vadd.f32 %v1931, %v2066
    %v2068 = vpop.f32.mrb[0].mxu0
    %2069 = vmatprep.mubr.f32.mxu0 0.0
    %v2070 = vand.u32 %v1946, 4294901760
    %v2071 = vsub.f32 %v1946, %v2070
    %v2072 = vand.u32 %v2071, 4294901760
    %v2073 = vsub.f32 %v2071, %v2072
    %v2074 = vand.u32 %v2073, 4294901760
    %2075 = vmatmul.mubr.f32.gmra.mrb[0].mxu0 %v2074
    %v2076 = vpop.f32.mrb[0].mxu0
    %v2077 = vadd.f32 %v1931, %v2076
    %v2078 = vpop.f32.mrb[0].mxu0
    %2079 = vmatprep.mubr.f32.mxu0 0.0
    %v2080 = vand.u32 %v1949, 4294901760
    %v2081 = vsub.f32 %v1949, %v2080
    %v2082 = vand.u32 %v2081, 4294901760
    %v2083 = vsub.f32 %v2081, %v2082
    %v2084 = vand.u32 %v2083, 4294901760
    %2085 = vmatmul.mubr.f32.gmra.mrb[0].mxu0 %v2084
    %v2086 = vpop.f32.mrb[0].mxu0
    %v2087 = vadd.f32 %v1931, %v2086
    %v2088 = vpop.f32.mrb[0].mxu0
    %2089 = vmatprep.mubr.f32.mxu0 0.0
    %v2090 = vand.u32 %v1952, 4294901760
    %v2091 = vsub.f32 %v1952, %v2090
    %v2092 = vand.u32 %v2091, 4294901760
    %v2093 = vsub.f32 %v2091, %v2092
    %v2094 = vand.u32 %v2093, 4294901760
    %2095 = vmatmul.mubr.f32.gmra.mrb[0].mxu0 %v2094
    %v2096 = vpop.f32.mrb[0].mxu0
    %v2097 = vadd.f32 %v1931, %v2096
    %v2098 = vpop.f32.mrb[0].mxu0
    %2099 = vmatprep.mubr.f32.mxu0 0.0
    %v2100 = vand.u32 %v1955, 4294901760
    %v2101 = vsub.f32 %v1955, %v2100
    %v2102 = vand.u32 %v2101, 4294901760
    %v2103 = vsub.f32 %v2101, %v2102
    %v2104 = vand.u32 %v2103, 4294901760
    %2105 = vmatmul.mubr.f32.gmra.mrb[0].mxu0 %v2104
    %v2106 = vpop.f32.mrb[0].mxu0
    %v2107 = vadd.f32 %v1931, %v2106
    %v2108 = vpop.f32.mrb[0].mxu0
    %2109 = vdwg.mxu0
    %2110 = vmatprep.subr.mxu0 0.0
    %v2111 = vand.u32 %v1918, 4294901760
    %v2112 = vsub.f32 %v1918, %v2111
    %v2113 = vand.u32 %v2112, 4294901760
    %v2114 = vsub.f32 %v2112, %v2113
    %v2115 = vand.u32 %v2114, 4294901760
    %2116 = vmatpush1.msra.mxu0 %v2115
    %2117 = vmatprep.subr.mxu0 0.0
    %v2118 = vand.u32 %v1919, 4294901760
    %v2119 = vsub.f32 %v1919, %v2118
    %v2120 = vand.u32 %v2119, 4294901760
    %v2121 = vsub.f32 %v2119, %v2120
    %v2122 = vand.u32 %v2121, 4294901760
    %2123 = vmatpush1.msra.mxu0 %v2122
    %2124 = vmatprep.subr.mxu0 0.0
    %v2125 = vand.u32 %v1920, 4294901760
    %v2126 = vsub.f32 %v1920, %v2125
    %v2127 = vand.u32 %v2126, 4294901760
    %v2128 = vsub.f32 %v2126, %v2127
    %v2129 = vand.u32 %v2128, 4294901760
    %2130 = vmatpush1.msra.mxu0 %v2129
    %2131 = vmatprep.subr.mxu0 0.0
    %v2132 = vand.u32 %v1921, 4294901760
    %v2133 = vsub.f32 %v1921, %v2132
    %v2134 = vand.u32 %v2133, 4294901760
    %v2135 = vsub.f32 %v2133, %v2134
    %v2136 = vand.u32 %v2135, 4294901760
    %2137 = vmatpush1.msra.mxu0 %v2136
    %2138 = vmatprep.subr.mxu0 0.0
    %v2139 = vand.u32 %v1922, 4294901760
    %v2140 = vsub.f32 %v1922, %v2139
    %v2141 = vand.u32 %v2140, 4294901760
    %v2142 = vsub.f32 %v2140, %v2141
    %v2143 = vand.u32 %v2142, 4294901760
    %2144 = vmatpush1.msra.mxu0 %v2143
    %2145 = vmatprep.subr.mxu0 0.0
    %v2146 = vand.u32 %v1923, 4294901760
    %v2147 = vsub.f32 %v1923, %v2146
    %v2148 = vand.u32 %v2147, 4294901760
    %v2149 = vsub.f32 %v2147, %v2148
    %v2150 = vand.u32 %v2149, 4294901760
    %2151 = vmatpush1.msra.mxu0 %v2150
    %2152 = vmatprep.subr.mxu0 0.0
    %v2153 = vand.u32 %v1924, 4294901760
    %v2154 = vsub.f32 %v1924, %v2153
    %v2155 = vand.u32 %v2154, 4294901760
    %v2156 = vsub.f32 %v2154, %v2155
    %v2157 = vand.u32 %v2156, 4294901760
    %2158 = vmatpush1.msra.mxu0 %v2157
    %2159 = vmatprep.subr.mxu0 0.0
    %v2160 = vand.u32 %v1925, 4294901760
    %v2161 = vsub.f32 %v1925, %v2160
    %v2162 = vand.u32 %v2161, 4294901760
    %v2163 = vsub.f32 %v2161, %v2162
    %v2164 = vand.u32 %v2163, 4294901760
    %2165 = vmatpush1.msra.mxu0 %v2164
    %2166 = vmatprep.subr.mxu0 0.0
    %2167 = vmatpush1.msra.mxu0 0.0
    %2168 = vmatprep.subr.mxu0 0.0
    %2169 = vmatpush1.msra.mxu0 0.0
    %2170 = vmatprep.subr.mxu0 0.0
    %2171 = vmatpush1.msra.mxu0 0.0
    %2172 = vmatprep.subr.mxu0 0.0
    %2173 = vmatpush1.msra.mxu0 0.0
    %2174 = vmatprep.subr.mxu0 0.0
    %2175 = vmatpush1.msra.mxu0 0.0
    %2176 = vmatprep.subr.mxu0 0.0
    %2177 = vmatpush1.msra.mxu0 0.0
    %2178 = vmatprep.subr.mxu0 0.0
    %2179 = vmatpush1.msra.mxu0 0.0
    %2180 = vmatprep.subr.mxu0 0.0
    %2181 = vmatpush1.msra.mxu0 0.0
    %2182 = vmatprep.subr.mxu0 0.0
    %2183 = vmatpush1.msra.mxu0 0.0
    %2184 = vmatprep.subr.mxu0 0.0
    %2185 = vmatpush1.msra.mxu0 0.0
    %2186 = vmatprep.subr.mxu0 0.0
    %2187 = vmatpush1.msra.mxu0 0.0
    %2188 = vmatprep.subr.mxu0 0.0
    %2189 = vmatpush1.msra.mxu0 0.0
    %2190 = vmatprep.subr.mxu0 0.0
    %2191 = vmatpush1.msra.mxu0 0.0
    %2192 = vmatprep.subr.mxu0 0.0
    %2193 = vmatpush1.msra.mxu0 0.0
    %2194 = vmatprep.subr.mxu0 0.0
    %2195 = vmatpush1.msra.mxu0 0.0
    %2196 = vmatprep.subr.mxu0 0.0
    %2197 = vmatpush1.msra.mxu0 0.0
    %2198 = vmatprep.subr.mxu0 0.0
    %2199 = vmatpush1.msra.mxu0 0.0
    %2200 = vmatprep.subr.mxu0 0.0
    %2201 = vmatpush1.msra.mxu0 0.0
    %2202 = vmatprep.subr.mxu0 0.0
    %2203 = vmatpush1.msra.mxu0 0.0
    %2204 = vmatprep.subr.mxu0 0.0
    %2205 = vmatpush1.msra.mxu0 0.0
    %2206 = vmatprep.subr.mxu0 0.0
    %2207 = vmatpush1.msra.mxu0 0.0
    %2208 = vmatprep.subr.mxu0 0.0
    %2209 = vmatpush1.msra.mxu0 0.0
    %2210 = vmatprep.subr.mxu0 0.0
    %2211 = vmatpush1.msra.mxu0 0.0
    %2212 = vmatprep.subr.mxu0 0.0
    %2213 = vmatpush1.msra.mxu0 0.0
    %2214 = vmatprep.mubr.f32.mxu0 0.0
    %v2215 = vand.u32 %v1934, 4294901760
    %2216 = vmatmul.mubr.f32.gmra.mrb[0].mxu0 %v2215
    %v2217 = vpop.f32.mrb[0].mxu0
    %v2218 = vadd.f32 %v2037, %v2217
    %v2219 = vpop.f32.mrb[0].mxu0
    %2220 = vmatprep.mubr.f32.mxu0 0.0
    %v2221 = vand.u32 %v1937, 4294901760
    %2222 = vmatmul.mubr.f32.gmra.mrb[0].mxu0 %v2221
    %v2223 = vpop.f32.mrb[0].mxu0
    %v2224 = vadd.f32 %v2047, %v2223
    %v2225 = vpop.f32.mrb[0].mxu0
    %2226 = vmatprep.mubr.f32.mxu0 0.0
    %v2227 = vand.u32 %v1940, 4294901760
    %2228 = vmatmul.mubr.f32.gmra.mrb[0].mxu0 %v2227
    %v2229 = vpop.f32.mrb[0].mxu0
    %v2230 = vadd.f32 %v2057, %v2229
    %v2231 = vpop.f32.mrb[0].mxu0
    %2232 = vmatprep.mubr.f32.mxu0 0.0
    %v2233 = vand.u32 %v1943, 4294901760
    %2234 = vmatmul.mubr.f32.gmra.mrb[0].mxu0 %v2233
    %v2235 = vpop.f32.mrb[0].mxu0
    %v2236 = vadd.f32 %v2067, %v2235
    %v2237 = vpop.f32.mrb[0].mxu0
    %2238 = vmatprep.mubr.f32.mxu0 0.0
    %v2239 = vand.u32 %v1946, 4294901760
    %2240 = vmatmul.mubr.f32.gmra.mrb[0].mxu0 %v2239
    %v2241 = vpop.f32.mrb[0].mxu0
    %v2242 = vadd.f32 %v2077, %v2241
    %v2243 = vpop.f32.mrb[0].mxu0
    %2244 = vmatprep.mubr.f32.mxu0 0.0
    %v2245 = vand.u32 %v1949, 4294901760
    %2246 = vmatmul.mubr.f32.gmra.mrb[0].mxu0 %v2245
    %v2247 = vpop.f32.mrb[0].mxu0
    %v2248 = vadd.f32 %v2087, %v2247
    %v2249 = vpop.f32.mrb[0].mxu0
    %2250 = vmatprep.mubr.f32.mxu0 0.0
    %v2251 = vand.u32 %v1952, 4294901760
    %2252 = vmatmul.mubr.f32.gmra.mrb[0].mxu0 %v2251
    %v2253 = vpop.f32.mrb[0].mxu0
    %v2254 = vadd.f32 %v2097, %v2253
    %v2255 = vpop.f32.mrb[0].mxu0
    %2256 = vmatprep.mubr.f32.mxu0 0.0
    %v2257 = vand.u32 %v1955, 4294901760
    %2258 = vmatmul.mubr.f32.gmra.mrb[0].mxu0 %v2257
    %v2259 = vpop.f32.mrb[0].mxu0
    %v2260 = vadd.f32 %v2107, %v2259
    %v2261 = vpop.f32.mrb[0].mxu0
    %2262 = vdwg.mxu0
    %2263 = vmatprep.subr.mxu0 0.0
    %v2264 = vand.u32 %v1918, 4294901760
    %v2265 = vsub.f32 %v1918, %v2264
    %2266 = vmatpush1.msra.mxu0 %v2265
    %2267 = vmatprep.subr.mxu0 0.0
    %v2268 = vand.u32 %v1919, 4294901760
    %v2269 = vsub.f32 %v1919, %v2268
    %2270 = vmatpush1.msra.mxu0 %v2269
    %2271 = vmatprep.subr.mxu0 0.0
    %v2272 = vand.u32 %v1920, 4294901760
    %v2273 = vsub.f32 %v1920, %v2272
    %2274 = vmatpush1.msra.mxu0 %v2273
    %2275 = vmatprep.subr.mxu0 0.0
    %v2276 = vand.u32 %v1921, 4294901760
    %v2277 = vsub.f32 %v1921, %v2276
    %2278 = vmatpush1.msra.mxu0 %v2277
    %2279 = vmatprep.subr.mxu0 0.0
    %v2280 = vand.u32 %v1922, 4294901760
    %v2281 = vsub.f32 %v1922, %v2280
    %2282 = vmatpush1.msra.mxu0 %v2281
    %2283 = vmatprep.subr.mxu0 0.0
    %v2284 = vand.u32 %v1923, 4294901760
    %v2285 = vsub.f32 %v1923, %v2284
    %2286 = vmatpush1.msra.mxu0 %v2285
    %2287 = vmatprep.subr.mxu0 0.0
    %v2288 = vand.u32 %v1924, 4294901760
    %v2289 = vsub.f32 %v1924, %v2288
    %2290 = vmatpush1.msra.mxu0 %v2289
    %2291 = vmatprep.subr.mxu0 0.0
    %v2292 = vand.u32 %v1925, 4294901760
    %v2293 = vsub.f32 %v1925, %v2292
    %2294 = vmatpush1.msra.mxu0 %v2293
    %2295 = vmatprep.subr.mxu0 0.0
    %2296 = vmatpush1.msra.mxu0 0.0
    %2297 = vmatprep.subr.mxu0 0.0
    %2298 = vmatpush1.msra.mxu0 0.0
    %2299 = vmatprep.subr.mxu0 0.0
    %2300 = vmatpush1.msra.mxu0 0.0
    %2301 = vmatprep.subr.mxu0 0.0
    %2302 = vmatpush1.msra.mxu0 0.0
    %2303 = vmatprep.subr.mxu0 0.0
    %2304 = vmatpush1.msra.mxu0 0.0
    %2305 = vmatprep.subr.mxu0 0.0
    %2306 = vmatpush1.msra.mxu0 0.0
    %2307 = vmatprep.subr.mxu0 0.0
    %2308 = vmatpush1.msra.mxu0 0.0
    %2309 = vmatprep.subr.mxu0 0.0
    %2310 = vmatpush1.msra.mxu0 0.0
    %2311 = vmatprep.subr.mxu0 0.0
    %2312 = vmatpush1.msra.mxu0 0.0
    %2313 = vmatprep.subr.mxu0 0.0
    %2314 = vmatpush1.msra.mxu0 0.0
    %2315 = vmatprep.subr.mxu0 0.0
    %2316 = vmatpush1.msra.mxu0 0.0
    %2317 = vmatprep.subr.mxu0 0.0
    %2318 = vmatpush1.msra.mxu0 0.0
    %2319 = vmatprep.subr.mxu0 0.0
    %2320 = vmatpush1.msra.mxu0 0.0
    %2321 = vmatprep.subr.mxu0 0.0
    %2322 = vmatpush1.msra.mxu0 0.0
    %2323 = vmatprep.subr.mxu0 0.0
    %2324 = vmatpush1.msra.mxu0 0.0
    %2325 = vmatprep.subr.mxu0 0.0
    %2326 = vmatpush1.msra.mxu0 0.0
    %2327 = vmatprep.subr.mxu0 0.0
    %2328 = vmatpush1.msra.mxu0 0.0
    %2329 = vmatprep.subr.mxu0 0.0
    %2330 = vmatpush1.msra.mxu0 0.0
    %2331 = vmatprep.subr.mxu0 0.0
    %2332 = vmatpush1.msra.mxu0 0.0
    %2333 = vmatprep.subr.mxu0 0.0
    %2334 = vmatpush1.msra.mxu0 0.0
    %2335 = vmatprep.subr.mxu0 0.0
    %2336 = vmatpush1.msra.mxu0 0.0
    %2337 = vmatprep.subr.mxu0 0.0
    %2338 = vmatpush1.msra.mxu0 0.0
    %2339 = vmatprep.subr.mxu0 0.0
    %2340 = vmatpush1.msra.mxu0 0.0
    %2341 = vmatprep.subr.mxu0 0.0
    %2342 = vmatpush1.msra.mxu0 0.0
    %2343 = vmatprep.mubr.f32.mxu0 0.0
    %v2344 = vand.u32 %v1934, 4294901760
    %v2345 = vsub.f32 %v1934, %v2344
    %2346 = vmatmul.mubr.f32.gmra.mrb[0].mxu0 %v2345
    %v2347 = vpop.f32.mrb[0].mxu0
    %v2348 = vadd.f32 %v2218, %v2347
    %v2349 = vpop.f32.mrb[0].mxu0
    %2350 = vmatprep.mubr.f32.mxu0 0.0
    %v2351 = vand.u32 %v1937, 4294901760
    %v2352 = vsub.f32 %v1937, %v2351
    %2353 = vmatmul.mubr.f32.gmra.mrb[0].mxu0 %v2352
    %v2354 = vpop.f32.mrb[0].mxu0
    %v2355 = vadd.f32 %v2224, %v2354
    %v2356 = vpop.f32.mrb[0].mxu0
    %2357 = vmatprep.mubr.f32.mxu0 0.0
    %v2358 = vand.u32 %v1940, 4294901760
    %v2359 = vsub.f32 %v1940, %v2358
    %2360 = vmatmul.mubr.f32.gmra.mrb[0].mxu0 %v2359
    %v2361 = vpop.f32.mrb[0].mxu0
    %v2362 = vadd.f32 %v2230, %v2361
    %v2363 = vpop.f32.mrb[0].mxu0
    %2364 = vmatprep.mubr.f32.mxu0 0.0
    %v2365 = vand.u32 %v1943, 4294901760
    %v2366 = vsub.f32 %v1943, %v2365
    %2367 = vmatmul.mubr.f32.gmra.mrb[0].mxu0 %v2366
    %v2368 = vpop.f32.mrb[0].mxu0
    %v2369 = vadd.f32 %v2236, %v2368
    %v2370 = vpop.f32.mrb[0].mxu0
    %2371 = vmatprep.mubr.f32.mxu0 0.0
    %v2372 = vand.u32 %v1946, 4294901760
    %v2373 = vsub.f32 %v1946, %v2372
    %2374 = vmatmul.mubr.f32.gmra.mrb[0].mxu0 %v2373
    %v2375 = vpop.f32.mrb[0].mxu0
    %v2376 = vadd.f32 %v2242, %v2375
    %v2377 = vpop.f32.mrb[0].mxu0
    %2378 = vmatprep.mubr.f32.mxu0 0.0
    %v2379 = vand.u32 %v1949, 4294901760
    %v2380 = vsub.f32 %v1949, %v2379
    %2381 = vmatmul.mubr.f32.gmra.mrb[0].mxu0 %v2380
    %v2382 = vpop.f32.mrb[0].mxu0
    %v2383 = vadd.f32 %v2248, %v2382
    %v2384 = vpop.f32.mrb[0].mxu0
    %2385 = vmatprep.mubr.f32.mxu0 0.0
    %v2386 = vand.u32 %v1952, 4294901760
    %v2387 = vsub.f32 %v1952, %v2386
    %2388 = vmatmul.mubr.f32.gmra.mrb[0].mxu0 %v2387
    %v2389 = vpop.f32.mrb[0].mxu0
    %v2390 = vadd.f32 %v2254, %v2389
    %v2391 = vpop.f32.mrb[0].mxu0
    %2392 = vmatprep.mubr.f32.mxu0 0.0
    %v2393 = vand.u32 %v1955, 4294901760
    %v2394 = vsub.f32 %v1955, %v2393
    %2395 = vmatmul.mubr.f32.gmra.mrb[0].mxu0 %v2394
    %v2396 = vpop.f32.mrb[0].mxu0
    %v2397 = vadd.f32 %v2260, %v2396
    %v2398 = vpop.f32.mrb[0].mxu0
    %2399 = vdwg.mxu0
    %2400 = vmatprep.subr.mxu0 0.0
    %v2401 = vand.u32 %v1918, 4294901760
    %2402 = vmatpush1.msra.mxu0 %v2401
    %2403 = vmatprep.subr.mxu0 0.0
    %v2404 = vand.u32 %v1919, 4294901760
    %2405 = vmatpush1.msra.mxu0 %v2404
    %2406 = vmatprep.subr.mxu0 0.0
    %v2407 = vand.u32 %v1920, 4294901760
    %2408 = vmatpush1.msra.mxu0 %v2407
    %2409 = vmatprep.subr.mxu0 0.0
    %v2410 = vand.u32 %v1921, 4294901760
    %2411 = vmatpush1.msra.mxu0 %v2410
    %2412 = vmatprep.subr.mxu0 0.0
    %v2413 = vand.u32 %v1922, 4294901760
    %2414 = vmatpush1.msra.mxu0 %v2413
    %2415 = vmatprep.subr.mxu0 0.0
    %v2416 = vand.u32 %v1923, 4294901760
    %2417 = vmatpush1.msra.mxu0 %v2416
    %2418 = vmatprep.subr.mxu0 0.0
    %v2419 = vand.u32 %v1924, 4294901760
    %2420 = vmatpush1.msra.mxu0 %v2419
    %2421 = vmatprep.subr.mxu0 0.0
    %v2422 = vand.u32 %v1925, 4294901760
    %2423 = vmatpush1.msra.mxu0 %v2422
    %2424 = vmatprep.subr.mxu0 0.0
    %2425 = vmatpush1.msra.mxu0 0.0
    %2426 = vmatprep.subr.mxu0 0.0
    %2427 = vmatpush1.msra.mxu0 0.0
    %2428 = vmatprep.subr.mxu0 0.0
    %2429 = vmatpush1.msra.mxu0 0.0
    %2430 = vmatprep.subr.mxu0 0.0
    %2431 = vmatpush1.msra.mxu0 0.0
    %2432 = vmatprep.subr.mxu0 0.0
    %2433 = vmatpush1.msra.mxu0 0.0
    %2434 = vmatprep.subr.mxu0 0.0
    %2435 = vmatpush1.msra.mxu0 0.0
    %2436 = vmatprep.subr.mxu0 0.0
    %2437 = vmatpush1.msra.mxu0 0.0
    %2438 = vmatprep.subr.mxu0 0.0
    %2439 = vmatpush1.msra.mxu0 0.0
    %2440 = vmatprep.subr.mxu0 0.0
    %2441 = vmatpush1.msra.mxu0 0.0
    %2442 = vmatprep.subr.mxu0 0.0
    %2443 = vmatpush1.msra.mxu0 0.0
    %2444 = vmatprep.subr.mxu0 0.0
    %2445 = vmatpush1.msra.mxu0 0.0
    %2446 = vmatprep.subr.mxu0 0.0
    %2447 = vmatpush1.msra.mxu0 0.0
    %2448 = vmatprep.subr.mxu0 0.0
    %2449 = vmatpush1.msra.mxu0 0.0
    %2450 = vmatprep.subr.mxu0 0.0
    %2451 = vmatpush1.msra.mxu0 0.0
    %2452 = vmatprep.subr.mxu0 0.0
    %2453 = vmatpush1.msra.mxu0 0.0
    %2454 = vmatprep.subr.mxu0 0.0
    %2455 = vmatpush1.msra.mxu0 0.0
    %2456 = vmatprep.subr.mxu0 0.0
    %2457 = vmatpush1.msra.mxu0 0.0
    %2458 = vmatprep.subr.mxu0 0.0
    %2459 = vmatpush1.msra.mxu0 0.0
    %2460 = vmatprep.subr.mxu0 0.0
    %2461 = vmatpush1.msra.mxu0 0.0
    %2462 = vmatprep.subr.mxu0 0.0
    %2463 = vmatpush1.msra.mxu0 0.0
    %2464 = vmatprep.subr.mxu0 0.0
    %2465 = vmatpush1.msra.mxu0 0.0
    %2466 = vmatprep.subr.mxu0 0.0
    %2467 = vmatpush1.msra.mxu0 0.0
    %2468 = vmatprep.subr.mxu0 0.0
    %2469 = vmatpush1.msra.mxu0 0.0
    %2470 = vmatprep.subr.mxu0 0.0
    %2471 = vmatpush1.msra.mxu0 0.0
    %2472 = vmatprep.mubr.f32.mxu0 0.0
    %v2473 = vand.u32 %v1934, 4294901760
    %v2474 = vsub.f32 %v1934, %v2473
    %v2475 = vand.u32 %v2474, 4294901760
    %2476 = vmatmul.mubr.f32.gmra.mrb[0].mxu0 %v2475
    %v2477 = vpop.f32.mrb[0].mxu0
    %v2478 = vadd.f32 %v2348, %v2477
    %v2479 = vpop.f32.mrb[0].mxu0
    %2480 = vmatprep.mubr.f32.mxu0 0.0
    %v2481 = vand.u32 %v1937, 4294901760
    %v2482 = vsub.f32 %v1937, %v2481
    %v2483 = vand.u32 %v2482, 4294901760
    %2484 = vmatmul.mubr.f32.gmra.mrb[0].mxu0 %v2483
    %v2485 = vpop.f32.mrb[0].mxu0
    %v2486 = vadd.f32 %v2355, %v2485
    %v2487 = vpop.f32.mrb[0].mxu0
    %2488 = vmatprep.mubr.f32.mxu0 0.0
    %v2489 = vand.u32 %v1940, 4294901760
    %v2490 = vsub.f32 %v1940, %v2489
    %v2491 = vand.u32 %v2490, 4294901760
    %2492 = vmatmul.mubr.f32.gmra.mrb[0].mxu0 %v2491
    %v2493 = vpop.f32.mrb[0].mxu0
    %v2494 = vadd.f32 %v2362, %v2493
    %v2495 = vpop.f32.mrb[0].mxu0
    %2496 = vmatprep.mubr.f32.mxu0 0.0
    %v2497 = vand.u32 %v1943, 4294901760
    %v2498 = vsub.f32 %v1943, %v2497
    %v2499 = vand.u32 %v2498, 4294901760
    %2500 = vmatmul.mubr.f32.gmra.mrb[0].mxu0 %v2499
    %v2501 = vpop.f32.mrb[0].mxu0
    %v2502 = vadd.f32 %v2369, %v2501
    %v2503 = vpop.f32.mrb[0].mxu0
    %2504 = vmatprep.mubr.f32.mxu0 0.0
    %v2505 = vand.u32 %v1946, 4294901760
    %v2506 = vsub.f32 %v1946, %v2505
    %v2507 = vand.u32 %v2506, 4294901760
    %2508 = vmatmul.mubr.f32.gmra.mrb[0].mxu0 %v2507
    %v2509 = vpop.f32.mrb[0].mxu0
    %v2510 = vadd.f32 %v2376, %v2509
    %v2511 = vpop.f32.mrb[0].mxu0
    %2512 = vmatprep.mubr.f32.mxu0 0.0
    %v2513 = vand.u32 %v1949, 4294901760
    %v2514 = vsub.f32 %v1949, %v2513
    %v2515 = vand.u32 %v2514, 4294901760
    %2516 = vmatmul.mubr.f32.gmra.mrb[0].mxu0 %v2515
    %v2517 = vpop.f32.mrb[0].mxu0
    %v2518 = vadd.f32 %v2383, %v2517
    %v2519 = vpop.f32.mrb[0].mxu0
    %2520 = vmatprep.mubr.f32.mxu0 0.0
    %v2521 = vand.u32 %v1952, 4294901760
    %v2522 = vsub.f32 %v1952, %v2521
    %v2523 = vand.u32 %v2522, 4294901760
    %2524 = vmatmul.mubr.f32.gmra.mrb[0].mxu0 %v2523
    %v2525 = vpop.f32.mrb[0].mxu0
    %v2526 = vadd.f32 %v2390, %v2525
    %v2527 = vpop.f32.mrb[0].mxu0
    %2528 = vmatprep.mubr.f32.mxu0 0.0
    %v2529 = vand.u32 %v1955, 4294901760
    %v2530 = vsub.f32 %v1955, %v2529
    %v2531 = vand.u32 %v2530, 4294901760
    %2532 = vmatmul.mubr.f32.gmra.mrb[0].mxu0 %v2531
    %v2533 = vpop.f32.mrb[0].mxu0
    %v2534 = vadd.f32 %v2397, %v2533
    %v2535 = vpop.f32.mrb[0].mxu0
    %2536 = vdwg.mxu0
    %2537 = vmatprep.subr.mxu0 0.0
    %v2538 = vand.u32 %v1918, 4294901760
    %v2539 = vsub.f32 %v1918, %v2538
    %v2540 = vand.u32 %v2539, 4294901760
    %2541 = vmatpush1.msra.mxu0 %v2540
    %2542 = vmatprep.subr.mxu0 0.0
    %v2543 = vand.u32 %v1919, 4294901760
    %v2544 = vsub.f32 %v1919, %v2543
    %v2545 = vand.u32 %v2544, 4294901760
    %2546 = vmatpush1.msra.mxu0 %v2545
    %2547 = vmatprep.subr.mxu0 0.0
    %v2548 = vand.u32 %v1920, 4294901760
    %v2549 = vsub.f32 %v1920, %v2548
    %v2550 = vand.u32 %v2549, 4294901760
    %2551 = vmatpush1.msra.mxu0 %v2550
    %2552 = vmatprep.subr.mxu0 0.0
    %v2553 = vand.u32 %v1921, 4294901760
    %v2554 = vsub.f32 %v1921, %v2553
    %v2555 = vand.u32 %v2554, 4294901760
    %2556 = vmatpush1.msra.mxu0 %v2555
    %2557 = vmatprep.subr.mxu0 0.0
    %v2558 = vand.u32 %v1922, 4294901760
    %v2559 = vsub.f32 %v1922, %v2558
    %v2560 = vand.u32 %v2559, 4294901760
    %2561 = vmatpush1.msra.mxu0 %v2560
    %2562 = vmatprep.subr.mxu0 0.0
    %v2563 = vand.u32 %v1923, 4294901760
    %v2564 = vsub.f32 %v1923, %v2563
    %v2565 = vand.u32 %v2564, 4294901760
    %2566 = vmatpush1.msra.mxu0 %v2565
    %2567 = vmatprep.subr.mxu0 0.0
    %v2568 = vand.u32 %v1924, 4294901760
    %v2569 = vsub.f32 %v1924, %v2568
    %v2570 = vand.u32 %v2569, 4294901760
    %2571 = vmatpush1.msra.mxu0 %v2570
    %2572 = vmatprep.subr.mxu0 0.0
    %v2573 = vand.u32 %v1925, 4294901760
    %v2574 = vsub.f32 %v1925, %v2573
    %v2575 = vand.u32 %v2574, 4294901760
    %2576 = vmatpush1.msra.mxu0 %v2575
    %2577 = vmatprep.subr.mxu0 0.0
    %2578 = vmatpush1.msra.mxu0 0.0
    %2579 = vmatprep.subr.mxu0 0.0
    %2580 = vmatpush1.msra.mxu0 0.0
    %2581 = vmatprep.subr.mxu0 0.0
    %2582 = vmatpush1.msra.mxu0 0.0
    %2583 = vmatprep.subr.mxu0 0.0
    %2584 = vmatpush1.msra.mxu0 0.0
    %2585 = vmatprep.subr.mxu0 0.0
    %2586 = vmatpush1.msra.mxu0 0.0
    %2587 = vmatprep.subr.mxu0 0.0
    %2588 = vmatpush1.msra.mxu0 0.0
    %2589 = vmatprep.subr.mxu0 0.0
    %2590 = vmatpush1.msra.mxu0 0.0
    %2591 = vmatprep.subr.mxu0 0.0
    %2592 = vmatpush1.msra.mxu0 0.0
    %2593 = vmatprep.subr.mxu0 0.0
    %2594 = vmatpush1.msra.mxu0 0.0
    %2595 = vmatprep.subr.mxu0 0.0
    %2596 = vmatpush1.msra.mxu0 0.0
    %2597 = vmatprep.subr.mxu0 0.0
    %2598 = vmatpush1.msra.mxu0 0.0
    %2599 = vmatprep.subr.mxu0 0.0
    %2600 = vmatpush1.msra.mxu0 0.0
    %2601 = vmatprep.subr.mxu0 0.0
    %2602 = vmatpush1.msra.mxu0 0.0
    %2603 = vmatprep.subr.mxu0 0.0
    %2604 = vmatpush1.msra.mxu0 0.0
    %2605 = vmatprep.subr.mxu0 0.0
    %2606 = vmatpush1.msra.mxu0 0.0
    %2607 = vmatprep.subr.mxu0 0.0
    %2608 = vmatpush1.msra.mxu0 0.0
    %2609 = vmatprep.subr.mxu0 0.0
    %2610 = vmatpush1.msra.mxu0 0.0
    %2611 = vmatprep.subr.mxu0 0.0
    %2612 = vmatpush1.msra.mxu0 0.0
    %2613 = vmatprep.subr.mxu0 0.0
    %2614 = vmatpush1.msra.mxu0 0.0
    %2615 = vmatprep.subr.mxu0 0.0
    %2616 = vmatpush1.msra.mxu0 0.0
    %2617 = vmatprep.subr.mxu0 0.0
    %2618 = vmatpush1.msra.mxu0 0.0
    %2619 = vmatprep.subr.mxu0 0.0
    %2620 = vmatpush1.msra.mxu0 0.0
    %2621 = vmatprep.subr.mxu0 0.0
    %2622 = vmatpush1.msra.mxu0 0.0
    %2623 = vmatprep.subr.mxu0 0.0
    %2624 = vmatpush1.msra.mxu0 0.0
    %2625 = vmatprep.mubr.f32.mxu0 0.0
    %v2626 = vand.u32 %v1934, 4294901760
    %2627 = vmatmul.mubr.f32.gmra.mrb[0].mxu0 %v2626
    %v2628 = vpop.f32.mrb[0].mxu0
    %v2629 = vadd.f32 %v2478, %v2628
    %v2630 = vpop.f32.mrb[0].mxu0
    %2631 = vmatprep.mubr.f32.mxu0 0.0
    %v2632 = vand.u32 %v1937, 4294901760
    %2633 = vmatmul.mubr.f32.gmra.mrb[0].mxu0 %v2632
    %v2634 = vpop.f32.mrb[0].mxu0
    %v2635 = vadd.f32 %v2486, %v2634
    %v2636 = vpop.f32.mrb[0].mxu0
    %2637 = vmatprep.mubr.f32.mxu0 0.0
    %v2638 = vand.u32 %v1940, 4294901760
    %2639 = vmatmul.mubr.f32.gmra.mrb[0].mxu0 %v2638
    %v2640 = vpop.f32.mrb[0].mxu0
    %v2641 = vadd.f32 %v2494, %v2640
    %v2642 = vpop.f32.mrb[0].mxu0
    %2643 = vmatprep.mubr.f32.mxu0 0.0
    %v2644 = vand.u32 %v1943, 4294901760
    %2645 = vmatmul.mubr.f32.gmra.mrb[0].mxu0 %v2644
    %v2646 = vpop.f32.mrb[0].mxu0
    %v2647 = vadd.f32 %v2502, %v2646
    %v2648 = vpop.f32.mrb[0].mxu0
    %2649 = vmatprep.mubr.f32.mxu0 0.0
    %v2650 = vand.u32 %v1946, 4294901760
    %2651 = vmatmul.mubr.f32.gmra.mrb[0].mxu0 %v2650
    %v2652 = vpop.f32.mrb[0].mxu0
    %v2653 = vadd.f32 %v2510, %v2652
    %v2654 = vpop.f32.mrb[0].mxu0
    %2655 = vmatprep.mubr.f32.mxu0 0.0
    %v2656 = vand.u32 %v1949, 4294901760
    %2657 = vmatmul.mubr.f32.gmra.mrb[0].mxu0 %v2656
    %v2658 = vpop.f32.mrb[0].mxu0
    %v2659 = vadd.f32 %v2518, %v2658
    %v2660 = vpop.f32.mrb[0].mxu0
    %2661 = vmatprep.mubr.f32.mxu0 0.0
    %v2662 = vand.u32 %v1952, 4294901760
    %2663 = vmatmul.mubr.f32.gmra.mrb[0].mxu0 %v2662
    %v2664 = vpop.f32.mrb[0].mxu0
    %v2665 = vadd.f32 %v2526, %v2664
    %v2666 = vpop.f32.mrb[0].mxu0
    %2667 = vmatprep.mubr.f32.mxu0 0.0
    %v2668 = vand.u32 %v1955, 4294901760
    %2669 = vmatmul.mubr.f32.gmra.mrb[0].mxu0 %v2668
    %v2670 = vpop.f32.mrb[0].mxu0
    %v2671 = vadd.f32 %v2534, %v2670
    %v2672 = vpop.f32.mrb[0].mxu0
    %2673 = vdwg.mxu0
    %2674 = vmatprep.subr.mxu0 0.0
    %v2675 = vand.u32 %v1918, 4294901760
    %2676 = vmatpush1.msra.mxu0 %v2675
    %2677 = vmatprep.subr.mxu0 0.0
    %v2678 = vand.u32 %v1919, 4294901760
    %2679 = vmatpush1.msra.mxu0 %v2678
    %2680 = vmatprep.subr.mxu0 0.0
    %v2681 = vand.u32 %v1920, 4294901760
    %2682 = vmatpush1.msra.mxu0 %v2681
    %2683 = vmatprep.subr.mxu0 0.0
    %v2684 = vand.u32 %v1921, 4294901760
    %2685 = vmatpush1.msra.mxu0 %v2684
    %2686 = vmatprep.subr.mxu0 0.0
    %v2687 = vand.u32 %v1922, 4294901760
    %2688 = vmatpush1.msra.mxu0 %v2687
    %2689 = vmatprep.subr.mxu0 0.0
    %v2690 = vand.u32 %v1923, 4294901760
    %2691 = vmatpush1.msra.mxu0 %v2690
    %2692 = vmatprep.subr.mxu0 0.0
    %v2693 = vand.u32 %v1924, 4294901760
    %2694 = vmatpush1.msra.mxu0 %v2693
    %2695 = vmatprep.subr.mxu0 0.0
    %v2696 = vand.u32 %v1925, 4294901760
    %2697 = vmatpush1.msra.mxu0 %v2696
    %2698 = vmatprep.subr.mxu0 0.0
    %2699 = vmatpush1.msra.mxu0 0.0
    %2700 = vmatprep.subr.mxu0 0.0
    %2701 = vmatpush1.msra.mxu0 0.0
    %2702 = vmatprep.subr.mxu0 0.0
    %2703 = vmatpush1.msra.mxu0 0.0
    %2704 = vmatprep.subr.mxu0 0.0
    %2705 = vmatpush1.msra.mxu0 0.0
    %2706 = vmatprep.subr.mxu0 0.0
    %2707 = vmatpush1.msra.mxu0 0.0
    %2708 = vmatprep.subr.mxu0 0.0
    %2709 = vmatpush1.msra.mxu0 0.0
    %2710 = vmatprep.subr.mxu0 0.0
    %2711 = vmatpush1.msra.mxu0 0.0
    %2712 = vmatprep.subr.mxu0 0.0
    %2713 = vmatpush1.msra.mxu0 0.0
    %2714 = vmatprep.subr.mxu0 0.0
    %2715 = vmatpush1.msra.mxu0 0.0
    %2716 = vmatprep.subr.mxu0 0.0
    %2717 = vmatpush1.msra.mxu0 0.0
    %2718 = vmatprep.subr.mxu0 0.0
    %2719 = vmatpush1.msra.mxu0 0.0
    %2720 = vmatprep.subr.mxu0 0.0
    %2721 = vmatpush1.msra.mxu0 0.0
    %2722 = vmatprep.subr.mxu0 0.0
    %2723 = vmatpush1.msra.mxu0 0.0
    %2724 = vmatprep.subr.mxu0 0.0
    %2725 = vmatpush1.msra.mxu0 0.0
    %2726 = vmatprep.subr.mxu0 0.0
    %2727 = vmatpush1.msra.mxu0 0.0
    %2728 = vmatprep.subr.mxu0 0.0
    %2729 = vmatpush1.msra.mxu0 0.0
    %2730 = vmatprep.subr.mxu0 0.0
    %2731 = vmatpush1.msra.mxu0 0.0
    %2732 = vmatprep.subr.mxu0 0.0
    %2733 = vmatpush1.msra.mxu0 0.0
    %2734 = vmatprep.subr.mxu0 0.0
    %2735 = vmatpush1.msra.mxu0 0.0
    %2736 = vmatprep.subr.mxu0 0.0
    %2737 = vmatpush1.msra.mxu0 0.0
    %2738 = vmatprep.subr.mxu0 0.0
    %2739 = vmatpush1.msra.mxu0 0.0
    %2740 = vmatprep.subr.mxu0 0.0
    %2741 = vmatpush1.msra.mxu0 0.0
    %2742 = vmatprep.subr.mxu0 0.0
    %2743 = vmatpush1.msra.mxu0 0.0
    %2744 = vmatprep.subr.mxu0 0.0
    %2745 = vmatpush1.msra.mxu0 0.0
    %2746 = vmatprep.mubr.f32.mxu0 0.0
    %v2747 = vand.u32 %v1934, 4294901760
    %2748 = vmatmul.mubr.f32.gmra.mrb[0].mxu0 %v2747
    %v2749 = vpop.f32.mrb[0].mxu0
    %v2750 = vadd.f32 %v2629, %v2749
    %v2751 = vpop.f32.mrb[0].mxu0
    %2752 = vmatprep.mubr.f32.mxu0 0.0
    %v2753 = vand.u32 %v1937, 4294901760
    %2754 = vmatmul.mubr.f32.gmra.mrb[0].mxu0 %v2753
    %v2755 = vpop.f32.mrb[0].mxu0
    %v2756 = vadd.f32 %v2635, %v2755
    %v2757 = vpop.f32.mrb[0].mxu0
    %2758 = vmatprep.mubr.f32.mxu0 0.0
    %v2759 = vand.u32 %v1940, 4294901760
    %2760 = vmatmul.mubr.f32.gmra.mrb[0].mxu0 %v2759
    %v2761 = vpop.f32.mrb[0].mxu0
    %v2762 = vadd.f32 %v2641, %v2761
    %v2763 = vpop.f32.mrb[0].mxu0
    %2764 = vmatprep.mubr.f32.mxu0 0.0
    %v2765 = vand.u32 %v1943, 4294901760
    %2766 = vmatmul.mubr.f32.gmra.mrb[0].mxu0 %v2765
    %v2767 = vpop.f32.mrb[0].mxu0
    %v2768 = vadd.f32 %v2647, %v2767
    %v2769 = vpop.f32.mrb[0].mxu0
    %2770 = vmatprep.mubr.f32.mxu0 0.0
    %v2771 = vand.u32 %v1946, 4294901760
    %2772 = vmatmul.mubr.f32.gmra.mrb[0].mxu0 %v2771
    %v2773 = vpop.f32.mrb[0].mxu0
    %v2774 = vadd.f32 %v2653, %v2773
    %v2775 = vpop.f32.mrb[0].mxu0
    %2776 = vmatprep.mubr.f32.mxu0 0.0
    %v2777 = vand.u32 %v1949, 4294901760
    %2778 = vmatmul.mubr.f32.gmra.mrb[0].mxu0 %v2777
    %v2779 = vpop.f32.mrb[0].mxu0
    %v2780 = vadd.f32 %v2659, %v2779
    %v2781 = vpop.f32.mrb[0].mxu0
    %2782 = vmatprep.mubr.f32.mxu0 0.0
    %v2783 = vand.u32 %v1952, 4294901760
    %2784 = vmatmul.mubr.f32.gmra.mrb[0].mxu0 %v2783
    %v2785 = vpop.f32.mrb[0].mxu0
    %v2786 = vadd.f32 %v2665, %v2785
    %v2787 = vpop.f32.mrb[0].mxu0
    %2788 = vmatprep.mubr.f32.mxu0 0.0
    %v2789 = vand.u32 %v1955, 4294901760
    %2790 = vmatmul.mubr.f32.gmra.mrb[0].mxu0 %v2789
    %v2791 = vpop.f32.mrb[0].mxu0
    %v2792 = vadd.f32 %v2671, %v2791
    %v2793 = vpop.f32.mrb[0].mxu0
    %2794 = vdwg.mxu0
    %2795 = vst.msk [vmem:[%s6] sm:$0xff] %vm1227, %v2750
    %2796 = vst.msk [vmem:[%s6 + $0x8] sm:$0xff] %vm1227, %v2756
    %2797 = vst.msk [vmem:[%s6 + $0x10] sm:$0xff] %vm1227, %v2762
    %2798 = vst.msk [vmem:[%s6 + $0x18] sm:$0xff] %vm1227, %v2768
    %2799 = vst.msk [vmem:[%s6 + $0x20] sm:$0xff] %vm1227, %v2774
    %2800 = vst.msk [vmem:[%s6 + $0x28] sm:$0xff] %vm1227, %v2780
    %2801 = vst.msk [vmem:[%s6 + $0x30] sm:$0xff] %vm1227, %v2786
    %2802 = vst.msk [vmem:[%s6 + $0x38] sm:$0xff] %vm1227, %v2792
    // Predicated region
    $region34: #{tpu_custom_call.1} parent=1 // pred_check
      _
    $region35: #{tpu_custom_call.1} parent=1 // pred_check_branch
      %2804 = sbr.rel (0) target = $region37
    $region36: #{tpu_custom_call.1} parent=1 // pred_region
      _
    $region37: #{tpu_custom_call.1} parent=1 // pred_fallthru
      _
    // Predicated region
    $region38: #{tpu_custom_call.1} parent=1 // pred_check
      _
    $region39: #{tpu_custom_call.1} parent=1 // pred_check_branch
      %2806 = sbr.rel (0) target = $region41
    $region40: #{tpu_custom_call.1} parent=1 // pred_region
      _
    $region41: #{tpu_custom_call.1} parent=1 // pred_fallthru
      _
    %2807 = vsyncpa [#allocation4], 1
    %2808 = vsyncpa [#allocation6], 1

</llo_original>
